<compile_context>
chip_gen: v7x
topology: tpu7x:2x2x1
jax: 0.10.0
libtpu: 0.0.40
codegen_flags: <defaults>
</compile_context>

<pallas_src>
import functools

import jax
import jax.numpy as jnp
from jax.experimental import pallas as pl
from jax.experimental.pallas import tpu as pltpu


def _gated_attn_kernel(h_ref, wfc_ref, bfc_ref, wab_ref, bab_ref, wc_ref,
                       a_raw_ref, m_ref, l_ref, macc_ref,
                       *, n_valid, tiles_per_split):
    tile_n = h_ref.shape[0]
    dim_out = wfc_ref.shape[1]
    dim_mid = wc_ref.shape[1]

    c = pl.program_id(0)          # split index ("parallel": one per TensorCore on v7x)
    t = pl.program_id(1)          # instance-tile index within the split ("arbitrary")
    tile_idx = c * tiles_per_split + t

    # Per-split online-softmax state lives directly in the (VMEM-resident) partial
    # output blocks; (re)initialize at the first tile of each split.
    @pl.when(t == 0)
    def _():
        m_ref[0] = jnp.full((1, 1), -jnp.inf, jnp.float32)
        l_ref[0] = jnp.zeros((1, 1), jnp.float32)
        macc_ref[0] = jnp.zeros((1, dim_out), jnp.float32)

    # fc: Linear + ReLU.  h streams as f32 (no wrapper pre-pass); cast to bf16
    # in-kernel, f32 accumulation on the MXU.
    h_bf = h_ref[...].astype(jnp.bfloat16)
    h1 = jnp.dot(h_bf, wfc_ref[...], preferred_element_type=jnp.float32) + bfc_ref[...]
    h1 = jnp.maximum(h1, 0.0)                                    # (tile_n, dim_out) f32

    # Zero rows past the real bag length (the ragged last tile reads unspecified
    # data); this keeps everything downstream (incl. p*h1) finite.
    row = tile_idx * tile_n + jax.lax.broadcasted_iota(jnp.int32, (tile_n, 1), 0)
    valid = row < n_valid
    h1 = jnp.where(valid, h1, 0.0)

    # Gated attention net: Wa/Wb fused into a single 2*dim_mid-wide matmul
    # (256-aligned for v6e/v7x MXU); slice on a 128-lane boundary afterwards.
    ab = jnp.dot(h1.astype(jnp.bfloat16), wab_ref[...],
                 preferred_element_type=jnp.float32) + bab_ref[...]
    a = jnp.tanh(ab[:, :dim_mid])
    b = jax.nn.sigmoid(ab[:, dim_mid:])
    gated = a * b                                                # (tile_n, dim_mid) f32

    # Attention scores: VPU mul + lane reduce (keeps the degenerate 1-wide matmul
    # off the saturated MXU).  attention_c's bias bc is folded back in the wrapper
    # (softmax is shift-invariant, so M is unaffected).
    s = jnp.sum(gated * wc_ref[...], axis=-1, keepdims=True)     # (tile_n, 1) f32
    a_raw_ref[...] = s

    s_m = jnp.where(valid, s, -jnp.inf)

    # Flash-attention-style online softmax update.
    m_prev = m_ref[0]                                            # (1, 1)
    m_new = jnp.maximum(m_prev, jnp.max(s_m, axis=0, keepdims=True))
    alpha = jnp.exp(m_prev - m_new)
    p = jnp.exp(s_m - m_new)                                     # masked rows -> 0
    l_ref[0] = alpha * l_ref[0] + jnp.sum(p, axis=0, keepdims=True)
    macc_ref[0] = alpha * macc_ref[0] + jnp.sum(p * h1, axis=0, keepdims=True)
    m_ref[0] = m_new


@jax.jit
def gated_attention_summarizer(h, params):
    """h: (N, dim_in) float32.  Returns {'cls', 'attention_raw', 'M'} like the module."""
    N, dim_in = h.shape
    wfc, bfc = params["wfc"], params["bfc"]
    wa, ba = params["wa"], params["ba"]
    wb, bb = params["wb"], params["bb"]
    wc, bc = params["wc"], params["bc"]
    dim_out = wfc.shape[1]
    dim_mid = wa.shape[1]
    assert dim_in % 128 == 0 and dim_out % 128 == 0 and (2 * dim_mid) % 128 == 0

    # ---- static tiling -----------------------------------------------------
    # Adaptive tile size (cap 1024, multiple of 8) minimizes padded-row waste on
    # the MXU; a leading split axis of 2 feeds both TensorCores on v7x.
    MAX_TILE = 1024
    tiles_total = max(1, -(-N // MAX_TILE))
    n_splits = 2 if tiles_total >= 2 else 1
    tiles_total = ((tiles_total + n_splits - 1) // n_splits) * n_splits
    tile_n = ((-(-N // tiles_total) + 7) // 8) * 8
    tiles_per_split = tiles_total // n_splits
    n_rows_pad = tiles_total * tile_n

    # ---- weight prep (O(weights), independent of N; hoistable upstream) -----
    wfc_bf = wfc.astype(jnp.bfloat16)
    wab_bf = jnp.concatenate([wa, wb], axis=1).astype(jnp.bfloat16)    # (dim_out, 2*dim_mid)
    bab = jnp.concatenate([ba, bb], axis=1).astype(jnp.float32)        # (1, 2*dim_mid)
    bfc2 = bfc.reshape(1, dim_out).astype(jnp.float32)
    wc_row = wc.reshape(1, dim_mid).astype(jnp.float32)

    kernel = functools.partial(_gated_attn_kernel, n_valid=N,
                               tiles_per_split=tiles_per_split)
    const = lambda c, t: (0, 0)                       # weights stay VMEM-resident
    row_map = lambda c, t: (c * tiles_per_split + t, 0)
    part_map = lambda c, t: (c, 0, 0)

    flops = 2 * N * dim_out * (dim_in + 2 * dim_mid) + 8 * N * dim_mid + 4 * N * dim_out
    bytes_accessed = (4 * N * dim_in
                      + 2 * dim_out * (dim_in + 2 * dim_mid)
                      + 4 * (N + n_splits * (dim_out + 2)))

    a_raw_col, m_part, l_part, macc_part = pl.pallas_call(
        kernel,
        out_shape=(
            jax.ShapeDtypeStruct((n_rows_pad, 1), jnp.float32),         # raw scores (no bc)
            jax.ShapeDtypeStruct((n_splits, 1, 1), jnp.float32),        # per-split running max
            jax.ShapeDtypeStruct((n_splits, 1, 1), jnp.float32),        # per-split running sum
            jax.ShapeDtypeStruct((n_splits, 1, dim_out), jnp.float32),  # per-split weighted sum
        ),
        grid_spec=pltpu.PrefetchScalarGridSpec(
            num_scalar_prefetch=0,
            grid=(n_splits, tiles_per_split),
            in_specs=[
                pl.BlockSpec((tile_n, dim_in), row_map),            # h tiles stream (f32)
                pl.BlockSpec((dim_in, dim_out), const),             # wfc (bf16)
                pl.BlockSpec((1, dim_out), const),                  # bfc
                pl.BlockSpec((dim_out, 2 * dim_mid), const),        # fused Wa|Wb (bf16)
                pl.BlockSpec((1, 2 * dim_mid), const),              # fused ba|bb
                pl.BlockSpec((1, dim_mid), const),                  # wc row
            ],
            out_specs=(
                pl.BlockSpec((tile_n, 1), row_map),                 # per-tile scores
                pl.BlockSpec((1, 1, 1), part_map),                  # m partial
                pl.BlockSpec((1, 1, 1), part_map),                  # l partial
                pl.BlockSpec((1, 1, dim_out), part_map),            # macc partial
            ),
        ),
        compiler_params=pltpu.CompilerParams(
            dimension_semantics=("parallel", "arbitrary"),
            vmem_limit_bytes=48 * 1024 * 1024,
        ),
        cost_estimate=pl.CostEstimate(
            flops=flops,
            transcendentals=N * (2 * dim_mid + 1),
            bytes_accessed=bytes_accessed),
    )(h, wfc_bf, bfc2, wab_bf, bab, wc_row)

    # ---- log-sum-exp merge of per-split partial softmax states (exact f32) ----
    m_part = m_part.reshape(n_splits, 1)
    l_part = l_part.reshape(n_splits, 1)
    macc_part = macc_part.reshape(n_splits, dim_out)
    m_glob = jnp.max(m_part, axis=0, keepdims=True)
    w = jnp.exp(m_part - m_glob)                                    # (n_splits, 1)
    denom = jnp.sum(w * l_part, axis=0, keepdims=True)              # (1, 1)
    M = jnp.sum(w * macc_part, axis=0, keepdims=True) / denom       # (1, dim_out)

    # Fold attention_c bias back in (shift-invariant for softmax) and restore (1, N).
    attention_raw = a_raw_col[:N, :].T + bc.reshape(1, 1)
    # classifiers == nn.Identity() (n_classes=None)  ->  cls == M
    return {"cls": M, "attention_raw": attention_raw, "M": M}


def init_params(key, dim_in=768, dim_out=768, dim_mid=384):
    """Deterministic PyTorch-Linear-style uniform init; weights stored (fan_in, fan_out)."""
    ks = jax.random.split(key, 8)

    def lin(kw, kb, fan_in, fan_out):
        bound = 1.0 / jnp.sqrt(fan_in)
        w = jax.random.uniform(kw, (fan_in, fan_out), jnp.float32, -bound, bound)
        b = jax.random.uniform(kb, (1, fan_out), jnp.float32, -bound, bound)
        return w, b

    wfc, bfc = lin(ks[0], ks[1], dim_in, dim_out)
    wa, ba = lin(ks[2], ks[3], dim_out, dim_mid)
    wb, bb = lin(ks[4], ks[5], dim_out, dim_mid)
    wc, bc = lin(ks[6], ks[7], dim_mid, 1)
    return {"wfc": wfc, "bfc": bfc, "wa": wa, "ba": ba,
            "wb": wb, "bb": bb, "wc": wc, "bc": bc}


def _reference(h, p):
    """Pure-JAX reference using the same bf16 rounding of big operands as the kernel."""
    f32 = jnp.float32
    hb = h.astype(jnp.bfloat16)
    wfc = p["wfc"].astype(jnp.bfloat16)
    wa = p["wa"].astype(jnp.bfloat16)
    wb = p["wb"].astype(jnp.bfloat16)
    h1 = jnp.maximum(jnp.dot(hb, wfc, preferred_element_type=f32) + p["bfc"], 0.0)
    h1b = h1.astype(jnp.bfloat16)
    a = jnp.tanh(jnp.dot(h1b, wa, preferred_element_type=f32) + p["ba"])
    b = jax.nn.sigmoid(jnp.dot(h1b, wb, preferred_element_type=f32) + p["bb"])
    A = (a * b) @ p["wc"] + p["bc"]
    A_raw = A.T
    A_soft = jax.nn.softmax(A_raw, axis=1)
    M = A_soft @ h1
    return {"cls": M, "attention_raw": A_raw, "M": M}


if __name__ == "__main__":
    DIM_IN, DIM_OUT, DIM_MID = 768, 768, 384
    key = jax.random.PRNGKey(0)
    k_h1, k_h2, k_p = jax.random.split(key, 3)
    params = init_params(k_p, DIM_IN, DIM_OUT, DIM_MID)

    # case 1: tiny bag (single exact tile);
    # case 2: bag > MAX_TILE (2-way split, multi-tile online softmax + tail masking)
    for k_h, N in ((k_h1, 8), (k_h2, 1300)):
        h = jax.random.normal(k_h, (N, DIM_IN), dtype=jnp.float32)
        out = gated_attention_summarizer(h, params)
        jax.block_until_ready(out)

        ref = _reference(h, params)
        for name in ("cls", "attention_raw", "M"):
            assert out[name].shape == ref[name].shape, (N, name, out[name].shape)
            assert jnp.allclose(out[name], ref[name], atol=1e-2, rtol=1e-2), (N, name)

    print("KERNEL_OK")
</pallas_src>

<mosaic_0001>
module attributes {stable_mosaic.version = 11 : i64} {
  func.func @_gated_attn_kernel(%arg0: i32, %arg1: i32, %arg2: memref<8x768xf32, #tpu.memory_space<vmem>>, %arg3: memref<768x768xbf16, #tpu.memory_space<vmem>>, %arg4: memref<1x768xf32, #tpu.memory_space<vmem>>, %arg5: memref<768x768xbf16, #tpu.memory_space<vmem>>, %arg6: memref<1x768xf32, #tpu.memory_space<vmem>>, %arg7: memref<1x384xf32, #tpu.memory_space<vmem>>, %arg8: memref<8x1xf32, #tpu.memory_space<vmem>>, %arg9: memref<1x1x1xf32, #tpu.memory_space<vmem>>, %arg10: memref<1x1x1xf32, #tpu.memory_space<vmem>>, %arg11: memref<1x1x768xf32, #tpu.memory_space<vmem>>) attributes {dimension_semantics = [#tpu.dimension_semantics<parallel>, #tpu.dimension_semantics<arbitrary>], iteration_bounds = array<i64: 1, 1>, scalar_prefetch = 0 : i64, scratch_operands = 0 : i64, tpu.core_type = #tpu.core_type<tc>, window_params = [{transform_indices = @transform_0, window_bounds = array<i64: 8, 768>}, {pipeline_mode = #tpu.pipeline_mode<synchronous>, transform_indices = @transform_1, window_bounds = array<i64: 768, 768>}, {pipeline_mode = #tpu.pipeline_mode<synchronous>, transform_indices = @transform_2, window_bounds = array<i64: 1, 768>}, {pipeline_mode = #tpu.pipeline_mode<synchronous>, transform_indices = @transform_3, window_bounds = array<i64: 768, 768>}, {pipeline_mode = #tpu.pipeline_mode<synchronous>, transform_indices = @transform_4, window_bounds = array<i64: 1, 768>}, {pipeline_mode = #tpu.pipeline_mode<synchronous>, transform_indices = @transform_5, window_bounds = array<i64: 1, 384>}, {transform_indices = @transform_6, window_bounds = array<i64: 8, 1>}, {transform_indices = @transform_7, window_bounds = array<i64: 1, 1, 1>}, {transform_indices = @transform_8, window_bounds = array<i64: 1, 1, 1>}, {transform_indices = @transform_9, window_bounds = array<i64: 1, 1, 768>}]} {
    %c1_i32 = arith.constant 1 : i32
    %0 = arith.muli %arg0, %c1_i32 : i32
    %1 = arith.addi %0, %arg1 : i32
    %c0_i32 = arith.constant 0 : i32
    %2 = arith.cmpi eq, %arg1, %c0_i32 : i32
    %3 = arith.extui %2 : i1 to i32
    %c0_i32_0 = arith.constant 0 : i32
    %4 = arith.cmpi ne, %3, %c0_i32_0 : i32
    scf.if %4 {
      %cst_42 = arith.constant 0xFF800000 : f32
      %81 = vector.broadcast %cst_42 : f32 to vector<1x1xf32>
      %c0_43 = arith.constant 0 : index
      %c0_44 = arith.constant 0 : index
      %c0_45 = arith.constant 0 : index
      %82 = vector.load %arg9[%c0_43, %c0_44, %c0_45] : memref<1x1x1xf32, #tpu.memory_space<vmem>>, vector<1x1x1xf32>
      %83 = vector.shape_cast %82 : vector<1x1x1xf32> to vector<1x1xf32>
      %84 = vector.shape_cast %81 : vector<1x1xf32> to vector<1x1x1xf32>
      tpu.vector_store %arg9[%c0_43, %c0_44, %c0_45], %84 {strides = array<i32>} : memref<1x1x1xf32, #tpu.memory_space<vmem>>, vector<1x1x1xf32>,
      %cst_46 = arith.constant 0.000000e+00 : f32
      %85 = vector.broadcast %cst_46 : f32 to vector<1x1xf32>
      %c0_47 = arith.constant 0 : index
      %c0_48 = arith.constant 0 : index
      %c0_49 = arith.constant 0 : index
      %86 = vector.load %arg10[%c0_47, %c0_48, %c0_49] : memref<1x1x1xf32, #tpu.memory_space<vmem>>, vector<1x1x1xf32>
      %87 = vector.shape_cast %86 : vector<1x1x1xf32> to vector<1x1xf32>
      %88 = vector.shape_cast %85 : vector<1x1xf32> to vector<1x1x1xf32>
      tpu.vector_store %arg10[%c0_47, %c0_48, %c0_49], %88 {strides = array<i32>} : memref<1x1x1xf32, #tpu.memory_space<vmem>>, vector<1x1x1xf32>,
      %cst_50 = arith.constant 0.000000e+00 : f32
      %89 = vector.broadcast %cst_50 : f32 to vector<1x768xf32>
      %c0_51 = arith.constant 0 : index
      %c0_52 = arith.constant 0 : index
      %c0_53 = arith.constant 0 : index
      %90 = vector.load %arg11[%c0_51, %c0_52, %c0_53] : memref<1x1x768xf32, #tpu.memory_space<vmem>>, vector<1x1x768xf32>
      %91 = vector.shape_cast %90 : vector<1x1x768xf32> to vector<1x768xf32>
      %92 = vector.shape_cast %89 : vector<1x768xf32> to vector<1x1x768xf32>
      tpu.vector_store %arg11[%c0_51, %c0_52, %c0_53], %92 {strides = array<i32>} : memref<1x1x768xf32, #tpu.memory_space<vmem>>, vector<1x1x768xf32>,
    } else {
    }
    %c0 = arith.constant 0 : index
    %c0_1 = arith.constant 0 : index
    %5 = vector.load %arg2[%c0, %c0_1] : memref<8x768xf32, #tpu.memory_space<vmem>>, vector<8x768xf32>
    %6 = arith.truncf %5 : vector<8x768xf32> to vector<8x768xbf16>
    %c0_2 = arith.constant 0 : index
    %c0_3 = arith.constant 0 : index
    %7 = vector.load %arg3[%c0_2, %c0_3] : memref<768x768xbf16, #tpu.memory_space<vmem>>, vector<768x768xbf16>
    %cst = arith.constant dense<0.000000e+00> : vector<8x768xf32>
    %8 = tpu.matmul %6, %7, %cst {dimension_numbers = #tpu.dot_dimension_numbers<[1], [0], [0], [1], [0, 0, 1, 1], [], []>} : vector<8x768xbf16>, vector<768x768xbf16>, vector<8x768xf32> -> vector<8x768xf32>
    %c0_4 = arith.constant 0 : index
    %c0_5 = arith.constant 0 : index
    %9 = vector.load %arg4[%c0_4, %c0_5] : memref<1x768xf32, #tpu.memory_space<vmem>>, vector<1x768xf32>
    %10 = vector.broadcast %9 : vector<1x768xf32> to vector<8x768xf32>
    %11 = arith.addf %8, %10 : vector<8x768xf32>
    %cst_6 = arith.constant 0.000000e+00 : f32
    %12 = vector.broadcast %cst_6 : f32 to vector<8x768xf32>
    %13 = arith.maximumf %11, %12 : vector<8x768xf32>
    %c8_i32 = arith.constant 8 : i32
    %14 = arith.muli %1, %c8_i32 : i32
    %15 = tpu.iota {dimensions = array<i32: 0>} : vector<8x1xi32>
    %16 = vector.broadcast %14 : i32 to vector<8x1xi32>
    %17 = arith.addi %16, %15 : vector<8x1xi32>
    %c8_i32_7 = arith.constant 8 : i32
    %18 = vector.broadcast %c8_i32_7 : i32 to vector<8x1xi32>
    %19 = arith.cmpi slt, %17, %18 : vector<8x1xi32>
    %cst_8 = arith.constant 0.000000e+00 : f32
    %20 = vector.shape_cast %19 : vector<8x1xi1> to vector<8x1xi1>
    %21 = vector.broadcast %20 : vector<8x1xi1> to vector<8x768xi1>
    %22 = vector.broadcast %cst_8 : f32 to vector<8x768xf32>
    %23 = arith.select %21, %13, %22 : vector<8x768xi1>, vector<8x768xf32>
    %24 = arith.truncf %23 : vector<8x768xf32> to vector<8x768xbf16>
    %c0_9 = arith.constant 0 : index
    %c0_10 = arith.constant 0 : index
    %25 = vector.load %arg5[%c0_9, %c0_10] : memref<768x768xbf16, #tpu.memory_space<vmem>>, vector<768x768xbf16>
    %cst_11 = arith.constant dense<0.000000e+00> : vector<8x768xf32>
    %26 = tpu.matmul %24, %25, %cst_11 {dimension_numbers = #tpu.dot_dimension_numbers<[1], [0], [0], [1], [0, 0, 1, 1], [], []>} : vector<8x768xbf16>, vector<768x768xbf16>, vector<8x768xf32> -> vector<8x768xf32>
    %c0_12 = arith.constant 0 : index
    %c0_13 = arith.constant 0 : index
    %27 = vector.load %arg6[%c0_12, %c0_13] : memref<1x768xf32, #tpu.memory_space<vmem>>, vector<1x768xf32>
    %28 = vector.broadcast %27 : vector<1x768xf32> to vector<8x768xf32>
    %29 = arith.addf %26, %28 : vector<8x768xf32>
    %30 = vector.extract_strided_slice %29 {offsets = [0, 0], sizes = [8, 384], strides = [1, 1]} : vector<8x768xf32> to vector<8x384xf32>
    %31 = math.tanh %30 : vector<8x384xf32>
    %32 = vector.extract_strided_slice %29 {offsets = [0, 384], sizes = [8, 384], strides = [1, 1]} : vector<8x768xf32> to vector<8x384xf32>
    %33 = arith.negf %32 : vector<8x384xf32>
    %34 = math.exp %33 : vector<8x384xf32>
    %cst_14 = arith.constant 1.000000e+00 : f32
    %35 = vector.broadcast %cst_14 : f32 to vector<8x384xf32>
    %36 = arith.addf %35, %34 : vector<8x384xf32>
    %37 = arith.divf %35, %36 : vector<8x384xf32>
    %38 = arith.mulf %31, %37 : vector<8x384xf32>
    %c0_15 = arith.constant 0 : index
    %c0_16 = arith.constant 0 : index
    %39 = vector.load %arg7[%c0_15, %c0_16] : memref<1x384xf32, #tpu.memory_space<vmem>>, vector<1x384xf32>
    %40 = vector.broadcast %39 : vector<1x384xf32> to vector<8x384xf32>
    %41 = arith.mulf %38, %40 : vector<8x384xf32>
    %cst_17 = arith.constant dense<0.000000e+00> : vector<8xf32>
    %42 = vector.multi_reduction <add>, %41, %cst_17 [1] : vector<8x384xf32> to vector<8xf32>
    %43 = vector.shape_cast %42 : vector<8xf32> to vector<8x1xf32>
    %c0_18 = arith.constant 0 : index
    %c0_19 = arith.constant 0 : index
    %44 = vector.load %arg8[%c0_18, %c0_19] : memref<8x1xf32, #tpu.memory_space<vmem>>, vector<8x1xf32>
    tpu.vector_store %arg8[%c0_18, %c0_19], %43 {strides = array<i32>} : memref<8x1xf32, #tpu.memory_space<vmem>>, vector<8x1xf32>,
    %cst_20 = arith.constant 0xFF800000 : f32
    %45 = vector.broadcast %cst_20 : f32 to vector<8x1xf32>
    %46 = arith.select %19, %43, %45 : vector<8x1xi1>, vector<8x1xf32>
    %c0_21 = arith.constant 0 : index
    %c0_22 = arith.constant 0 : index
    %c0_23 = arith.constant 0 : index
    %47 = vector.load %arg9[%c0_21, %c0_22, %c0_23] : memref<1x1x1xf32, #tpu.memory_space<vmem>>, vector<1x1x1xf32>
    %48 = vector.shape_cast %47 : vector<1x1x1xf32> to vector<1x1xf32>
    %cst_24 = arith.constant dense<0xFF800000> : vector<1xf32>
    %49 = vector.multi_reduction <maximumf>, %46, %cst_24 [0] : vector<8x1xf32> to vector<1xf32>
    %50 = vector.shape_cast %49 : vector<1xf32> to vector<1x1xf32>
    %51 = arith.maximumf %48, %50 : vector<1x1xf32>
    %52 = arith.subf %48, %51 : vector<1x1xf32>
    %53 = math.exp %52 : vector<1x1xf32>
    %54 = vector.broadcast %51 : vector<1x1xf32> to vector<8x1xf32>
    %55 = arith.subf %46, %54 : vector<8x1xf32>
    %56 = math.exp %55 : vector<8x1xf32>
    %c0_25 = arith.constant 0 : index
    %c0_26 = arith.constant 0 : index
    %c0_27 = arith.constant 0 : index
    %57 = vector.load %arg10[%c0_25, %c0_26, %c0_27] : memref<1x1x1xf32, #tpu.memory_space<vmem>>, vector<1x1x1xf32>
    %58 = vector.shape_cast %57 : vector<1x1x1xf32> to vector<1x1xf32>
    %59 = arith.mulf %53, %58 : vector<1x1xf32>
    %cst_28 = arith.constant dense<0.000000e+00> : vector<1xf32>
    %60 = vector.multi_reduction <add>, %56, %cst_28 [0] : vector<8x1xf32> to vector<1xf32>
    %61 = vector.shape_cast %60 : vector<1xf32> to vector<1x1xf32>
    %62 = arith.addf %59, %61 : vector<1x1xf32>
    %c0_29 = arith.constant 0 : index
    %c0_30 = arith.constant 0 : index
    %c0_31 = arith.constant 0 : index
    %63 = vector.load %arg10[%c0_29, %c0_30, %c0_31] : memref<1x1x1xf32, #tpu.memory_space<vmem>>, vector<1x1x1xf32>
    %64 = vector.shape_cast %63 : vector<1x1x1xf32> to vector<1x1xf32>
    %65 = vector.shape_cast %62 : vector<1x1xf32> to vector<1x1x1xf32>
    tpu.vector_store %arg10[%c0_29, %c0_30, %c0_31], %65 {strides = array<i32>} : memref<1x1x1xf32, #tpu.memory_space<vmem>>, vector<1x1x1xf32>,
    %c0_32 = arith.constant 0 : index
    %c0_33 = arith.constant 0 : index
    %c0_34 = arith.constant 0 : index
    %66 = vector.load %arg11[%c0_32, %c0_33, %c0_34] : memref<1x1x768xf32, #tpu.memory_space<vmem>>, vector<1x1x768xf32>
    %67 = vector.shape_cast %66 : vector<1x1x768xf32> to vector<1x768xf32>
    %68 = vector.broadcast %53 : vector<1x1xf32> to vector<1x768xf32>
    %69 = arith.mulf %68, %67 : vector<1x768xf32>
    %70 = vector.broadcast %56 : vector<8x1xf32> to vector<8x768xf32>
    %71 = arith.mulf %70, %23 : vector<8x768xf32>
    %cst_35 = arith.constant dense<0.000000e+00> : vector<768xf32>
    %72 = vector.multi_reduction <add>, %71, %cst_35 [0] : vector<8x768xf32> to vector<768xf32>
    %73 = vector.shape_cast %72 : vector<768xf32> to vector<1x768xf32>
    %74 = arith.addf %69, %73 : vector<1x768xf32>
    %c0_36 = arith.constant 0 : index
    %c0_37 = arith.constant 0 : index
    %c0_38 = arith.constant 0 : index
    %75 = vector.load %arg11[%c0_36, %c0_37, %c0_38] : memref<1x1x768xf32, #tpu.memory_space<vmem>>, vector<1x1x768xf32>
    %76 = vector.shape_cast %75 : vector<1x1x768xf32> to vector<1x768xf32>
    %77 = vector.shape_cast %74 : vector<1x768xf32> to vector<1x1x768xf32>
    tpu.vector_store %arg11[%c0_36, %c0_37, %c0_38], %77 {strides = array<i32>} : memref<1x1x768xf32, #tpu.memory_space<vmem>>, vector<1x1x768xf32>,
    %c0_39 = arith.constant 0 : index
    %c0_40 = arith.constant 0 : index
    %c0_41 = arith.constant 0 : index
    %78 = vector.load %arg9[%c0_39, %c0_40, %c0_41] : memref<1x1x1xf32, #tpu.memory_space<vmem>>, vector<1x1x1xf32>
    %79 = vector.shape_cast %78 : vector<1x1x1xf32> to vector<1x1xf32>
    %80 = vector.shape_cast %51 : vector<1x1xf32> to vector<1x1x1xf32>
    tpu.vector_store %arg9[%c0_39, %c0_40, %c0_41], %80 {strides = array<i32>} : memref<1x1x1xf32, #tpu.memory_space<vmem>>, vector<1x1x1xf32>,
    return
  }
  func.func @transform_0(%arg0: i32, %arg1: i32) -> (i32, i32) {
    %c1_i32 = arith.constant 1 : i32
    %0 = arith.muli %arg0, %c1_i32 : i32
    %1 = arith.addi %0, %arg1 : i32
    %c0_i32 = arith.constant 0 : i32
    %c0_i32_0 = arith.constant 0 : i32
    return %1, %c0_i32 : i32, i32
  }
  func.func @transform_1(%arg0: i32, %arg1: i32) -> (i32, i32) {
    %c0_i32 = arith.constant 0 : i32
    %c0_i32_0 = arith.constant 0 : i32
    %c0_i32_1 = arith.constant 0 : i32
    return %c0_i32, %c0_i32_0 : i32, i32
  }
  func.func @transform_2(%arg0: i32, %arg1: i32) -> (i32, i32) {
    %c0_i32 = arith.constant 0 : i32
    %c0_i32_0 = arith.constant 0 : i32
    %c0_i32_1 = arith.constant 0 : i32
    return %c0_i32, %c0_i32_0 : i32, i32
  }
  func.func @transform_3(%arg0: i32, %arg1: i32) -> (i32, i32) {
    %c0_i32 = arith.constant 0 : i32
    %c0_i32_0 = arith.constant 0 : i32
    %c0_i32_1 = arith.constant 0 : i32
    return %c0_i32, %c0_i32_0 : i32, i32
  }
  func.func @transform_4(%arg0: i32, %arg1: i32) -> (i32, i32) {
    %c0_i32 = arith.constant 0 : i32
    %c0_i32_0 = arith.constant 0 : i32
    %c0_i32_1 = arith.constant 0 : i32
    return %c0_i32, %c0_i32_0 : i32, i32
  }
  func.func @transform_5(%arg0: i32, %arg1: i32) -> (i32, i32) {
    %c0_i32 = arith.constant 0 : i32
    %c0_i32_0 = arith.constant 0 : i32
    %c0_i32_1 = arith.constant 0 : i32
    return %c0_i32, %c0_i32_0 : i32, i32
  }
  func.func @transform_6(%arg0: i32, %arg1: i32) -> (i32, i32) {
    %c1_i32 = arith.constant 1 : i32
    %0 = arith.muli %arg0, %c1_i32 : i32
    %1 = arith.addi %0, %arg1 : i32
    %c0_i32 = arith.constant 0 : i32
    %c0_i32_0 = arith.constant 0 : i32
    return %1, %c0_i32 : i32, i32
  }
  func.func @transform_7(%arg0: i32, %arg1: i32) -> (i32, i32, i32) {
    %c0_i32 = arith.constant 0 : i32
    %c0_i32_0 = arith.constant 0 : i32
    %c0_i32_1 = arith.constant 0 : i32
    return %arg0, %c0_i32, %c0_i32_0 : i32, i32, i32
  }
  func.func @transform_8(%arg0: i32, %arg1: i32) -> (i32, i32, i32) {
    %c0_i32 = arith.constant 0 : i32
    %c0_i32_0 = arith.constant 0 : i32
    %c0_i32_1 = arith.constant 0 : i32
    return %arg0, %c0_i32, %c0_i32_0 : i32, i32, i32
  }
  func.func @transform_9(%arg0: i32, %arg1: i32) -> (i32, i32, i32) {
    %c0_i32 = arith.constant 0 : i32
    %c0_i32_0 = arith.constant 0 : i32
    %c0_i32_1 = arith.constant 0 : i32
    return %arg0, %c0_i32, %c0_i32_0 : i32, i32, i32
  }
}

</mosaic_0001>

<llo_original>
// kernel: gated_attention_summarizer.1
$region0: #{gated_attention_summarizer.1}
  #allocation0 [shape = 'u32[]', space=smem, size = 0x4, offset = 0x4, fixed_abs, tag = 'smem constant byte address 0x4 - core index']
  #allocation1 [shape = 'u32[144,128]{1,0:T(1,128)}', space=vmem, size = 0x12000, scoped, tag = 'internal scratch']
  %s0 = inlined_call_operand.vmem [shape: f32[8,768], index: 0, kind: input, shape index: {}]
  %s1 = inlined_call_operand.vmem [shape: bf16[768,768], index: 1, kind: input, shape index: {}]
  %s2 = inlined_call_operand.vmem [shape: f32[1,768], index: 2, kind: input, shape index: {}]
  %s3 = inlined_call_operand.vmem [shape: bf16[768,768], index: 3, kind: input, shape index: {}]
  %s4 = inlined_call_operand.vmem [shape: f32[1,768], index: 4, kind: input, shape index: {}]
  %s5 = inlined_call_operand.vmem [shape: f32[1,384], index: 5, kind: input, shape index: {}]
  %s6 = inlined_call_operand.vmem [shape: f32[8,1], index: 6, kind: output, shape index: {0}]
  %s7 = inlined_call_operand.hbm [shape: f32[1,1,1], index: 7, kind: output, shape index: {1}]
  %s8 = inlined_call_operand.hbm [shape: f32[1,1,1], index: 8, kind: output, shape index: {2}]
  %s9 = inlined_call_operand.vmem [shape: f32[1,1,768], index: 9, kind: output, shape index: {3}]
  %10 = xla_tuple %s6, %s7, %s8, %s9
  %s11 = sld [smem:[#allocation0]]
  $region62: #{gated_attention_summarizer.1} parent=0
    _
  %s13 = ssub.s32 1, %s11
  %s14 = scalar_select 0, %s13, %s11
  $region1: #{gated_attention_summarizer.1} parent=0
    #allocation2 [shape = 'u8[512]{0}', space=vmem, size = 0x400, scoped, tag = 'output window, operand 1, single buffered']
    #allocation3 [shape = 's32[1]{0}', space=sflag, size = 0x4, scoped, tag = 'scoped memory for gated_attention_summarizer.1']
    #allocation4 [shape = 'u8[512]{0}', space=vmem, size = 0x400, scoped, tag = 'output window, operand 2, single buffered']
    #allocation5 [shape = 's32[1]{0}', space=sflag, size = 0x4, scoped, tag = 'scoped memory for gated_attention_summarizer.1']
    %15 = vsyncpa [#allocation3], 0
    %16 = vsyncpa [#allocation5], 0
    // Predicated region
    $region2: #{gated_attention_summarizer.1} parent=1 // pred_check
      _
    $region3: #{gated_attention_summarizer.1} parent=1 // pred_check_branch
      %18 = sbr.rel (0) target = $region5
    $region4: #{gated_attention_summarizer.1} parent=1 // pred_region
      %s19 = sadd.s32 0, 0
      %p20 = scmp.lt.s32.totalorder %s19, 0
      %s21 = scalar_select %p20, %s19, 0
      %s22 = smul.addr %s21, 6
      %s23 = smul.addr %s22, 8
      %s24 = scalar_lea.vmem %s0, %s23
      %s25 = sadd.s32 0, 0
    $region5: #{gated_attention_summarizer.1} parent=1 // pred_fallthru
      _
    // Predicated region
    $region6: #{gated_attention_summarizer.1} parent=1 // pred_check
      _
    $region7: #{gated_attention_summarizer.1} parent=1 // pred_check_branch
      %27 = sbr.rel (0) target = $region9
    $region8: #{gated_attention_summarizer.1} parent=1 // pred_region
      _
    $region9: #{gated_attention_summarizer.1} parent=1 // pred_fallthru
      _
    // Predicated region
    $region10: #{gated_attention_summarizer.1} parent=1 // pred_check
      _
    $region11: #{gated_attention_summarizer.1} parent=1 // pred_check_branch
      %29 = sbr.rel (0) target = $region13
    $region12: #{gated_attention_summarizer.1} parent=1 // pred_region
      _
    $region13: #{gated_attention_summarizer.1} parent=1 // pred_fallthru
      _
    // Predicated region
    $region14: #{gated_attention_summarizer.1} parent=1 // pred_check
      _
    $region15: #{gated_attention_summarizer.1} parent=1 // pred_check_branch
      %31 = sbr.rel (0) target = $region17
    $region16: #{gated_attention_summarizer.1} parent=1 // pred_region
      _
    $region17: #{gated_attention_summarizer.1} parent=1 // pred_fallthru
      _
    // Predicated region
    $region18: #{gated_attention_summarizer.1} parent=1 // pred_check
      _
    $region19: #{gated_attention_summarizer.1} parent=1 // pred_check_branch
      %33 = sbr.rel (0) target = $region21
    $region20: #{gated_attention_summarizer.1} parent=1 // pred_region
      _
    $region21: #{gated_attention_summarizer.1} parent=1 // pred_fallthru
      _
    // Predicated region
    $region22: #{gated_attention_summarizer.1} parent=1 // pred_check
      _
    $region23: #{gated_attention_summarizer.1} parent=1 // pred_check_branch
      %35 = sbr.rel (0) target = $region25
    $region24: #{gated_attention_summarizer.1} parent=1 // pred_region
      _
    $region25: #{gated_attention_summarizer.1} parent=1 // pred_fallthru
      _
    %s36 = sadd.s32 0, 0
    %p37 = scmp.lt.s32.totalorder %s36, 0
    %s38 = scalar_select %p37, %s36, 0
    %s39 = smul.addr %s38, 6
    %s40 = smul.addr %s39, 8
    %s41 = scalar_lea.vmem %s0, %s40
    %s42 = sadd.s32 0, 0
    %p43 = scmp.lt.s32.totalorder %s42, 0
    %s44 = scalar_select %p43, %s42, 0
    %s45 = smul.addr %s44, 8
    %s46 = scalar_lea.vmem %s6, %s45
    %s47 = sadd.s32 0, 0
    %p48 = scmp.lt.s32.totalorder %s47, 0
    %s49 = scalar_select %p48, %s47, 0
    %s50 = smul.addr %s49, 6
    %s51 = smul.addr %s50, 8
    %s52 = scalar_lea.vmem %s0, %s51
    %s53 = sadd.s32 0, 0
    %s54 = sadd.s32 0, 0
    %p55 = scmp.lt.s32.totalorder %s54, 0
    %s56 = scalar_select %p55, %s54, 0
    %s57 = smul.addr %s56, 8
    %s58 = scalar_lea.vmem %s6, %s57
    %s59 = sadd.s32 0, 0
    %s60 = sadd.s32 0, 0
    %p61 = scmp.eq.s32.totalorder 0, 0
    // Predicated region
    $region26: #{gated_attention_summarizer.1} parent=1 // pred_check
      %p62 = pneg %p61
    $region27: #{gated_attention_summarizer.1} parent=1 // pred_check_branch
      %64 = sbr.rel (%p62) target = $region29
    $region28: #{gated_attention_summarizer.1} parent=1 // pred_region
      %vm65 = vcmask 0
      %66 = vst.msk [vmem:[#allocation2] sm:$0x1] %vm65, -inf
      %67 = vst.msk [vmem:[#allocation4] sm:$0x1] %vm65, 0.0
      %v68 = vlaneseq
      %vm69 = vcmp.ge.s32.totalorder %v68, 0
      %vm70 = vcmp.lt.s32.totalorder %v68, 768
      %vm71 = vmand %vm69, %vm70
      %72 = vst.msk [vmem:[%s9] sm:$0x3f] %vm71, 0.0
    $region29: #{gated_attention_summarizer.1} parent=1 // pred_fallthru
      _
    %v73 = vld [vmem:[%s52] sm:$0xff]
    %v74 = vld [vmem:[%s52 + $0x8] sm:$0xff]
    %v75 = vld [vmem:[%s52 + $0x10] sm:$0xff]
    %v76 = vld [vmem:[%s52 + $0x18] sm:$0xff]
    %v77 = vld [vmem:[%s52 + $0x20] sm:$0xff]
    %v78 = vld [vmem:[%s52 + $0x28] sm:$0xff]
    %v79 = vpack.c.bf16 %v73, %v73
    %v80 = vpack.c.bf16 %v74, %v74
    %v81 = vpack.c.bf16 %v75, %v75
    %v82 = vpack.c.bf16 %v76, %v76
    %v83 = vpack.c.bf16 %v77, %v77
    %v84 = vpack.c.bf16 %v78, %v78
    %v85 = vld [vmem:[%s1] sm:$0xff]
    %v86 = vld [vmem:[%s1 + $0x8] sm:$0xff]
    %v87 = vld [vmem:[%s1 + $0x10] sm:$0xff]
    %v88 = vld [vmem:[%s1 + $0x18] sm:$0xff]
    %v89 = vld [vmem:[%s1 + $0x20] sm:$0xff]
    %v90 = vld [vmem:[%s1 + $0x28] sm:$0xff]
    %v91 = vld [vmem:[%s1 + $0x30] sm:$0xff]
    %v92 = vld [vmem:[%s1 + $0x38] sm:$0xff]
    %v93 = vld [vmem:[%s1 + $0x40] sm:$0xff]
    %v94 = vld [vmem:[%s1 + $0x48] sm:$0xff]
    %v95 = vld [vmem:[%s1 + $0x50] sm:$0xff]
    %v96 = vld [vmem:[%s1 + $0x58] sm:$0xff]
    %v97 = vld [vmem:[%s1 + $0x60] sm:$0xff]
    %v98 = vld [vmem:[%s1 + $0x68] sm:$0xff]
    %v99 = vld [vmem:[%s1 + $0x70] sm:$0xff]
    %v100 = vld [vmem:[%s1 + $0x78] sm:$0xff]
    %v101 = vld [vmem:[%s1 + $0x80] sm:$0xff]
    %v102 = vld [vmem:[%s1 + $0x88] sm:$0xff]
    %v103 = vld [vmem:[%s1 + $0x90] sm:$0xff]
    %v104 = vld [vmem:[%s1 + $0x98] sm:$0xff]
    %v105 = vld [vmem:[%s1 + $0xa0] sm:$0xff]
    %v106 = vld [vmem:[%s1 + $0xa8] sm:$0xff]
    %v107 = vld [vmem:[%s1 + $0xb0] sm:$0xff]
    %v108 = vld [vmem:[%s1 + $0xb8] sm:$0xff]
    %v109 = vld [vmem:[%s1 + $0xc0] sm:$0xff]
    %v110 = vld [vmem:[%s1 + $0xc8] sm:$0xff]
    %v111 = vld [vmem:[%s1 + $0xd0] sm:$0xff]
    %v112 = vld [vmem:[%s1 + $0xd8] sm:$0xff]
    %v113 = vld [vmem:[%s1 + $0xe0] sm:$0xff]
    %v114 = vld [vmem:[%s1 + $0xe8] sm:$0xff]
    %v115 = vld [vmem:[%s1 + $0xf0] sm:$0xff]
    %v116 = vld [vmem:[%s1 + $0xf8] sm:$0xff]
    %v117 = vld [vmem:[%s1 + $0x100] sm:$0xff]
    %v118 = vld [vmem:[%s1 + $0x108] sm:$0xff]
    %v119 = vld [vmem:[%s1 + $0x110] sm:$0xff]
    %v120 = vld [vmem:[%s1 + $0x118] sm:$0xff]
    %v121 = vld [vmem:[%s1 + $0x120] sm:$0xff]
    %v122 = vld [vmem:[%s1 + $0x128] sm:$0xff]
    %v123 = vld [vmem:[%s1 + $0x130] sm:$0xff]
    %v124 = vld [vmem:[%s1 + $0x138] sm:$0xff]
    %v125 = vld [vmem:[%s1 + $0x140] sm:$0xff]
    %v126 = vld [vmem:[%s1 + $0x148] sm:$0xff]
    %v127 = vld [vmem:[%s1 + $0x150] sm:$0xff]
    %v128 = vld [vmem:[%s1 + $0x158] sm:$0xff]
    %v129 = vld [vmem:[%s1 + $0x160] sm:$0xff]
    %v130 = vld [vmem:[%s1 + $0x168] sm:$0xff]
    %v131 = vld [vmem:[%s1 + $0x170] sm:$0xff]
    %v132 = vld [vmem:[%s1 + $0x178] sm:$0xff]
    %v133 = vld [vmem:[%s1 + $0x180] sm:$0xff]
    %v134 = vld [vmem:[%s1 + $0x188] sm:$0xff]
    %v135 = vld [vmem:[%s1 + $0x190] sm:$0xff]
    %v136 = vld [vmem:[%s1 + $0x198] sm:$0xff]
    %v137 = vld [vmem:[%s1 + $0x1a0] sm:$0xff]
    %v138 = vld [vmem:[%s1 + $0x1a8] sm:$0xff]
    %v139 = vld [vmem:[%s1 + $0x1b0] sm:$0xff]
    %v140 = vld [vmem:[%s1 + $0x1b8] sm:$0xff]
    %v141 = vld [vmem:[%s1 + $0x1c0] sm:$0xff]
    %v142 = vld [vmem:[%s1 + $0x1c8] sm:$0xff]
    %v143 = vld [vmem:[%s1 + $0x1d0] sm:$0xff]
    %v144 = vld [vmem:[%s1 + $0x1d8] sm:$0xff]
    %v145 = vld [vmem:[%s1 + $0x1e0] sm:$0xff]
    %v146 = vld [vmem:[%s1 + $0x1e8] sm:$0xff]
    %v147 = vld [vmem:[%s1 + $0x1f0] sm:$0xff]
    %v148 = vld [vmem:[%s1 + $0x1f8] sm:$0xff]
    %v149 = vld [vmem:[%s1 + $0x200] sm:$0xff]
    %v150 = vld [vmem:[%s1 + $0x208] sm:$0xff]
    %v151 = vld [vmem:[%s1 + $0x210] sm:$0xff]
    %v152 = vld [vmem:[%s1 + $0x218] sm:$0xff]
    %v153 = vld [vmem:[%s1 + $0x220] sm:$0xff]
    %v154 = vld [vmem:[%s1 + $0x228] sm:$0xff]
    %v155 = vld [vmem:[%s1 + $0x230] sm:$0xff]
    %v156 = vld [vmem:[%s1 + $0x238] sm:$0xff]
    %v157 = vld [vmem:[%s1 + $0x240] sm:$0xff]
    %v158 = vld [vmem:[%s1 + $0x248] sm:$0xff]
    %v159 = vld [vmem:[%s1 + $0x250] sm:$0xff]
    %v160 = vld [vmem:[%s1 + $0x258] sm:$0xff]
    %v161 = vld [vmem:[%s1 + $0x260] sm:$0xff]
    %v162 = vld [vmem:[%s1 + $0x268] sm:$0xff]
    %v163 = vld [vmem:[%s1 + $0x270] sm:$0xff]
    %v164 = vld [vmem:[%s1 + $0x278] sm:$0xff]
    %v165 = vld [vmem:[%s1 + $0x280] sm:$0xff]
    %v166 = vld [vmem:[%s1 + $0x288] sm:$0xff]
    %v167 = vld [vmem:[%s1 + $0x290] sm:$0xff]
    %v168 = vld [vmem:[%s1 + $0x298] sm:$0xff]
    %v169 = vld [vmem:[%s1 + $0x2a0] sm:$0xff]
    %v170 = vld [vmem:[%s1 + $0x2a8] sm:$0xff]
    %v171 = vld [vmem:[%s1 + $0x2b0] sm:$0xff]
    %v172 = vld [vmem:[%s1 + $0x2b8] sm:$0xff]
    %v173 = vld [vmem:[%s1 + $0x2c0] sm:$0xff]
    %v174 = vld [vmem:[%s1 + $0x2c8] sm:$0xff]
    %v175 = vld [vmem:[%s1 + $0x2d0] sm:$0xff]
    %v176 = vld [vmem:[%s1 + $0x2d8] sm:$0xff]
    %v177 = vld [vmem:[%s1 + $0x2e0] sm:$0xff]
    %v178 = vld [vmem:[%s1 + $0x2e8] sm:$0xff]
    %v179 = vld [vmem:[%s1 + $0x2f0] sm:$0xff]
    %v180 = vld [vmem:[%s1 + $0x2f8] sm:$0xff]
    %v181 = vld [vmem:[%s1 + $0x300] sm:$0xff]
    %v182 = vld [vmem:[%s1 + $0x308] sm:$0xff]
    %v183 = vld [vmem:[%s1 + $0x310] sm:$0xff]
    %v184 = vld [vmem:[%s1 + $0x318] sm:$0xff]
    %v185 = vld [vmem:[%s1 + $0x320] sm:$0xff]
    %v186 = vld [vmem:[%s1 + $0x328] sm:$0xff]
    %v187 = vld [vmem:[%s1 + $0x330] sm:$0xff]
    %v188 = vld [vmem:[%s1 + $0x338] sm:$0xff]
    %v189 = vld [vmem:[%s1 + $0x340] sm:$0xff]
    %v190 = vld [vmem:[%s1 + $0x348] sm:$0xff]
    %v191 = vld [vmem:[%s1 + $0x350] sm:$0xff]
    %v192 = vld [vmem:[%s1 + $0x358] sm:$0xff]
    %v193 = vld [vmem:[%s1 + $0x360] sm:$0xff]
    %v194 = vld [vmem:[%s1 + $0x368] sm:$0xff]
    %v195 = vld [vmem:[%s1 + $0x370] sm:$0xff]
    %v196 = vld [vmem:[%s1 + $0x378] sm:$0xff]
    %v197 = vld [vmem:[%s1 + $0x380] sm:$0xff]
    %v198 = vld [vmem:[%s1 + $0x388] sm:$0xff]
    %v199 = vld [vmem:[%s1 + $0x390] sm:$0xff]
    %v200 = vld [vmem:[%s1 + $0x398] sm:$0xff]
    %v201 = vld [vmem:[%s1 + $0x3a0] sm:$0xff]
    %v202 = vld [vmem:[%s1 + $0x3a8] sm:$0xff]
    %v203 = vld [vmem:[%s1 + $0x3b0] sm:$0xff]
    %v204 = vld [vmem:[%s1 + $0x3b8] sm:$0xff]
    %v205 = vld [vmem:[%s1 + $0x3c0] sm:$0xff]
    %v206 = vld [vmem:[%s1 + $0x3c8] sm:$0xff]
    %v207 = vld [vmem:[%s1 + $0x3d0] sm:$0xff]
    %v208 = vld [vmem:[%s1 + $0x3d8] sm:$0xff]
    %v209 = vld [vmem:[%s1 + $0x3e0] sm:$0xff]
    %v210 = vld [vmem:[%s1 + $0x3e8] sm:$0xff]
    %v211 = vld [vmem:[%s1 + $0x3f0] sm:$0xff]
    %v212 = vld [vmem:[%s1 + $0x3f8] sm:$0xff]
    %v213 = vld [vmem:[%s1 + $0x400] sm:$0xff]
    %v214 = vld [vmem:[%s1 + $0x408] sm:$0xff]
    %v215 = vld [vmem:[%s1 + $0x410] sm:$0xff]
    %v216 = vld [vmem:[%s1 + $0x418] sm:$0xff]
    %v217 = vld [vmem:[%s1 + $0x420] sm:$0xff]
    %v218 = vld [vmem:[%s1 + $0x428] sm:$0xff]
    %v219 = vld [vmem:[%s1 + $0x430] sm:$0xff]
    %v220 = vld [vmem:[%s1 + $0x438] sm:$0xff]
    %v221 = vld [vmem:[%s1 + $0x440] sm:$0xff]
    %v222 = vld [vmem:[%s1 + $0x448] sm:$0xff]
    %v223 = vld [vmem:[%s1 + $0x450] sm:$0xff]
    %v224 = vld [vmem:[%s1 + $0x458] sm:$0xff]
    %v225 = vld [vmem:[%s1 + $0x460] sm:$0xff]
    %v226 = vld [vmem:[%s1 + $0x468] sm:$0xff]
    %v227 = vld [vmem:[%s1 + $0x470] sm:$0xff]
    %v228 = vld [vmem:[%s1 + $0x478] sm:$0xff]
    %v229 = vld [vmem:[%s1 + $0x480] sm:$0xff]
    %v230 = vld [vmem:[%s1 + $0x488] sm:$0xff]
    %v231 = vld [vmem:[%s1 + $0x490] sm:$0xff]
    %v232 = vld [vmem:[%s1 + $0x498] sm:$0xff]
    %v233 = vld [vmem:[%s1 + $0x4a0] sm:$0xff]
    %v234 = vld [vmem:[%s1 + $0x4a8] sm:$0xff]
    %v235 = vld [vmem:[%s1 + $0x4b0] sm:$0xff]
    %v236 = vld [vmem:[%s1 + $0x4b8] sm:$0xff]
    %v237 = vld [vmem:[%s1 + $0x4c0] sm:$0xff]
    %v238 = vld [vmem:[%s1 + $0x4c8] sm:$0xff]
    %v239 = vld [vmem:[%s1 + $0x4d0] sm:$0xff]
    %v240 = vld [vmem:[%s1 + $0x4d8] sm:$0xff]
    %v241 = vld [vmem:[%s1 + $0x4e0] sm:$0xff]
    %v242 = vld [vmem:[%s1 + $0x4e8] sm:$0xff]
    %v243 = vld [vmem:[%s1 + $0x4f0] sm:$0xff]
    %v244 = vld [vmem:[%s1 + $0x4f8] sm:$0xff]
    %v245 = vld [vmem:[%s1 + $0x500] sm:$0xff]
    %v246 = vld [vmem:[%s1 + $0x508] sm:$0xff]
    %v247 = vld [vmem:[%s1 + $0x510] sm:$0xff]
    %v248 = vld [vmem:[%s1 + $0x518] sm:$0xff]
    %v249 = vld [vmem:[%s1 + $0x520] sm:$0xff]
    %v250 = vld [vmem:[%s1 + $0x528] sm:$0xff]
    %v251 = vld [vmem:[%s1 + $0x530] sm:$0xff]
    %v252 = vld [vmem:[%s1 + $0x538] sm:$0xff]
    %v253 = vld [vmem:[%s1 + $0x540] sm:$0xff]
    %v254 = vld [vmem:[%s1 + $0x548] sm:$0xff]
    %v255 = vld [vmem:[%s1 + $0x550] sm:$0xff]
    %v256 = vld [vmem:[%s1 + $0x558] sm:$0xff]
    %v257 = vld [vmem:[%s1 + $0x560] sm:$0xff]
    %v258 = vld [vmem:[%s1 + $0x568] sm:$0xff]
    %v259 = vld [vmem:[%s1 + $0x570] sm:$0xff]
    %v260 = vld [vmem:[%s1 + $0x578] sm:$0xff]
    %v261 = vld [vmem:[%s1 + $0x580] sm:$0xff]
    %v262 = vld [vmem:[%s1 + $0x588] sm:$0xff]
    %v263 = vld [vmem:[%s1 + $0x590] sm:$0xff]
    %v264 = vld [vmem:[%s1 + $0x598] sm:$0xff]
    %v265 = vld [vmem:[%s1 + $0x5a0] sm:$0xff]
    %v266 = vld [vmem:[%s1 + $0x5a8] sm:$0xff]
    %v267 = vld [vmem:[%s1 + $0x5b0] sm:$0xff]
    %v268 = vld [vmem:[%s1 + $0x5b8] sm:$0xff]
    %v269 = vld [vmem:[%s1 + $0x5c0] sm:$0xff]
    %v270 = vld [vmem:[%s1 + $0x5c8] sm:$0xff]
    %v271 = vld [vmem:[%s1 + $0x5d0] sm:$0xff]
    %v272 = vld [vmem:[%s1 + $0x5d8] sm:$0xff]
    %v273 = vld [vmem:[%s1 + $0x5e0] sm:$0xff]
    %v274 = vld [vmem:[%s1 + $0x5e8] sm:$0xff]
    %v275 = vld [vmem:[%s1 + $0x5f0] sm:$0xff]
    %v276 = vld [vmem:[%s1 + $0x5f8] sm:$0xff]
    %v277 = vld [vmem:[%s1 + $0x600] sm:$0xff]
    %v278 = vld [vmem:[%s1 + $0x608] sm:$0xff]
    %v279 = vld [vmem:[%s1 + $0x610] sm:$0xff]
    %v280 = vld [vmem:[%s1 + $0x618] sm:$0xff]
    %v281 = vld [vmem:[%s1 + $0x620] sm:$0xff]
    %v282 = vld [vmem:[%s1 + $0x628] sm:$0xff]
    %v283 = vld [vmem:[%s1 + $0x630] sm:$0xff]
    %v284 = vld [vmem:[%s1 + $0x638] sm:$0xff]
    %v285 = vld [vmem:[%s1 + $0x640] sm:$0xff]
    %v286 = vld [vmem:[%s1 + $0x648] sm:$0xff]
    %v287 = vld [vmem:[%s1 + $0x650] sm:$0xff]
    %v288 = vld [vmem:[%s1 + $0x658] sm:$0xff]
    %v289 = vld [vmem:[%s1 + $0x660] sm:$0xff]
    %v290 = vld [vmem:[%s1 + $0x668] sm:$0xff]
    %v291 = vld [vmem:[%s1 + $0x670] sm:$0xff]
    %v292 = vld [vmem:[%s1 + $0x678] sm:$0xff]
    %v293 = vld [vmem:[%s1 + $0x680] sm:$0xff]
    %v294 = vld [vmem:[%s1 + $0x688] sm:$0xff]
    %v295 = vld [vmem:[%s1 + $0x690] sm:$0xff]
    %v296 = vld [vmem:[%s1 + $0x698] sm:$0xff]
    %v297 = vld [vmem:[%s1 + $0x6a0] sm:$0xff]
    %v298 = vld [vmem:[%s1 + $0x6a8] sm:$0xff]
    %v299 = vld [vmem:[%s1 + $0x6b0] sm:$0xff]
    %v300 = vld [vmem:[%s1 + $0x6b8] sm:$0xff]
    %v301 = vld [vmem:[%s1 + $0x6c0] sm:$0xff]
    %v302 = vld [vmem:[%s1 + $0x6c8] sm:$0xff]
    %v303 = vld [vmem:[%s1 + $0x6d0] sm:$0xff]
    %v304 = vld [vmem:[%s1 + $0x6d8] sm:$0xff]
    %v305 = vld [vmem:[%s1 + $0x6e0] sm:$0xff]
    %v306 = vld [vmem:[%s1 + $0x6e8] sm:$0xff]
    %v307 = vld [vmem:[%s1 + $0x6f0] sm:$0xff]
    %v308 = vld [vmem:[%s1 + $0x6f8] sm:$0xff]
    %v309 = vld [vmem:[%s1 + $0x700] sm:$0xff]
    %v310 = vld [vmem:[%s1 + $0x708] sm:$0xff]
    %v311 = vld [vmem:[%s1 + $0x710] sm:$0xff]
    %v312 = vld [vmem:[%s1 + $0x718] sm:$0xff]
    %v313 = vld [vmem:[%s1 + $0x720] sm:$0xff]
    %v314 = vld [vmem:[%s1 + $0x728] sm:$0xff]
    %v315 = vld [vmem:[%s1 + $0x730] sm:$0xff]
    %v316 = vld [vmem:[%s1 + $0x738] sm:$0xff]
    %v317 = vld [vmem:[%s1 + $0x740] sm:$0xff]
    %v318 = vld [vmem:[%s1 + $0x748] sm:$0xff]
    %v319 = vld [vmem:[%s1 + $0x750] sm:$0xff]
    %v320 = vld [vmem:[%s1 + $0x758] sm:$0xff]
    %v321 = vld [vmem:[%s1 + $0x760] sm:$0xff]
    %v322 = vld [vmem:[%s1 + $0x768] sm:$0xff]
    %v323 = vld [vmem:[%s1 + $0x770] sm:$0xff]
    %v324 = vld [vmem:[%s1 + $0x778] sm:$0xff]
    %v325 = vld [vmem:[%s1 + $0x780] sm:$0xff]
    %v326 = vld [vmem:[%s1 + $0x788] sm:$0xff]
    %v327 = vld [vmem:[%s1 + $0x790] sm:$0xff]
    %v328 = vld [vmem:[%s1 + $0x798] sm:$0xff]
    %v329 = vld [vmem:[%s1 + $0x7a0] sm:$0xff]
    %v330 = vld [vmem:[%s1 + $0x7a8] sm:$0xff]
    %v331 = vld [vmem:[%s1 + $0x7b0] sm:$0xff]
    %v332 = vld [vmem:[%s1 + $0x7b8] sm:$0xff]
    %v333 = vld [vmem:[%s1 + $0x7c0] sm:$0xff]
    %v334 = vld [vmem:[%s1 + $0x7c8] sm:$0xff]
    %v335 = vld [vmem:[%s1 + $0x7d0] sm:$0xff]
    %v336 = vld [vmem:[%s1 + $0x7d8] sm:$0xff]
    %v337 = vld [vmem:[%s1 + $0x7e0] sm:$0xff]
    %v338 = vld [vmem:[%s1 + $0x7e8] sm:$0xff]
    %v339 = vld [vmem:[%s1 + $0x7f0] sm:$0xff]
    %v340 = vld [vmem:[%s1 + $0x7f8] sm:$0xff]
    %v341 = vld [vmem:[%s1 + $0x800] sm:$0xff]
    %v342 = vld [vmem:[%s1 + $0x808] sm:$0xff]
    %v343 = vld [vmem:[%s1 + $0x810] sm:$0xff]
    %v344 = vld [vmem:[%s1 + $0x818] sm:$0xff]
    %v345 = vld [vmem:[%s1 + $0x820] sm:$0xff]
    %v346 = vld [vmem:[%s1 + $0x828] sm:$0xff]
    %v347 = vld [vmem:[%s1 + $0x830] sm:$0xff]
    %v348 = vld [vmem:[%s1 + $0x838] sm:$0xff]
    %v349 = vld [vmem:[%s1 + $0x840] sm:$0xff]
    %v350 = vld [vmem:[%s1 + $0x848] sm:$0xff]
    %v351 = vld [vmem:[%s1 + $0x850] sm:$0xff]
    %v352 = vld [vmem:[%s1 + $0x858] sm:$0xff]
    %v353 = vld [vmem:[%s1 + $0x860] sm:$0xff]
    %v354 = vld [vmem:[%s1 + $0x868] sm:$0xff]
    %v355 = vld [vmem:[%s1 + $0x870] sm:$0xff]
    %v356 = vld [vmem:[%s1 + $0x878] sm:$0xff]
    %v357 = vld [vmem:[%s1 + $0x880] sm:$0xff]
    %v358 = vld [vmem:[%s1 + $0x888] sm:$0xff]
    %v359 = vld [vmem:[%s1 + $0x890] sm:$0xff]
    %v360 = vld [vmem:[%s1 + $0x898] sm:$0xff]
    %v361 = vld [vmem:[%s1 + $0x8a0] sm:$0xff]
    %v362 = vld [vmem:[%s1 + $0x8a8] sm:$0xff]
    %v363 = vld [vmem:[%s1 + $0x8b0] sm:$0xff]
    %v364 = vld [vmem:[%s1 + $0x8b8] sm:$0xff]
    %v365 = vld [vmem:[%s1 + $0x8c0] sm:$0xff]
    %v366 = vld [vmem:[%s1 + $0x8c8] sm:$0xff]
    %v367 = vld [vmem:[%s1 + $0x8d0] sm:$0xff]
    %v368 = vld [vmem:[%s1 + $0x8d8] sm:$0xff]
    %v369 = vld [vmem:[%s1 + $0x8e0] sm:$0xff]
    %v370 = vld [vmem:[%s1 + $0x8e8] sm:$0xff]
    %v371 = vld [vmem:[%s1 + $0x8f0] sm:$0xff]
    %v372 = vld [vmem:[%s1 + $0x8f8] sm:$0xff]
    %v373 = vld [vmem:[%s2] sm:$0x3f]
    %v375 = vlaneseq
    %v376 = vshrl.u32 %v375, 7
    %v377 = vsub.s32 0, %v376
    %v378 = vrot.slane %v373, %v377
    %v379 = vlaneseq
    %v380 = vshrl.u32 %v379, 7
    %v381 = vsub.s32 1, %v380
    %v382 = vrot.slane %v373, %v381
    %v383 = vlaneseq
    %v384 = vshrl.u32 %v383, 7
    %v385 = vsub.s32 2, %v384
    %v386 = vrot.slane %v373, %v385
    %v387 = vlaneseq
    %v388 = vshrl.u32 %v387, 7
    %v389 = vsub.s32 3, %v388
    %v390 = vrot.slane %v373, %v389
    %v391 = vlaneseq
    %v392 = vshrl.u32 %v391, 7
    %v393 = vsub.s32 4, %v392
    %v394 = vrot.slane %v373, %v393
    %v395 = vlaneseq
    %v396 = vshrl.u32 %v395, 7
    %v397 = vsub.s32 5, %v396
    %v398 = vrot.slane %v373, %v397
    %v693 = vunpack.c.l.b16 %v85
    %v694 = vunpack.c.h.b16 %v85
    %v695 = vunpack.c.l.b16 %v86
    %v696 = vunpack.c.h.b16 %v86
    %v697 = vunpack.c.l.b16 %v87
    %v698 = vunpack.c.h.b16 %v87
    %v699 = vunpack.c.l.b16 %v88
    %v700 = vunpack.c.h.b16 %v88
    %v701 = vunpack.c.l.b16 %v89
    %v702 = vunpack.c.h.b16 %v89
    %v703 = vunpack.c.l.b16 %v90
    %v704 = vunpack.c.h.b16 %v90
    %v705 = vunpack.c.l.b16 %v91
    %v706 = vunpack.c.h.b16 %v91
    %v707 = vunpack.c.l.b16 %v92
    %v708 = vunpack.c.h.b16 %v92
    %v709 = vunpack.c.l.b16 %v93
    %v710 = vunpack.c.h.b16 %v93
    %v711 = vunpack.c.l.b16 %v94
    %v712 = vunpack.c.h.b16 %v94
    %v713 = vunpack.c.l.b16 %v95
    %v714 = vunpack.c.h.b16 %v95
    %v715 = vunpack.c.l.b16 %v96
    %v716 = vunpack.c.h.b16 %v96
    %v717 = vunpack.c.l.b16 %v97
    %v718 = vunpack.c.h.b16 %v97
    %v719 = vunpack.c.l.b16 %v98
    %v720 = vunpack.c.h.b16 %v98
    %v721 = vunpack.c.l.b16 %v99
    %v722 = vunpack.c.h.b16 %v99
    %v723 = vunpack.c.l.b16 %v100
    %v724 = vunpack.c.h.b16 %v100
    %v725 = vunpack.c.l.b16 %v101
    %v726 = vunpack.c.h.b16 %v101
    %v727 = vunpack.c.l.b16 %v102
    %v728 = vunpack.c.h.b16 %v102
    %v729 = vunpack.c.l.b16 %v103
    %v730 = vunpack.c.h.b16 %v103
    %v731 = vunpack.c.l.b16 %v104
    %v732 = vunpack.c.h.b16 %v104
    %v733 = vunpack.c.l.b16 %v105
    %v734 = vunpack.c.h.b16 %v105
    %v735 = vunpack.c.l.b16 %v106
    %v736 = vunpack.c.h.b16 %v106
    %v737 = vunpack.c.l.b16 %v107
    %v738 = vunpack.c.h.b16 %v107
    %v739 = vunpack.c.l.b16 %v108
    %v740 = vunpack.c.h.b16 %v108
    %v741 = vunpack.c.l.b16 %v109
    %v742 = vunpack.c.h.b16 %v109
    %v743 = vunpack.c.l.b16 %v110
    %v744 = vunpack.c.h.b16 %v110
    %v745 = vunpack.c.l.b16 %v111
    %v746 = vunpack.c.h.b16 %v111
    %v747 = vunpack.c.l.b16 %v112
    %v748 = vunpack.c.h.b16 %v112
    %v749 = vunpack.c.l.b16 %v113
    %v750 = vunpack.c.h.b16 %v113
    %v751 = vunpack.c.l.b16 %v114
    %v752 = vunpack.c.h.b16 %v114
    %v753 = vunpack.c.l.b16 %v115
    %v754 = vunpack.c.h.b16 %v115
    %v755 = vunpack.c.l.b16 %v116
    %v756 = vunpack.c.h.b16 %v116
    %v757 = vunpack.c.l.b16 %v117
    %v758 = vunpack.c.h.b16 %v117
    %v759 = vunpack.c.l.b16 %v118
    %v760 = vunpack.c.h.b16 %v118
    %v761 = vunpack.c.l.b16 %v119
    %v762 = vunpack.c.h.b16 %v119
    %v763 = vunpack.c.l.b16 %v120
    %v764 = vunpack.c.h.b16 %v120
    %v765 = vunpack.c.l.b16 %v121
    %v766 = vunpack.c.h.b16 %v121
    %v767 = vunpack.c.l.b16 %v122
    %v768 = vunpack.c.h.b16 %v122
    %v769 = vunpack.c.l.b16 %v123
    %v770 = vunpack.c.h.b16 %v123
    %v771 = vunpack.c.l.b16 %v124
    %v772 = vunpack.c.h.b16 %v124
    %v773 = vunpack.c.l.b16 %v125
    %v774 = vunpack.c.h.b16 %v125
    %v775 = vunpack.c.l.b16 %v126
    %v776 = vunpack.c.h.b16 %v126
    %v777 = vunpack.c.l.b16 %v127
    %v778 = vunpack.c.h.b16 %v127
    %v779 = vunpack.c.l.b16 %v128
    %v780 = vunpack.c.h.b16 %v128
    %v781 = vunpack.c.l.b16 %v129
    %v782 = vunpack.c.h.b16 %v129
    %v783 = vunpack.c.l.b16 %v130
    %v784 = vunpack.c.h.b16 %v130
    %v785 = vunpack.c.l.b16 %v131
    %v786 = vunpack.c.h.b16 %v131
    %v787 = vunpack.c.l.b16 %v132
    %v788 = vunpack.c.h.b16 %v132
    %v789 = vunpack.c.l.b16 %v133
    %v790 = vunpack.c.h.b16 %v133
    %v791 = vunpack.c.l.b16 %v134
    %v792 = vunpack.c.h.b16 %v134
    %v793 = vunpack.c.l.b16 %v135
    %v794 = vunpack.c.h.b16 %v135
    %v795 = vunpack.c.l.b16 %v136
    %v796 = vunpack.c.h.b16 %v136
    %v797 = vunpack.c.l.b16 %v137
    %v798 = vunpack.c.h.b16 %v137
    %v799 = vunpack.c.l.b16 %v138
    %v800 = vunpack.c.h.b16 %v138
    %v801 = vunpack.c.l.b16 %v139
    %v802 = vunpack.c.h.b16 %v139
    %v803 = vunpack.c.l.b16 %v140
    %v804 = vunpack.c.h.b16 %v140
    %v805 = vunpack.c.l.b16 %v141
    %v806 = vunpack.c.h.b16 %v141
    %v807 = vunpack.c.l.b16 %v142
    %v808 = vunpack.c.h.b16 %v142
    %v809 = vunpack.c.l.b16 %v143
    %v810 = vunpack.c.h.b16 %v143
    %v811 = vunpack.c.l.b16 %v144
    %v812 = vunpack.c.h.b16 %v144
    %v813 = vunpack.c.l.b16 %v145
    %v814 = vunpack.c.h.b16 %v145
    %v815 = vunpack.c.l.b16 %v146
    %v816 = vunpack.c.h.b16 %v146
    %v817 = vunpack.c.l.b16 %v147
    %v818 = vunpack.c.h.b16 %v147
    %v819 = vunpack.c.l.b16 %v148
    %v820 = vunpack.c.h.b16 %v148
    %v821 = vunpack.c.l.b16 %v149
    %v822 = vunpack.c.h.b16 %v149
    %v823 = vunpack.c.l.b16 %v150
    %v824 = vunpack.c.h.b16 %v150
    %v825 = vunpack.c.l.b16 %v151
    %v826 = vunpack.c.h.b16 %v151
    %v827 = vunpack.c.l.b16 %v152
    %v828 = vunpack.c.h.b16 %v152
    %v829 = vunpack.c.l.b16 %v153
    %v830 = vunpack.c.h.b16 %v153
    %v831 = vunpack.c.l.b16 %v154
    %v832 = vunpack.c.h.b16 %v154
    %v833 = vunpack.c.l.b16 %v155
    %v834 = vunpack.c.h.b16 %v155
    %v835 = vunpack.c.l.b16 %v156
    %v836 = vunpack.c.h.b16 %v156
    %v837 = vunpack.c.l.b16 %v157
    %v838 = vunpack.c.h.b16 %v157
    %v839 = vunpack.c.l.b16 %v158
    %v840 = vunpack.c.h.b16 %v158
    %v841 = vunpack.c.l.b16 %v159
    %v842 = vunpack.c.h.b16 %v159
    %v843 = vunpack.c.l.b16 %v160
    %v844 = vunpack.c.h.b16 %v160
    %v845 = vunpack.c.l.b16 %v161
    %v846 = vunpack.c.h.b16 %v161
    %v847 = vunpack.c.l.b16 %v162
    %v848 = vunpack.c.h.b16 %v162
    %v849 = vunpack.c.l.b16 %v163
    %v850 = vunpack.c.h.b16 %v163
    %v851 = vunpack.c.l.b16 %v164
    %v852 = vunpack.c.h.b16 %v164
    %v853 = vunpack.c.l.b16 %v165
    %v854 = vunpack.c.h.b16 %v165
    %v855 = vunpack.c.l.b16 %v166
    %v856 = vunpack.c.h.b16 %v166
    %v857 = vunpack.c.l.b16 %v167
    %v858 = vunpack.c.h.b16 %v167
    %v859 = vunpack.c.l.b16 %v168
    %v860 = vunpack.c.h.b16 %v168
    %v861 = vunpack.c.l.b16 %v169
    %v862 = vunpack.c.h.b16 %v169
    %v863 = vunpack.c.l.b16 %v170
    %v864 = vunpack.c.h.b16 %v170
    %v865 = vunpack.c.l.b16 %v171
    %v866 = vunpack.c.h.b16 %v171
    %v867 = vunpack.c.l.b16 %v172
    %v868 = vunpack.c.h.b16 %v172
    %v869 = vunpack.c.l.b16 %v173
    %v870 = vunpack.c.h.b16 %v173
    %v871 = vunpack.c.l.b16 %v174
    %v872 = vunpack.c.h.b16 %v174
    %v873 = vunpack.c.l.b16 %v175
    %v874 = vunpack.c.h.b16 %v175
    %v875 = vunpack.c.l.b16 %v176
    %v876 = vunpack.c.h.b16 %v176
    %v877 = vunpack.c.l.b16 %v177
    %v878 = vunpack.c.h.b16 %v177
    %v879 = vunpack.c.l.b16 %v178
    %v880 = vunpack.c.h.b16 %v178
    %v881 = vunpack.c.l.b16 %v179
    %v882 = vunpack.c.h.b16 %v179
    %v883 = vunpack.c.l.b16 %v180
    %v884 = vunpack.c.h.b16 %v180
    %v885 = vunpack.c.l.b16 %v181
    %v886 = vunpack.c.h.b16 %v181
    %v887 = vunpack.c.l.b16 %v182
    %v888 = vunpack.c.h.b16 %v182
    %v889 = vunpack.c.l.b16 %v183
    %v890 = vunpack.c.h.b16 %v183
    %v891 = vunpack.c.l.b16 %v184
    %v892 = vunpack.c.h.b16 %v184
    %v893 = vunpack.c.l.b16 %v185
    %v894 = vunpack.c.h.b16 %v185
    %v895 = vunpack.c.l.b16 %v186
    %v896 = vunpack.c.h.b16 %v186
    %v897 = vunpack.c.l.b16 %v187
    %v898 = vunpack.c.h.b16 %v187
    %v899 = vunpack.c.l.b16 %v188
    %v900 = vunpack.c.h.b16 %v188
    %v901 = vunpack.c.l.b16 %v189
    %v902 = vunpack.c.h.b16 %v189
    %v903 = vunpack.c.l.b16 %v190
    %v904 = vunpack.c.h.b16 %v190
    %v905 = vunpack.c.l.b16 %v191
    %v906 = vunpack.c.h.b16 %v191
    %v907 = vunpack.c.l.b16 %v192
    %v908 = vunpack.c.h.b16 %v192
    %v909 = vunpack.c.l.b16 %v193
    %v910 = vunpack.c.h.b16 %v193
    %v911 = vunpack.c.l.b16 %v194
    %v912 = vunpack.c.h.b16 %v194
    %v913 = vunpack.c.l.b16 %v195
    %v914 = vunpack.c.h.b16 %v195
    %v915 = vunpack.c.l.b16 %v196
    %v916 = vunpack.c.h.b16 %v196
    %v917 = vunpack.c.l.b16 %v197
    %v918 = vunpack.c.h.b16 %v197
    %v919 = vunpack.c.l.b16 %v198
    %v920 = vunpack.c.h.b16 %v198
    %v921 = vunpack.c.l.b16 %v199
    %v922 = vunpack.c.h.b16 %v199
    %v923 = vunpack.c.l.b16 %v200
    %v924 = vunpack.c.h.b16 %v200
    %v925 = vunpack.c.l.b16 %v201
    %v926 = vunpack.c.h.b16 %v201
    %v927 = vunpack.c.l.b16 %v202
    %v928 = vunpack.c.h.b16 %v202
    %v929 = vunpack.c.l.b16 %v203
    %v930 = vunpack.c.h.b16 %v203
    %v931 = vunpack.c.l.b16 %v204
    %v932 = vunpack.c.h.b16 %v204
    %v933 = vunpack.c.l.b16 %v205
    %v934 = vunpack.c.h.b16 %v205
    %v935 = vunpack.c.l.b16 %v206
    %v936 = vunpack.c.h.b16 %v206
    %v937 = vunpack.c.l.b16 %v207
    %v938 = vunpack.c.h.b16 %v207
    %v939 = vunpack.c.l.b16 %v208
    %v940 = vunpack.c.h.b16 %v208
    %v941 = vunpack.c.l.b16 %v209
    %v942 = vunpack.c.h.b16 %v209
    %v943 = vunpack.c.l.b16 %v210
    %v944 = vunpack.c.h.b16 %v210
    %v945 = vunpack.c.l.b16 %v211
    %v946 = vunpack.c.h.b16 %v211
    %v947 = vunpack.c.l.b16 %v212
    %v948 = vunpack.c.h.b16 %v212
    %v949 = vunpack.c.l.b16 %v213
    %v950 = vunpack.c.h.b16 %v213
    %v951 = vunpack.c.l.b16 %v214
    %v952 = vunpack.c.h.b16 %v214
    %v953 = vunpack.c.l.b16 %v215
    %v954 = vunpack.c.h.b16 %v215
    %v955 = vunpack.c.l.b16 %v216
    %v956 = vunpack.c.h.b16 %v216
    %v957 = vunpack.c.l.b16 %v217
    %v958 = vunpack.c.h.b16 %v217
    %v959 = vunpack.c.l.b16 %v218
    %v960 = vunpack.c.h.b16 %v218
    %v961 = vunpack.c.l.b16 %v219
    %v962 = vunpack.c.h.b16 %v219
    %v963 = vunpack.c.l.b16 %v220
    %v964 = vunpack.c.h.b16 %v220
    %v965 = vunpack.c.l.b16 %v221
    %v966 = vunpack.c.h.b16 %v221
    %v967 = vunpack.c.l.b16 %v222
    %v968 = vunpack.c.h.b16 %v222
    %v969 = vunpack.c.l.b16 %v223
    %v970 = vunpack.c.h.b16 %v223
    %v971 = vunpack.c.l.b16 %v224
    %v972 = vunpack.c.h.b16 %v224
    %v973 = vunpack.c.l.b16 %v225
    %v974 = vunpack.c.h.b16 %v225
    %v975 = vunpack.c.l.b16 %v226
    %v976 = vunpack.c.h.b16 %v226
    %v977 = vunpack.c.l.b16 %v227
    %v978 = vunpack.c.h.b16 %v227
    %v979 = vunpack.c.l.b16 %v228
    %v980 = vunpack.c.h.b16 %v228
    %v981 = vunpack.c.l.b16 %v229
    %v982 = vunpack.c.h.b16 %v229
    %v983 = vunpack.c.l.b16 %v230
    %v984 = vunpack.c.h.b16 %v230
    %v985 = vunpack.c.l.b16 %v231
    %v986 = vunpack.c.h.b16 %v231
    %v987 = vunpack.c.l.b16 %v232
    %v988 = vunpack.c.h.b16 %v232
    %v989 = vunpack.c.l.b16 %v233
    %v990 = vunpack.c.h.b16 %v233
    %v991 = vunpack.c.l.b16 %v234
    %v992 = vunpack.c.h.b16 %v234
    %v993 = vunpack.c.l.b16 %v235
    %v994 = vunpack.c.h.b16 %v235
    %v995 = vunpack.c.l.b16 %v236
    %v996 = vunpack.c.h.b16 %v236
    %v997 = vunpack.c.l.b16 %v237
    %v998 = vunpack.c.h.b16 %v237
    %v999 = vunpack.c.l.b16 %v238
    %v1000 = vunpack.c.h.b16 %v238
    %v1001 = vunpack.c.l.b16 %v239
    %v1002 = vunpack.c.h.b16 %v239
    %v1003 = vunpack.c.l.b16 %v240
    %v1004 = vunpack.c.h.b16 %v240
    %v1005 = vunpack.c.l.b16 %v241
    %v1006 = vunpack.c.h.b16 %v241
    %v1007 = vunpack.c.l.b16 %v242
    %v1008 = vunpack.c.h.b16 %v242
    %v1009 = vunpack.c.l.b16 %v243
    %v1010 = vunpack.c.h.b16 %v243
    %v1011 = vunpack.c.l.b16 %v244
    %v1012 = vunpack.c.h.b16 %v244
    %v1013 = vunpack.c.l.b16 %v245
    %v1014 = vunpack.c.h.b16 %v245
    %v1015 = vunpack.c.l.b16 %v246
    %v1016 = vunpack.c.h.b16 %v246
    %v1017 = vunpack.c.l.b16 %v247
    %v1018 = vunpack.c.h.b16 %v247
    %v1019 = vunpack.c.l.b16 %v248
    %v1020 = vunpack.c.h.b16 %v248
    %v1021 = vunpack.c.l.b16 %v249
    %v1022 = vunpack.c.h.b16 %v249
    %v1023 = vunpack.c.l.b16 %v250
    %v1024 = vunpack.c.h.b16 %v250
    %v1025 = vunpack.c.l.b16 %v251
    %v1026 = vunpack.c.h.b16 %v251
    %v1027 = vunpack.c.l.b16 %v252
    %v1028 = vunpack.c.h.b16 %v252
    %v1029 = vunpack.c.l.b16 %v253
    %v1030 = vunpack.c.h.b16 %v253
    %v1031 = vunpack.c.l.b16 %v254
    %v1032 = vunpack.c.h.b16 %v254
    %v1033 = vunpack.c.l.b16 %v255
    %v1034 = vunpack.c.h.b16 %v255
    %v1035 = vunpack.c.l.b16 %v256
    %v1036 = vunpack.c.h.b16 %v256
    %v1037 = vunpack.c.l.b16 %v257
    %v1038 = vunpack.c.h.b16 %v257
    %v1039 = vunpack.c.l.b16 %v258
    %v1040 = vunpack.c.h.b16 %v258
    %v1041 = vunpack.c.l.b16 %v259
    %v1042 = vunpack.c.h.b16 %v259
    %v1043 = vunpack.c.l.b16 %v260
    %v1044 = vunpack.c.h.b16 %v260
    %v1045 = vunpack.c.l.b16 %v261
    %v1046 = vunpack.c.h.b16 %v261
    %v1047 = vunpack.c.l.b16 %v262
    %v1048 = vunpack.c.h.b16 %v262
    %v1049 = vunpack.c.l.b16 %v263
    %v1050 = vunpack.c.h.b16 %v263
    %v1051 = vunpack.c.l.b16 %v264
    %v1052 = vunpack.c.h.b16 %v264
    %v1053 = vunpack.c.l.b16 %v265
    %v1054 = vunpack.c.h.b16 %v265
    %v1055 = vunpack.c.l.b16 %v266
    %v1056 = vunpack.c.h.b16 %v266
    %v1057 = vunpack.c.l.b16 %v267
    %v1058 = vunpack.c.h.b16 %v267
    %v1059 = vunpack.c.l.b16 %v268
    %v1060 = vunpack.c.h.b16 %v268
    %v1061 = vunpack.c.l.b16 %v269
    %v1062 = vunpack.c.h.b16 %v269
    %v1063 = vunpack.c.l.b16 %v270
    %v1064 = vunpack.c.h.b16 %v270
    %v1065 = vunpack.c.l.b16 %v271
    %v1066 = vunpack.c.h.b16 %v271
    %v1067 = vunpack.c.l.b16 %v272
    %v1068 = vunpack.c.h.b16 %v272
    %v1069 = vunpack.c.l.b16 %v273
    %v1070 = vunpack.c.h.b16 %v273
    %v1071 = vunpack.c.l.b16 %v274
    %v1072 = vunpack.c.h.b16 %v274
    %v1073 = vunpack.c.l.b16 %v275
    %v1074 = vunpack.c.h.b16 %v275
    %v1075 = vunpack.c.l.b16 %v276
    %v1076 = vunpack.c.h.b16 %v276
    %v1077 = vunpack.c.l.b16 %v277
    %v1078 = vunpack.c.h.b16 %v277
    %v1079 = vunpack.c.l.b16 %v278
    %v1080 = vunpack.c.h.b16 %v278
    %v1081 = vunpack.c.l.b16 %v279
    %v1082 = vunpack.c.h.b16 %v279
    %v1083 = vunpack.c.l.b16 %v280
    %v1084 = vunpack.c.h.b16 %v280
    %v1085 = vunpack.c.l.b16 %v281
    %v1086 = vunpack.c.h.b16 %v281
    %v1087 = vunpack.c.l.b16 %v282
    %v1088 = vunpack.c.h.b16 %v282
    %v1089 = vunpack.c.l.b16 %v283
    %v1090 = vunpack.c.h.b16 %v283
    %v1091 = vunpack.c.l.b16 %v284
    %v1092 = vunpack.c.h.b16 %v284
    %v1093 = vunpack.c.l.b16 %v285
    %v1094 = vunpack.c.h.b16 %v285
    %v1095 = vunpack.c.l.b16 %v286
    %v1096 = vunpack.c.h.b16 %v286
    %v1097 = vunpack.c.l.b16 %v287
    %v1098 = vunpack.c.h.b16 %v287
    %v1099 = vunpack.c.l.b16 %v288
    %v1100 = vunpack.c.h.b16 %v288
    %v1101 = vunpack.c.l.b16 %v289
    %v1102 = vunpack.c.h.b16 %v289
    %v1103 = vunpack.c.l.b16 %v290
    %v1104 = vunpack.c.h.b16 %v290
    %v1105 = vunpack.c.l.b16 %v291
    %v1106 = vunpack.c.h.b16 %v291
    %v1107 = vunpack.c.l.b16 %v292
    %v1108 = vunpack.c.h.b16 %v292
    %v1109 = vunpack.c.l.b16 %v293
    %v1110 = vunpack.c.h.b16 %v293
    %v1111 = vunpack.c.l.b16 %v294
    %v1112 = vunpack.c.h.b16 %v294
    %v1113 = vunpack.c.l.b16 %v295
    %v1114 = vunpack.c.h.b16 %v295
    %v1115 = vunpack.c.l.b16 %v296
    %v1116 = vunpack.c.h.b16 %v296
    %v1117 = vunpack.c.l.b16 %v297
    %v1118 = vunpack.c.h.b16 %v297
    %v1119 = vunpack.c.l.b16 %v298
    %v1120 = vunpack.c.h.b16 %v298
    %v1121 = vunpack.c.l.b16 %v299
    %v1122 = vunpack.c.h.b16 %v299
    %v1123 = vunpack.c.l.b16 %v300
    %v1124 = vunpack.c.h.b16 %v300
    %v1125 = vunpack.c.l.b16 %v301
    %v1126 = vunpack.c.h.b16 %v301
    %v1127 = vunpack.c.l.b16 %v302
    %v1128 = vunpack.c.h.b16 %v302
    %v1129 = vunpack.c.l.b16 %v303
    %v1130 = vunpack.c.h.b16 %v303
    %v1131 = vunpack.c.l.b16 %v304
    %v1132 = vunpack.c.h.b16 %v304
    %v1133 = vunpack.c.l.b16 %v305
    %v1134 = vunpack.c.h.b16 %v305
    %v1135 = vunpack.c.l.b16 %v306
    %v1136 = vunpack.c.h.b16 %v306
    %v1137 = vunpack.c.l.b16 %v307
    %v1138 = vunpack.c.h.b16 %v307
    %v1139 = vunpack.c.l.b16 %v308
    %v1140 = vunpack.c.h.b16 %v308
    %v1141 = vunpack.c.l.b16 %v309
    %v1142 = vunpack.c.h.b16 %v309
    %v1143 = vunpack.c.l.b16 %v310
    %v1144 = vunpack.c.h.b16 %v310
    %v1145 = vunpack.c.l.b16 %v311
    %v1146 = vunpack.c.h.b16 %v311
    %v1147 = vunpack.c.l.b16 %v312
    %v1148 = vunpack.c.h.b16 %v312
    %v1149 = vunpack.c.l.b16 %v313
    %v1150 = vunpack.c.h.b16 %v313
    %v1151 = vunpack.c.l.b16 %v314
    %v1152 = vunpack.c.h.b16 %v314
    %v1153 = vunpack.c.l.b16 %v315
    %v1154 = vunpack.c.h.b16 %v315
    %v1155 = vunpack.c.l.b16 %v316
    %v1156 = vunpack.c.h.b16 %v316
    %v1157 = vunpack.c.l.b16 %v317
    %v1158 = vunpack.c.h.b16 %v317
    %v1159 = vunpack.c.l.b16 %v318
    %v1160 = vunpack.c.h.b16 %v318
    %v1161 = vunpack.c.l.b16 %v319
    %v1162 = vunpack.c.h.b16 %v319
    %v1163 = vunpack.c.l.b16 %v320
    %v1164 = vunpack.c.h.b16 %v320
    %v1165 = vunpack.c.l.b16 %v321
    %v1166 = vunpack.c.h.b16 %v321
    %v1167 = vunpack.c.l.b16 %v322
    %v1168 = vunpack.c.h.b16 %v322
    %v1169 = vunpack.c.l.b16 %v323
    %v1170 = vunpack.c.h.b16 %v323
    %v1171 = vunpack.c.l.b16 %v324
    %v1172 = vunpack.c.h.b16 %v324
    %v1173 = vunpack.c.l.b16 %v325
    %v1174 = vunpack.c.h.b16 %v325
    %v1175 = vunpack.c.l.b16 %v326
    %v1176 = vunpack.c.h.b16 %v326
    %v1177 = vunpack.c.l.b16 %v327
    %v1178 = vunpack.c.h.b16 %v327
    %v1179 = vunpack.c.l.b16 %v328
    %v1180 = vunpack.c.h.b16 %v328
    %v1181 = vunpack.c.l.b16 %v329
    %v1182 = vunpack.c.h.b16 %v329
    %v1183 = vunpack.c.l.b16 %v330
    %v1184 = vunpack.c.h.b16 %v330
    %v1185 = vunpack.c.l.b16 %v331
    %v1186 = vunpack.c.h.b16 %v331
    %v1187 = vunpack.c.l.b16 %v332
    %v1188 = vunpack.c.h.b16 %v332
    %v1189 = vunpack.c.l.b16 %v333
    %v1190 = vunpack.c.h.b16 %v333
    %v1191 = vunpack.c.l.b16 %v334
    %v1192 = vunpack.c.h.b16 %v334
    %v1193 = vunpack.c.l.b16 %v335
    %v1194 = vunpack.c.h.b16 %v335
    %v1195 = vunpack.c.l.b16 %v336
    %v1196 = vunpack.c.h.b16 %v336
    %v1197 = vunpack.c.l.b16 %v337
    %v1198 = vunpack.c.h.b16 %v337
    %v1199 = vunpack.c.l.b16 %v338
    %v1200 = vunpack.c.h.b16 %v338
    %v1201 = vunpack.c.l.b16 %v339
    %v1202 = vunpack.c.h.b16 %v339
    %v1203 = vunpack.c.l.b16 %v340
    %v1204 = vunpack.c.h.b16 %v340
    %v1205 = vunpack.c.l.b16 %v341
    %v1206 = vunpack.c.h.b16 %v341
    %v1207 = vunpack.c.l.b16 %v342
    %v1208 = vunpack.c.h.b16 %v342
    %v1209 = vunpack.c.l.b16 %v343
    %v1210 = vunpack.c.h.b16 %v343
    %v1211 = vunpack.c.l.b16 %v344
    %v1212 = vunpack.c.h.b16 %v344
    %v1213 = vunpack.c.l.b16 %v345
    %v1214 = vunpack.c.h.b16 %v345
    %v1215 = vunpack.c.l.b16 %v346
    %v1216 = vunpack.c.h.b16 %v346
    %v1217 = vunpack.c.l.b16 %v347
    %v1218 = vunpack.c.h.b16 %v347
    %v1219 = vunpack.c.l.b16 %v348
    %v1220 = vunpack.c.h.b16 %v348
    %v1221 = vunpack.c.l.b16 %v349
    %v1222 = vunpack.c.h.b16 %v349
    %v1223 = vunpack.c.l.b16 %v350
    %v1224 = vunpack.c.h.b16 %v350
    %v1225 = vunpack.c.l.b16 %v351
    %v1226 = vunpack.c.h.b16 %v351
    %v1227 = vunpack.c.l.b16 %v352
    %v1228 = vunpack.c.h.b16 %v352
    %v1229 = vunpack.c.l.b16 %v353
    %v1230 = vunpack.c.h.b16 %v353
    %v1231 = vunpack.c.l.b16 %v354
    %v1232 = vunpack.c.h.b16 %v354
    %v1233 = vunpack.c.l.b16 %v355
    %v1234 = vunpack.c.h.b16 %v355
    %v1235 = vunpack.c.l.b16 %v356
    %v1236 = vunpack.c.h.b16 %v356
    %v1237 = vunpack.c.l.b16 %v357
    %v1238 = vunpack.c.h.b16 %v357
    %v1239 = vunpack.c.l.b16 %v358
    %v1240 = vunpack.c.h.b16 %v358
    %v1241 = vunpack.c.l.b16 %v359
    %v1242 = vunpack.c.h.b16 %v359
    %v1243 = vunpack.c.l.b16 %v360
    %v1244 = vunpack.c.h.b16 %v360
    %v1245 = vunpack.c.l.b16 %v361
    %v1246 = vunpack.c.h.b16 %v361
    %v1247 = vunpack.c.l.b16 %v362
    %v1248 = vunpack.c.h.b16 %v362
    %v1249 = vunpack.c.l.b16 %v363
    %v1250 = vunpack.c.h.b16 %v363
    %v1251 = vunpack.c.l.b16 %v364
    %v1252 = vunpack.c.h.b16 %v364
    %v1253 = vunpack.c.l.b16 %v365
    %v1254 = vunpack.c.h.b16 %v365
    %v1255 = vunpack.c.l.b16 %v366
    %v1256 = vunpack.c.h.b16 %v366
    %v1257 = vunpack.c.l.b16 %v367
    %v1258 = vunpack.c.h.b16 %v367
    %v1259 = vunpack.c.l.b16 %v368
    %v1260 = vunpack.c.h.b16 %v368
    %v1261 = vunpack.c.l.b16 %v369
    %v1262 = vunpack.c.h.b16 %v369
    %v1263 = vunpack.c.l.b16 %v370
    %v1264 = vunpack.c.h.b16 %v370
    %v1265 = vunpack.c.l.b16 %v371
    %v1266 = vunpack.c.h.b16 %v371
    %v1267 = vunpack.c.l.b16 %v372
    %v1268 = vunpack.c.h.b16 %v372
    %v1269 = vpack.c.b16 %v699, %v693
    %v1270 = vpack.c.b16 %v700, %v694
    %v1271 = vpack.c.b16 %v701, %v695
    %v1272 = vpack.c.b16 %v702, %v696
    %v1273 = vpack.c.b16 %v703, %v697
    %v1274 = vpack.c.b16 %v704, %v698
    %v1275 = vpack.c.b16 %v711, %v705
    %v1276 = vpack.c.b16 %v712, %v706
    %v1277 = vpack.c.b16 %v713, %v707
    %v1278 = vpack.c.b16 %v714, %v708
    %v1279 = vpack.c.b16 %v715, %v709
    %v1280 = vpack.c.b16 %v716, %v710
    %v1281 = vpack.c.b16 %v723, %v717
    %v1282 = vpack.c.b16 %v724, %v718
    %v1283 = vpack.c.b16 %v725, %v719
    %v1284 = vpack.c.b16 %v726, %v720
    %v1285 = vpack.c.b16 %v727, %v721
    %v1286 = vpack.c.b16 %v728, %v722
    %v1287 = vpack.c.b16 %v735, %v729
    %v1288 = vpack.c.b16 %v736, %v730
    %v1289 = vpack.c.b16 %v737, %v731
    %v1290 = vpack.c.b16 %v738, %v732
    %v1291 = vpack.c.b16 %v739, %v733
    %v1292 = vpack.c.b16 %v740, %v734
    %v1293 = vpack.c.b16 %v747, %v741
    %v1294 = vpack.c.b16 %v748, %v742
    %v1295 = vpack.c.b16 %v749, %v743
    %v1296 = vpack.c.b16 %v750, %v744
    %v1297 = vpack.c.b16 %v751, %v745
    %v1298 = vpack.c.b16 %v752, %v746
    %v1299 = vpack.c.b16 %v759, %v753
    %v1300 = vpack.c.b16 %v760, %v754
    %v1301 = vpack.c.b16 %v761, %v755
    %v1302 = vpack.c.b16 %v762, %v756
    %v1303 = vpack.c.b16 %v763, %v757
    %v1304 = vpack.c.b16 %v764, %v758
    %v1305 = vpack.c.b16 %v771, %v765
    %v1306 = vpack.c.b16 %v772, %v766
    %v1307 = vpack.c.b16 %v773, %v767
    %v1308 = vpack.c.b16 %v774, %v768
    %v1309 = vpack.c.b16 %v775, %v769
    %v1310 = vpack.c.b16 %v776, %v770
    %v1311 = vpack.c.b16 %v783, %v777
    %v1312 = vpack.c.b16 %v784, %v778
    %v1313 = vpack.c.b16 %v785, %v779
    %v1314 = vpack.c.b16 %v786, %v780
    %v1315 = vpack.c.b16 %v787, %v781
    %v1316 = vpack.c.b16 %v788, %v782
    %v1317 = vpack.c.b16 %v795, %v789
    %v1318 = vpack.c.b16 %v796, %v790
    %v1319 = vpack.c.b16 %v797, %v791
    %v1320 = vpack.c.b16 %v798, %v792
    %v1321 = vpack.c.b16 %v799, %v793
    %v1322 = vpack.c.b16 %v800, %v794
    %v1323 = vpack.c.b16 %v807, %v801
    %v1324 = vpack.c.b16 %v808, %v802
    %v1325 = vpack.c.b16 %v809, %v803
    %v1326 = vpack.c.b16 %v810, %v804
    %v1327 = vpack.c.b16 %v811, %v805
    %v1328 = vpack.c.b16 %v812, %v806
    %v1329 = vpack.c.b16 %v819, %v813
    %v1330 = vpack.c.b16 %v820, %v814
    %v1331 = vpack.c.b16 %v821, %v815
    %v1332 = vpack.c.b16 %v822, %v816
    %v1333 = vpack.c.b16 %v823, %v817
    %v1334 = vpack.c.b16 %v824, %v818
    %v1335 = vpack.c.b16 %v831, %v825
    %v1336 = vpack.c.b16 %v832, %v826
    %v1337 = vpack.c.b16 %v833, %v827
    %v1338 = vpack.c.b16 %v834, %v828
    %v1339 = vpack.c.b16 %v835, %v829
    %v1340 = vpack.c.b16 %v836, %v830
    %v1341 = vpack.c.b16 %v843, %v837
    %v1342 = vpack.c.b16 %v844, %v838
    %v1343 = vpack.c.b16 %v845, %v839
    %v1344 = vpack.c.b16 %v846, %v840
    %v1345 = vpack.c.b16 %v847, %v841
    %v1346 = vpack.c.b16 %v848, %v842
    %v1347 = vpack.c.b16 %v855, %v849
    %v1348 = vpack.c.b16 %v856, %v850
    %v1349 = vpack.c.b16 %v857, %v851
    %v1350 = vpack.c.b16 %v858, %v852
    %v1351 = vpack.c.b16 %v859, %v853
    %v1352 = vpack.c.b16 %v860, %v854
    %v1353 = vpack.c.b16 %v867, %v861
    %v1354 = vpack.c.b16 %v868, %v862
    %v1355 = vpack.c.b16 %v869, %v863
    %v1356 = vpack.c.b16 %v870, %v864
    %v1357 = vpack.c.b16 %v871, %v865
    %v1358 = vpack.c.b16 %v872, %v866
    %v1359 = vpack.c.b16 %v879, %v873
    %v1360 = vpack.c.b16 %v880, %v874
    %v1361 = vpack.c.b16 %v881, %v875
    %v1362 = vpack.c.b16 %v882, %v876
    %v1363 = vpack.c.b16 %v883, %v877
    %v1364 = vpack.c.b16 %v884, %v878
    %v1365 = vpack.c.b16 %v891, %v885
    %v1366 = vpack.c.b16 %v892, %v886
    %v1367 = vpack.c.b16 %v893, %v887
    %v1368 = vpack.c.b16 %v894, %v888
    %v1369 = vpack.c.b16 %v895, %v889
    %v1370 = vpack.c.b16 %v896, %v890
    %v1371 = vpack.c.b16 %v903, %v897
    %v1372 = vpack.c.b16 %v904, %v898
    %v1373 = vpack.c.b16 %v905, %v899
    %v1374 = vpack.c.b16 %v906, %v900
    %v1375 = vpack.c.b16 %v907, %v901
    %v1376 = vpack.c.b16 %v908, %v902
    %v1377 = vpack.c.b16 %v915, %v909
    %v1378 = vpack.c.b16 %v916, %v910
    %v1379 = vpack.c.b16 %v917, %v911
    %v1380 = vpack.c.b16 %v918, %v912
    %v1381 = vpack.c.b16 %v919, %v913
    %v1382 = vpack.c.b16 %v920, %v914
    %v1383 = vpack.c.b16 %v927, %v921
    %v1384 = vpack.c.b16 %v928, %v922
    %v1385 = vpack.c.b16 %v929, %v923
    %v1386 = vpack.c.b16 %v930, %v924
    %v1387 = vpack.c.b16 %v931, %v925
    %v1388 = vpack.c.b16 %v932, %v926
    %v1389 = vpack.c.b16 %v939, %v933
    %v1390 = vpack.c.b16 %v940, %v934
    %v1391 = vpack.c.b16 %v941, %v935
    %v1392 = vpack.c.b16 %v942, %v936
    %v1393 = vpack.c.b16 %v943, %v937
    %v1394 = vpack.c.b16 %v944, %v938
    %v1395 = vpack.c.b16 %v951, %v945
    %v1396 = vpack.c.b16 %v952, %v946
    %v1397 = vpack.c.b16 %v953, %v947
    %v1398 = vpack.c.b16 %v954, %v948
    %v1399 = vpack.c.b16 %v955, %v949
    %v1400 = vpack.c.b16 %v956, %v950
    %v1401 = vpack.c.b16 %v963, %v957
    %v1402 = vpack.c.b16 %v964, %v958
    %v1403 = vpack.c.b16 %v965, %v959
    %v1404 = vpack.c.b16 %v966, %v960
    %v1405 = vpack.c.b16 %v967, %v961
    %v1406 = vpack.c.b16 %v968, %v962
    %v1407 = vpack.c.b16 %v975, %v969
    %v1408 = vpack.c.b16 %v976, %v970
    %v1409 = vpack.c.b16 %v977, %v971
    %v1410 = vpack.c.b16 %v978, %v972
    %v1411 = vpack.c.b16 %v979, %v973
    %v1412 = vpack.c.b16 %v980, %v974
    %v1413 = vpack.c.b16 %v987, %v981
    %v1414 = vpack.c.b16 %v988, %v982
    %v1415 = vpack.c.b16 %v989, %v983
    %v1416 = vpack.c.b16 %v990, %v984
    %v1417 = vpack.c.b16 %v991, %v985
    %v1418 = vpack.c.b16 %v992, %v986
    %v1419 = vpack.c.b16 %v999, %v993
    %v1420 = vpack.c.b16 %v1000, %v994
    %v1421 = vpack.c.b16 %v1001, %v995
    %v1422 = vpack.c.b16 %v1002, %v996
    %v1423 = vpack.c.b16 %v1003, %v997
    %v1424 = vpack.c.b16 %v1004, %v998
    %v1425 = vpack.c.b16 %v1011, %v1005
    %v1426 = vpack.c.b16 %v1012, %v1006
    %v1427 = vpack.c.b16 %v1013, %v1007
    %v1428 = vpack.c.b16 %v1014, %v1008
    %v1429 = vpack.c.b16 %v1015, %v1009
    %v1430 = vpack.c.b16 %v1016, %v1010
    %v1431 = vpack.c.b16 %v1023, %v1017
    %v1432 = vpack.c.b16 %v1024, %v1018
    %v1433 = vpack.c.b16 %v1025, %v1019
    %v1434 = vpack.c.b16 %v1026, %v1020
    %v1435 = vpack.c.b16 %v1027, %v1021
    %v1436 = vpack.c.b16 %v1028, %v1022
    %v1437 = vpack.c.b16 %v1035, %v1029
    %v1438 = vpack.c.b16 %v1036, %v1030
    %v1439 = vpack.c.b16 %v1037, %v1031
    %v1440 = vpack.c.b16 %v1038, %v1032
    %v1441 = vpack.c.b16 %v1039, %v1033
    %v1442 = vpack.c.b16 %v1040, %v1034
    %v1443 = vpack.c.b16 %v1047, %v1041
    %v1444 = vpack.c.b16 %v1048, %v1042
    %v1445 = vpack.c.b16 %v1049, %v1043
    %v1446 = vpack.c.b16 %v1050, %v1044
    %v1447 = vpack.c.b16 %v1051, %v1045
    %v1448 = vpack.c.b16 %v1052, %v1046
    %v1449 = vpack.c.b16 %v1059, %v1053
    %v1450 = vpack.c.b16 %v1060, %v1054
    %v1451 = vpack.c.b16 %v1061, %v1055
    %v1452 = vpack.c.b16 %v1062, %v1056
    %v1453 = vpack.c.b16 %v1063, %v1057
    %v1454 = vpack.c.b16 %v1064, %v1058
    %v1455 = vpack.c.b16 %v1071, %v1065
    %v1456 = vpack.c.b16 %v1072, %v1066
    %v1457 = vpack.c.b16 %v1073, %v1067
    %v1458 = vpack.c.b16 %v1074, %v1068
    %v1459 = vpack.c.b16 %v1075, %v1069
    %v1460 = vpack.c.b16 %v1076, %v1070
    %v1461 = vpack.c.b16 %v1083, %v1077
    %v1462 = vpack.c.b16 %v1084, %v1078
    %v1463 = vpack.c.b16 %v1085, %v1079
    %v1464 = vpack.c.b16 %v1086, %v1080
    %v1465 = vpack.c.b16 %v1087, %v1081
    %v1466 = vpack.c.b16 %v1088, %v1082
    %v1467 = vpack.c.b16 %v1095, %v1089
    %v1468 = vpack.c.b16 %v1096, %v1090
    %v1469 = vpack.c.b16 %v1097, %v1091
    %v1470 = vpack.c.b16 %v1098, %v1092
    %v1471 = vpack.c.b16 %v1099, %v1093
    %v1472 = vpack.c.b16 %v1100, %v1094
    %v1473 = vpack.c.b16 %v1107, %v1101
    %v1474 = vpack.c.b16 %v1108, %v1102
    %v1475 = vpack.c.b16 %v1109, %v1103
    %v1476 = vpack.c.b16 %v1110, %v1104
    %v1477 = vpack.c.b16 %v1111, %v1105
    %v1478 = vpack.c.b16 %v1112, %v1106
    %v1479 = vpack.c.b16 %v1119, %v1113
    %v1480 = vpack.c.b16 %v1120, %v1114
    %v1481 = vpack.c.b16 %v1121, %v1115
    %v1482 = vpack.c.b16 %v1122, %v1116
    %v1483 = vpack.c.b16 %v1123, %v1117
    %v1484 = vpack.c.b16 %v1124, %v1118
    %v1485 = vpack.c.b16 %v1131, %v1125
    %v1486 = vpack.c.b16 %v1132, %v1126
    %v1487 = vpack.c.b16 %v1133, %v1127
    %v1488 = vpack.c.b16 %v1134, %v1128
    %v1489 = vpack.c.b16 %v1135, %v1129
    %v1490 = vpack.c.b16 %v1136, %v1130
    %v1491 = vpack.c.b16 %v1143, %v1137
    %v1492 = vpack.c.b16 %v1144, %v1138
    %v1493 = vpack.c.b16 %v1145, %v1139
    %v1494 = vpack.c.b16 %v1146, %v1140
    %v1495 = vpack.c.b16 %v1147, %v1141
    %v1496 = vpack.c.b16 %v1148, %v1142
    %v1497 = vpack.c.b16 %v1155, %v1149
    %v1498 = vpack.c.b16 %v1156, %v1150
    %v1499 = vpack.c.b16 %v1157, %v1151
    %v1500 = vpack.c.b16 %v1158, %v1152
    %v1501 = vpack.c.b16 %v1159, %v1153
    %v1502 = vpack.c.b16 %v1160, %v1154
    %v1503 = vpack.c.b16 %v1167, %v1161
    %v1504 = vpack.c.b16 %v1168, %v1162
    %v1505 = vpack.c.b16 %v1169, %v1163
    %v1506 = vpack.c.b16 %v1170, %v1164
    %v1507 = vpack.c.b16 %v1171, %v1165
    %v1508 = vpack.c.b16 %v1172, %v1166
    %v1509 = vpack.c.b16 %v1179, %v1173
    %v1510 = vpack.c.b16 %v1180, %v1174
    %v1511 = vpack.c.b16 %v1181, %v1175
    %v1512 = vpack.c.b16 %v1182, %v1176
    %v1513 = vpack.c.b16 %v1183, %v1177
    %v1514 = vpack.c.b16 %v1184, %v1178
    %v1515 = vpack.c.b16 %v1191, %v1185
    %v1516 = vpack.c.b16 %v1192, %v1186
    %v1517 = vpack.c.b16 %v1193, %v1187
    %v1518 = vpack.c.b16 %v1194, %v1188
    %v1519 = vpack.c.b16 %v1195, %v1189
    %v1520 = vpack.c.b16 %v1196, %v1190
    %v1521 = vpack.c.b16 %v1203, %v1197
    %v1522 = vpack.c.b16 %v1204, %v1198
    %v1523 = vpack.c.b16 %v1205, %v1199
    %v1524 = vpack.c.b16 %v1206, %v1200
    %v1525 = vpack.c.b16 %v1207, %v1201
    %v1526 = vpack.c.b16 %v1208, %v1202
    %v1527 = vpack.c.b16 %v1215, %v1209
    %v1528 = vpack.c.b16 %v1216, %v1210
    %v1529 = vpack.c.b16 %v1217, %v1211
    %v1530 = vpack.c.b16 %v1218, %v1212
    %v1531 = vpack.c.b16 %v1219, %v1213
    %v1532 = vpack.c.b16 %v1220, %v1214
    %v1533 = vpack.c.b16 %v1227, %v1221
    %v1534 = vpack.c.b16 %v1228, %v1222
    %v1535 = vpack.c.b16 %v1229, %v1223
    %v1536 = vpack.c.b16 %v1230, %v1224
    %v1537 = vpack.c.b16 %v1231, %v1225
    %v1538 = vpack.c.b16 %v1232, %v1226
    %v1539 = vpack.c.b16 %v1239, %v1233
    %v1540 = vpack.c.b16 %v1240, %v1234
    %v1541 = vpack.c.b16 %v1241, %v1235
    %v1542 = vpack.c.b16 %v1242, %v1236
    %v1543 = vpack.c.b16 %v1243, %v1237
    %v1544 = vpack.c.b16 %v1244, %v1238
    %v1545 = vpack.c.b16 %v1251, %v1245
    %v1546 = vpack.c.b16 %v1252, %v1246
    %v1547 = vpack.c.b16 %v1253, %v1247
    %v1548 = vpack.c.b16 %v1254, %v1248
    %v1549 = vpack.c.b16 %v1255, %v1249
    %v1550 = vpack.c.b16 %v1256, %v1250
    %v1551 = vpack.c.b16 %v1263, %v1257
    %v1552 = vpack.c.b16 %v1264, %v1258
    %v1553 = vpack.c.b16 %v1265, %v1259
    %v1554 = vpack.c.b16 %v1266, %v1260
    %v1555 = vpack.c.b16 %v1267, %v1261
    %v1556 = vpack.c.b16 %v1268, %v1262
    %1845 = vmatprep.subr.bf16.mxu0 %v1270
    %1846 = vmatpush1.bf16.msra.mxu0 %v1269
    %1847 = vmatprep.subr.bf16.mxu0 %v1276
    %1848 = vmatpush1.bf16.msra.mxu0 %v1275
    %1849 = vmatprep.subr.bf16.mxu0 %v1282
    %1850 = vmatpush1.bf16.msra.mxu0 %v1281
    %1851 = vmatprep.subr.bf16.mxu0 %v1288
    %1852 = vmatpush1.bf16.msra.mxu0 %v1287
    %1853 = vmatprep.subr.bf16.mxu0 %v1294
    %1854 = vmatpush1.bf16.msra.mxu0 %v1293
    %1855 = vmatprep.subr.bf16.mxu0 %v1300
    %1856 = vmatpush1.bf16.msra.mxu0 %v1299
    %1857 = vmatprep.subr.bf16.mxu0 %v1306
    %1858 = vmatpush1.bf16.msra.mxu0 %v1305
    %1859 = vmatprep.subr.bf16.mxu0 %v1312
    %1860 = vmatpush1.bf16.msra.mxu0 %v1311
    %1861 = vmatprep.subr.bf16.mxu0 %v1318
    %1862 = vmatpush1.bf16.msra.mxu0 %v1317
    %1863 = vmatprep.subr.bf16.mxu0 %v1324
    %1864 = vmatpush1.bf16.msra.mxu0 %v1323
    %1865 = vmatprep.subr.bf16.mxu0 %v1330
    %1866 = vmatpush1.bf16.msra.mxu0 %v1329
    %1867 = vmatprep.subr.bf16.mxu0 %v1336
    %1868 = vmatpush1.bf16.msra.mxu0 %v1335
    %1869 = vmatprep.subr.bf16.mxu0 %v1342
    %1870 = vmatpush1.bf16.msra.mxu0 %v1341
    %1871 = vmatprep.subr.bf16.mxu0 %v1348
    %1872 = vmatpush1.bf16.msra.mxu0 %v1347
    %1873 = vmatprep.subr.bf16.mxu0 %v1354
    %1874 = vmatpush1.bf16.msra.mxu0 %v1353
    %1875 = vmatprep.subr.bf16.mxu0 %v1360
    %1876 = vmatpush1.bf16.msra.mxu0 %v1359
    %1877 = vmatprep.mubr.bf16.mxu0 %v80
    %1878 = vmatmul.mubr.bf16.gmra.mrb[0].mxu0 %v79
    %v1879 = vpop.f32.mrb[0].mxu0
    %v1880 = vadd.f32 %v378, %v1879
    %v1881 = vpop.f32.mrb[0].mxu0
    %v1882 = vadd.f32 %v382, %v1881
    %v1883 = vpop.f32.mrb[0].mxu0
    %v1884 = vpop.f32.mrb[0].mxu0
    %1885 = vdwg.mxu0
    %1886 = vmatprep.subr.bf16.mxu0 %v1366
    %1887 = vmatpush1.bf16.msra.mxu0 %v1365
    %1888 = vmatprep.subr.bf16.mxu0 %v1372
    %1889 = vmatpush1.bf16.msra.mxu0 %v1371
    %1890 = vmatprep.subr.bf16.mxu0 %v1378
    %1891 = vmatpush1.bf16.msra.mxu0 %v1377
    %1892 = vmatprep.subr.bf16.mxu0 %v1384
    %1893 = vmatpush1.bf16.msra.mxu0 %v1383
    %1894 = vmatprep.subr.bf16.mxu0 %v1390
    %1895 = vmatpush1.bf16.msra.mxu0 %v1389
    %1896 = vmatprep.subr.bf16.mxu0 %v1396
    %1897 = vmatpush1.bf16.msra.mxu0 %v1395
    %1898 = vmatprep.subr.bf16.mxu0 %v1402
    %1899 = vmatpush1.bf16.msra.mxu0 %v1401
    %1900 = vmatprep.subr.bf16.mxu0 %v1408
    %1901 = vmatpush1.bf16.msra.mxu0 %v1407
    %1902 = vmatprep.subr.bf16.mxu0 %v1414
    %1903 = vmatpush1.bf16.msra.mxu0 %v1413
    %1904 = vmatprep.subr.bf16.mxu0 %v1420
    %1905 = vmatpush1.bf16.msra.mxu0 %v1419
    %1906 = vmatprep.subr.bf16.mxu0 %v1426
    %1907 = vmatpush1.bf16.msra.mxu0 %v1425
    %1908 = vmatprep.subr.bf16.mxu0 %v1432
    %1909 = vmatpush1.bf16.msra.mxu0 %v1431
    %1910 = vmatprep.subr.bf16.mxu0 %v1438
    %1911 = vmatpush1.bf16.msra.mxu0 %v1437
    %1912 = vmatprep.subr.bf16.mxu0 %v1444
    %1913 = vmatpush1.bf16.msra.mxu0 %v1443
    %1914 = vmatprep.subr.bf16.mxu0 %v1450
    %1915 = vmatpush1.bf16.msra.mxu0 %v1449
    %1916 = vmatprep.subr.bf16.mxu0 %v1456
    %1917 = vmatpush1.bf16.msra.mxu0 %v1455
    %1918 = vmatprep.mubr.bf16.mxu0 %v82
    %1919 = vmatmul.mubr.bf16.gmra.mrb[0].mxu0 %v81
    %v1920 = vpop.f32.mrb[0].mxu0
    %v1921 = vadd.f32 %v1880, %v1920
    %v1922 = vpop.f32.mrb[0].mxu0
    %v1923 = vadd.f32 %v1882, %v1922
    %v1924 = vpop.f32.mrb[0].mxu0
    %v1925 = vpop.f32.mrb[0].mxu0
    %1926 = vdwg.mxu0
    %1927 = vmatprep.subr.bf16.mxu0 %v1462
    %1928 = vmatpush1.bf16.msra.mxu0 %v1461
    %1929 = vmatprep.subr.bf16.mxu0 %v1468
    %1930 = vmatpush1.bf16.msra.mxu0 %v1467
    %1931 = vmatprep.subr.bf16.mxu0 %v1474
    %1932 = vmatpush1.bf16.msra.mxu0 %v1473
    %1933 = vmatprep.subr.bf16.mxu0 %v1480
    %1934 = vmatpush1.bf16.msra.mxu0 %v1479
    %1935 = vmatprep.subr.bf16.mxu0 %v1486
    %1936 = vmatpush1.bf16.msra.mxu0 %v1485
    %1937 = vmatprep.subr.bf16.mxu0 %v1492
    %1938 = vmatpush1.bf16.msra.mxu0 %v1491
    %1939 = vmatprep.subr.bf16.mxu0 %v1498
    %1940 = vmatpush1.bf16.msra.mxu0 %v1497
    %1941 = vmatprep.subr.bf16.mxu0 %v1504
    %1942 = vmatpush1.bf16.msra.mxu0 %v1503
    %1943 = vmatprep.subr.bf16.mxu0 %v1510
    %1944 = vmatpush1.bf16.msra.mxu0 %v1509
    %1945 = vmatprep.subr.bf16.mxu0 %v1516
    %1946 = vmatpush1.bf16.msra.mxu0 %v1515
    %1947 = vmatprep.subr.bf16.mxu0 %v1522
    %1948 = vmatpush1.bf16.msra.mxu0 %v1521
    %1949 = vmatprep.subr.bf16.mxu0 %v1528
    %1950 = vmatpush1.bf16.msra.mxu0 %v1527
    %1951 = vmatprep.subr.bf16.mxu0 %v1534
    %1952 = vmatpush1.bf16.msra.mxu0 %v1533
    %1953 = vmatprep.subr.bf16.mxu0 %v1540
    %1954 = vmatpush1.bf16.msra.mxu0 %v1539
    %1955 = vmatprep.subr.bf16.mxu0 %v1546
    %1956 = vmatpush1.bf16.msra.mxu0 %v1545
    %1957 = vmatprep.subr.bf16.mxu0 %v1552
    %1958 = vmatpush1.bf16.msra.mxu0 %v1551
    %1959 = vmatprep.mubr.bf16.mxu0 %v84
    %1960 = vmatmul.mubr.bf16.gmra.mrb[0].mxu0 %v83
    %v1961 = vpop.f32.mrb[0].mxu0
    %v1962 = vadd.f32 %v1921, %v1961
    %v1963 = vpop.f32.mrb[0].mxu0
    %v1964 = vadd.f32 %v1923, %v1963
    %v1965 = vpop.f32.mrb[0].mxu0
    %v1966 = vpop.f32.mrb[0].mxu0
    %1967 = vdwg.mxu0
    %1968 = vmatprep.subr.bf16.mxu0 %v1272
    %1969 = vmatpush1.bf16.msra.mxu0 %v1271
    %1970 = vmatprep.subr.bf16.mxu0 %v1278
    %1971 = vmatpush1.bf16.msra.mxu0 %v1277
    %1972 = vmatprep.subr.bf16.mxu0 %v1284
    %1973 = vmatpush1.bf16.msra.mxu0 %v1283
    %1974 = vmatprep.subr.bf16.mxu0 %v1290
    %1975 = vmatpush1.bf16.msra.mxu0 %v1289
    %1976 = vmatprep.subr.bf16.mxu0 %v1296
    %1977 = vmatpush1.bf16.msra.mxu0 %v1295
    %1978 = vmatprep.subr.bf16.mxu0 %v1302
    %1979 = vmatpush1.bf16.msra.mxu0 %v1301
    %1980 = vmatprep.subr.bf16.mxu0 %v1308
    %1981 = vmatpush1.bf16.msra.mxu0 %v1307
    %1982 = vmatprep.subr.bf16.mxu0 %v1314
    %1983 = vmatpush1.bf16.msra.mxu0 %v1313
    %1984 = vmatprep.subr.bf16.mxu0 %v1320
    %1985 = vmatpush1.bf16.msra.mxu0 %v1319
    %1986 = vmatprep.subr.bf16.mxu0 %v1326
    %1987 = vmatpush1.bf16.msra.mxu0 %v1325
    %1988 = vmatprep.subr.bf16.mxu0 %v1332
    %1989 = vmatpush1.bf16.msra.mxu0 %v1331
    %1990 = vmatprep.subr.bf16.mxu0 %v1338
    %1991 = vmatpush1.bf16.msra.mxu0 %v1337
    %1992 = vmatprep.subr.bf16.mxu0 %v1344
    %1993 = vmatpush1.bf16.msra.mxu0 %v1343
    %1994 = vmatprep.subr.bf16.mxu0 %v1350
    %1995 = vmatpush1.bf16.msra.mxu0 %v1349
    %1996 = vmatprep.subr.bf16.mxu0 %v1356
    %1997 = vmatpush1.bf16.msra.mxu0 %v1355
    %1998 = vmatprep.subr.bf16.mxu0 %v1362
    %1999 = vmatpush1.bf16.msra.mxu0 %v1361
    %2000 = vmatprep.mubr.bf16.mxu0 %v80
    %2001 = vmatmul.mubr.bf16.gmra.mrb[0].mxu0 %v79
    %v2002 = vpop.f32.mrb[0].mxu0
    %v2003 = vadd.f32 %v386, %v2002
    %v2004 = vpop.f32.mrb[0].mxu0
    %v2005 = vadd.f32 %v390, %v2004
    %v2006 = vpop.f32.mrb[0].mxu0
    %v2007 = vpop.f32.mrb[0].mxu0
    %2008 = vdwg.mxu0
    %2009 = vmatprep.subr.bf16.mxu0 %v1368
    %2010 = vmatpush1.bf16.msra.mxu0 %v1367
    %2011 = vmatprep.subr.bf16.mxu0 %v1374
    %2012 = vmatpush1.bf16.msra.mxu0 %v1373
    %2013 = vmatprep.subr.bf16.mxu0 %v1380
    %2014 = vmatpush1.bf16.msra.mxu0 %v1379
    %2015 = vmatprep.subr.bf16.mxu0 %v1386
    %2016 = vmatpush1.bf16.msra.mxu0 %v1385
    %2017 = vmatprep.subr.bf16.mxu0 %v1392
    %2018 = vmatpush1.bf16.msra.mxu0 %v1391
    %2019 = vmatprep.subr.bf16.mxu0 %v1398
    %2020 = vmatpush1.bf16.msra.mxu0 %v1397
    %2021 = vmatprep.subr.bf16.mxu0 %v1404
    %2022 = vmatpush1.bf16.msra.mxu0 %v1403
    %2023 = vmatprep.subr.bf16.mxu0 %v1410
    %2024 = vmatpush1.bf16.msra.mxu0 %v1409
    %2025 = vmatprep.subr.bf16.mxu0 %v1416
    %2026 = vmatpush1.bf16.msra.mxu0 %v1415
    %2027 = vmatprep.subr.bf16.mxu0 %v1422
    %2028 = vmatpush1.bf16.msra.mxu0 %v1421
    %2029 = vmatprep.subr.bf16.mxu0 %v1428
    %2030 = vmatpush1.bf16.msra.mxu0 %v1427
    %2031 = vmatprep.subr.bf16.mxu0 %v1434
    %2032 = vmatpush1.bf16.msra.mxu0 %v1433
    %2033 = vmatprep.subr.bf16.mxu0 %v1440
    %2034 = vmatpush1.bf16.msra.mxu0 %v1439
    %2035 = vmatprep.subr.bf16.mxu0 %v1446
    %2036 = vmatpush1.bf16.msra.mxu0 %v1445
    %2037 = vmatprep.subr.bf16.mxu0 %v1452
    %2038 = vmatpush1.bf16.msra.mxu0 %v1451
    %2039 = vmatprep.subr.bf16.mxu0 %v1458
    %2040 = vmatpush1.bf16.msra.mxu0 %v1457
    %2041 = vmatprep.mubr.bf16.mxu0 %v82
    %2042 = vmatmul.mubr.bf16.gmra.mrb[0].mxu0 %v81
    %v2043 = vpop.f32.mrb[0].mxu0
    %v2044 = vadd.f32 %v2003, %v2043
    %v2045 = vpop.f32.mrb[0].mxu0
    %v2046 = vadd.f32 %v2005, %v2045
    %v2047 = vpop.f32.mrb[0].mxu0
    %v2048 = vpop.f32.mrb[0].mxu0
    %2049 = vdwg.mxu0
    %2050 = vmatprep.subr.bf16.mxu0 %v1464
    %2051 = vmatpush1.bf16.msra.mxu0 %v1463
    %2052 = vmatprep.subr.bf16.mxu0 %v1470
    %2053 = vmatpush1.bf16.msra.mxu0 %v1469
    %2054 = vmatprep.subr.bf16.mxu0 %v1476
    %2055 = vmatpush1.bf16.msra.mxu0 %v1475
    %2056 = vmatprep.subr.bf16.mxu0 %v1482
    %2057 = vmatpush1.bf16.msra.mxu0 %v1481
    %2058 = vmatprep.subr.bf16.mxu0 %v1488
    %2059 = vmatpush1.bf16.msra.mxu0 %v1487
    %2060 = vmatprep.subr.bf16.mxu0 %v1494
    %2061 = vmatpush1.bf16.msra.mxu0 %v1493
    %2062 = vmatprep.subr.bf16.mxu0 %v1500
    %2063 = vmatpush1.bf16.msra.mxu0 %v1499
    %2064 = vmatprep.subr.bf16.mxu0 %v1506
    %2065 = vmatpush1.bf16.msra.mxu0 %v1505
    %2066 = vmatprep.subr.bf16.mxu0 %v1512
    %2067 = vmatpush1.bf16.msra.mxu0 %v1511
    %2068 = vmatprep.subr.bf16.mxu0 %v1518
    %2069 = vmatpush1.bf16.msra.mxu0 %v1517
    %2070 = vmatprep.subr.bf16.mxu0 %v1524
    %2071 = vmatpush1.bf16.msra.mxu0 %v1523
    %2072 = vmatprep.subr.bf16.mxu0 %v1530
    %2073 = vmatpush1.bf16.msra.mxu0 %v1529
    %2074 = vmatprep.subr.bf16.mxu0 %v1536
    %2075 = vmatpush1.bf16.msra.mxu0 %v1535
    %2076 = vmatprep.subr.bf16.mxu0 %v1542
    %2077 = vmatpush1.bf16.msra.mxu0 %v1541
    %2078 = vmatprep.subr.bf16.mxu0 %v1548
    %2079 = vmatpush1.bf16.msra.mxu0 %v1547
    %2080 = vmatprep.subr.bf16.mxu0 %v1554
    %2081 = vmatpush1.bf16.msra.mxu0 %v1553
    %2082 = vmatprep.mubr.bf16.mxu0 %v84
    %2083 = vmatmul.mubr.bf16.gmra.mrb[0].mxu0 %v83
    %v2084 = vpop.f32.mrb[0].mxu0
    %v2085 = vadd.f32 %v2044, %v2084
    %v2086 = vpop.f32.mrb[0].mxu0
    %v2087 = vadd.f32 %v2046, %v2086
    %v2088 = vpop.f32.mrb[0].mxu0
    %v2089 = vpop.f32.mrb[0].mxu0
    %2090 = vdwg.mxu0
    %2091 = vmatprep.subr.bf16.mxu0 %v1274
    %2092 = vmatpush1.bf16.msra.mxu0 %v1273
    %2093 = vmatprep.subr.bf16.mxu0 %v1280
    %2094 = vmatpush1.bf16.msra.mxu0 %v1279
    %2095 = vmatprep.subr.bf16.mxu0 %v1286
    %2096 = vmatpush1.bf16.msra.mxu0 %v1285
    %2097 = vmatprep.subr.bf16.mxu0 %v1292
    %2098 = vmatpush1.bf16.msra.mxu0 %v1291
    %2099 = vmatprep.subr.bf16.mxu0 %v1298
    %2100 = vmatpush1.bf16.msra.mxu0 %v1297
    %2101 = vmatprep.subr.bf16.mxu0 %v1304
    %2102 = vmatpush1.bf16.msra.mxu0 %v1303
    %2103 = vmatprep.subr.bf16.mxu0 %v1310
    %2104 = vmatpush1.bf16.msra.mxu0 %v1309
    %2105 = vmatprep.subr.bf16.mxu0 %v1316
    %2106 = vmatpush1.bf16.msra.mxu0 %v1315
    %2107 = vmatprep.subr.bf16.mxu0 %v1322
    %2108 = vmatpush1.bf16.msra.mxu0 %v1321
    %2109 = vmatprep.subr.bf16.mxu0 %v1328
    %2110 = vmatpush1.bf16.msra.mxu0 %v1327
    %2111 = vmatprep.subr.bf16.mxu0 %v1334
    %2112 = vmatpush1.bf16.msra.mxu0 %v1333
    %2113 = vmatprep.subr.bf16.mxu0 %v1340
    %2114 = vmatpush1.bf16.msra.mxu0 %v1339
    %2115 = vmatprep.subr.bf16.mxu0 %v1346
    %2116 = vmatpush1.bf16.msra.mxu0 %v1345
    %2117 = vmatprep.subr.bf16.mxu0 %v1352
    %2118 = vmatpush1.bf16.msra.mxu0 %v1351
    %2119 = vmatprep.subr.bf16.mxu0 %v1358
    %2120 = vmatpush1.bf16.msra.mxu0 %v1357
    %2121 = vmatprep.subr.bf16.mxu0 %v1364
    %2122 = vmatpush1.bf16.msra.mxu0 %v1363
    %2123 = vmatprep.mubr.bf16.mxu0 %v80
    %2124 = vmatmul.mubr.bf16.gmra.mrb[0].mxu0 %v79
    %v2125 = vpop.f32.mrb[0].mxu0
    %v2126 = vadd.f32 %v394, %v2125
    %v2127 = vpop.f32.mrb[0].mxu0
    %v2128 = vadd.f32 %v398, %v2127
    %v2129 = vpop.f32.mrb[0].mxu0
    %v2130 = vpop.f32.mrb[0].mxu0
    %2131 = vdwg.mxu0
    %2132 = vmatprep.subr.bf16.mxu0 %v1370
    %2133 = vmatpush1.bf16.msra.mxu0 %v1369
    %2134 = vmatprep.subr.bf16.mxu0 %v1376
    %2135 = vmatpush1.bf16.msra.mxu0 %v1375
    %2136 = vmatprep.subr.bf16.mxu0 %v1382
    %2137 = vmatpush1.bf16.msra.mxu0 %v1381
    %2138 = vmatprep.subr.bf16.mxu0 %v1388
    %2139 = vmatpush1.bf16.msra.mxu0 %v1387
    %2140 = vmatprep.subr.bf16.mxu0 %v1394
    %2141 = vmatpush1.bf16.msra.mxu0 %v1393
    %2142 = vmatprep.subr.bf16.mxu0 %v1400
    %2143 = vmatpush1.bf16.msra.mxu0 %v1399
    %2144 = vmatprep.subr.bf16.mxu0 %v1406
    %2145 = vmatpush1.bf16.msra.mxu0 %v1405
    %2146 = vmatprep.subr.bf16.mxu0 %v1412
    %2147 = vmatpush1.bf16.msra.mxu0 %v1411
    %2148 = vmatprep.subr.bf16.mxu0 %v1418
    %2149 = vmatpush1.bf16.msra.mxu0 %v1417
    %2150 = vmatprep.subr.bf16.mxu0 %v1424
    %2151 = vmatpush1.bf16.msra.mxu0 %v1423
    %2152 = vmatprep.subr.bf16.mxu0 %v1430
    %2153 = vmatpush1.bf16.msra.mxu0 %v1429
    %2154 = vmatprep.subr.bf16.mxu0 %v1436
    %2155 = vmatpush1.bf16.msra.mxu0 %v1435
    %2156 = vmatprep.subr.bf16.mxu0 %v1442
    %2157 = vmatpush1.bf16.msra.mxu0 %v1441
    %2158 = vmatprep.subr.bf16.mxu0 %v1448
    %2159 = vmatpush1.bf16.msra.mxu0 %v1447
    %2160 = vmatprep.subr.bf16.mxu0 %v1454
    %2161 = vmatpush1.bf16.msra.mxu0 %v1453
    %2162 = vmatprep.subr.bf16.mxu0 %v1460
    %2163 = vmatpush1.bf16.msra.mxu0 %v1459
    %2164 = vmatprep.mubr.bf16.mxu0 %v82
    %2165 = vmatmul.mubr.bf16.gmra.mrb[0].mxu0 %v81
    %v2166 = vpop.f32.mrb[0].mxu0
    %v2167 = vadd.f32 %v2126, %v2166
    %v2168 = vpop.f32.mrb[0].mxu0
    %v2169 = vadd.f32 %v2128, %v2168
    %v2170 = vpop.f32.mrb[0].mxu0
    %v2171 = vpop.f32.mrb[0].mxu0
    %2172 = vdwg.mxu0
    %2173 = vmatprep.subr.bf16.mxu0 %v1466
    %2174 = vmatpush1.bf16.msra.mxu0 %v1465
    %2175 = vmatprep.subr.bf16.mxu0 %v1472
    %2176 = vmatpush1.bf16.msra.mxu0 %v1471
    %2177 = vmatprep.subr.bf16.mxu0 %v1478
    %2178 = vmatpush1.bf16.msra.mxu0 %v1477
    %2179 = vmatprep.subr.bf16.mxu0 %v1484
    %2180 = vmatpush1.bf16.msra.mxu0 %v1483
    %2181 = vmatprep.subr.bf16.mxu0 %v1490
    %2182 = vmatpush1.bf16.msra.mxu0 %v1489
    %2183 = vmatprep.subr.bf16.mxu0 %v1496
    %2184 = vmatpush1.bf16.msra.mxu0 %v1495
    %2185 = vmatprep.subr.bf16.mxu0 %v1502
    %2186 = vmatpush1.bf16.msra.mxu0 %v1501
    %2187 = vmatprep.subr.bf16.mxu0 %v1508
    %2188 = vmatpush1.bf16.msra.mxu0 %v1507
    %2189 = vmatprep.subr.bf16.mxu0 %v1514
    %2190 = vmatpush1.bf16.msra.mxu0 %v1513
    %2191 = vmatprep.subr.bf16.mxu0 %v1520
    %2192 = vmatpush1.bf16.msra.mxu0 %v1519
    %2193 = vmatprep.subr.bf16.mxu0 %v1526
    %2194 = vmatpush1.bf16.msra.mxu0 %v1525
    %2195 = vmatprep.subr.bf16.mxu0 %v1532
    %2196 = vmatpush1.bf16.msra.mxu0 %v1531
    %2197 = vmatprep.subr.bf16.mxu0 %v1538
    %2198 = vmatpush1.bf16.msra.mxu0 %v1537
    %2199 = vmatprep.subr.bf16.mxu0 %v1544
    %2200 = vmatpush1.bf16.msra.mxu0 %v1543
    %2201 = vmatprep.subr.bf16.mxu0 %v1550
    %2202 = vmatpush1.bf16.msra.mxu0 %v1549
    %2203 = vmatprep.subr.bf16.mxu0 %v1556
    %2204 = vmatpush1.bf16.msra.mxu0 %v1555
    %2205 = vmatprep.mubr.bf16.mxu0 %v84
    %2206 = vmatmul.mubr.bf16.gmra.mrb[0].mxu0 %v83
    %v2207 = vpop.f32.mrb[0].mxu0
    %v2208 = vadd.f32 %v2167, %v2207
    %v2209 = vpop.f32.mrb[0].mxu0
    %v2210 = vadd.f32 %v2169, %v2209
    %v2211 = vpop.f32.mrb[0].mxu0
    %v2212 = vpop.f32.mrb[0].mxu0
    %2213 = vdwg.mxu0
    %v2214 = vmax.f32 %v1962, 0.0
    %v2215 = vmax.f32 %v1964, 0.0
    %v2216 = vmax.f32 %v2085, 0.0
    %v2217 = vmax.f32 %v2087, 0.0
    %v2218 = vmax.f32 %v2208, 0.0
    %v2219 = vmax.f32 %v2210, 0.0
    %s2220 = smul.u32 %s60, 8
    %v2221 = vlaneseq
    %v2222 = vshrl.u32 %v2221, 7
    %v2223 = vstv %s2220
    %v2224 = vadd.s32 %v2223, %v2222
    %vm2225 = vcmp.lt.s32.totalorder %v2224, 8
    %v2226 = vsel %vm2225, 1, 0
    %vm2227 = vcmp.eq.s32.totalorder %v2226, 1
    %v2228 = vsel %vm2227, %v2214, 0.0
    %v2229 = vsel %vm2227, %v2215, 0.0
    %v2230 = vsel %vm2227, %v2216, 0.0
    %v2231 = vsel %vm2227, %v2217, 0.0
    %v2232 = vsel %vm2227, %v2218, 0.0
    %v2233 = vsel %vm2227, %v2219, 0.0
    %v2234 = vpack.c.bf16 %v2228, %v2228
    %v2235 = vpack.c.bf16 %v2229, %v2229
    %v2236 = vpack.c.bf16 %v2230, %v2230
    %v2237 = vpack.c.bf16 %v2231, %v2231
    %v2238 = vpack.c.bf16 %v2232, %v2232
    %v2239 = vpack.c.bf16 %v2233, %v2233
    %v2240 = vld [vmem:[%s3] sm:$0xff]
    %v2241 = vld [vmem:[%s3 + $0x8] sm:$0xff]
    %v2242 = vld [vmem:[%s3 + $0x10] sm:$0xff]
    %v2243 = vld [vmem:[%s3 + $0x18] sm:$0xff]
    %v2244 = vld [vmem:[%s3 + $0x20] sm:$0xff]
    %v2245 = vld [vmem:[%s3 + $0x28] sm:$0xff]
    %v2246 = vld [vmem:[%s3 + $0x30] sm:$0xff]
    %v2247 = vld [vmem:[%s3 + $0x38] sm:$0xff]
    %v2248 = vld [vmem:[%s3 + $0x40] sm:$0xff]
    %v2249 = vld [vmem:[%s3 + $0x48] sm:$0xff]
    %v2250 = vld [vmem:[%s3 + $0x50] sm:$0xff]
    %v2251 = vld [vmem:[%s3 + $0x58] sm:$0xff]
    %v2252 = vld [vmem:[%s3 + $0x60] sm:$0xff]
    %v2253 = vld [vmem:[%s3 + $0x68] sm:$0xff]
    %v2254 = vld [vmem:[%s3 + $0x70] sm:$0xff]
    %v2255 = vld [vmem:[%s3 + $0x78] sm:$0xff]
    %v2256 = vld [vmem:[%s3 + $0x80] sm:$0xff]
    %v2257 = vld [vmem:[%s3 + $0x88] sm:$0xff]
    %v2258 = vld [vmem:[%s3 + $0x90] sm:$0xff]
    %v2259 = vld [vmem:[%s3 + $0x98] sm:$0xff]
    %v2260 = vld [vmem:[%s3 + $0xa0] sm:$0xff]
    %v2261 = vld [vmem:[%s3 + $0xa8] sm:$0xff]
    %v2262 = vld [vmem:[%s3 + $0xb0] sm:$0xff]
    %v2263 = vld [vmem:[%s3 + $0xb8] sm:$0xff]
    %v2264 = vld [vmem:[%s3 + $0xc0] sm:$0xff]
    %v2265 = vld [vmem:[%s3 + $0xc8] sm:$0xff]
    %v2266 = vld [vmem:[%s3 + $0xd0] sm:$0xff]
    %v2267 = vld [vmem:[%s3 + $0xd8] sm:$0xff]
    %v2268 = vld [vmem:[%s3 + $0xe0] sm:$0xff]
    %v2269 = vld [vmem:[%s3 + $0xe8] sm:$0xff]
    %v2270 = vld [vmem:[%s3 + $0xf0] sm:$0xff]
    %v2271 = vld [vmem:[%s3 + $0xf8] sm:$0xff]
    %v2272 = vld [vmem:[%s3 + $0x100] sm:$0xff]
    %v2273 = vld [vmem:[%s3 + $0x108] sm:$0xff]
    %v2274 = vld [vmem:[%s3 + $0x110] sm:$0xff]
    %v2275 = vld [vmem:[%s3 + $0x118] sm:$0xff]
    %v2276 = vld [vmem:[%s3 + $0x120] sm:$0xff]
    %v2277 = vld [vmem:[%s3 + $0x128] sm:$0xff]
    %v2278 = vld [vmem:[%s3 + $0x130] sm:$0xff]
    %v2279 = vld [vmem:[%s3 + $0x138] sm:$0xff]
    %v2280 = vld [vmem:[%s3 + $0x140] sm:$0xff]
    %v2281 = vld [vmem:[%s3 + $0x148] sm:$0xff]
    %v2282 = vld [vmem:[%s3 + $0x150] sm:$0xff]
    %v2283 = vld [vmem:[%s3 + $0x158] sm:$0xff]
    %v2284 = vld [vmem:[%s3 + $0x160] sm:$0xff]
    %v2285 = vld [vmem:[%s3 + $0x168] sm:$0xff]
    %v2286 = vld [vmem:[%s3 + $0x170] sm:$0xff]
    %v2287 = vld [vmem:[%s3 + $0x178] sm:$0xff]
    %v2288 = vld [vmem:[%s3 + $0x180] sm:$0xff]
    %v2289 = vld [vmem:[%s3 + $0x188] sm:$0xff]
    %v2290 = vld [vmem:[%s3 + $0x190] sm:$0xff]
    %v2291 = vld [vmem:[%s3 + $0x198] sm:$0xff]
    %v2292 = vld [vmem:[%s3 + $0x1a0] sm:$0xff]
    %v2293 = vld [vmem:[%s3 + $0x1a8] sm:$0xff]
    %v2294 = vld [vmem:[%s3 + $0x1b0] sm:$0xff]
    %v2295 = vld [vmem:[%s3 + $0x1b8] sm:$0xff]
    %v2296 = vld [vmem:[%s3 + $0x1c0] sm:$0xff]
    %v2297 = vld [vmem:[%s3 + $0x1c8] sm:$0xff]
    %v2298 = vld [vmem:[%s3 + $0x1d0] sm:$0xff]
    %v2299 = vld [vmem:[%s3 + $0x1d8] sm:$0xff]
    %v2300 = vld [vmem:[%s3 + $0x1e0] sm:$0xff]
    %v2301 = vld [vmem:[%s3 + $0x1e8] sm:$0xff]
    %v2302 = vld [vmem:[%s3 + $0x1f0] sm:$0xff]
    %v2303 = vld [vmem:[%s3 + $0x1f8] sm:$0xff]
    %v2304 = vld [vmem:[%s3 + $0x200] sm:$0xff]
    %v2305 = vld [vmem:[%s3 + $0x208] sm:$0xff]
    %v2306 = vld [vmem:[%s3 + $0x210] sm:$0xff]
    %v2307 = vld [vmem:[%s3 + $0x218] sm:$0xff]
    %v2308 = vld [vmem:[%s3 + $0x220] sm:$0xff]
    %v2309 = vld [vmem:[%s3 + $0x228] sm:$0xff]
    %v2310 = vld [vmem:[%s3 + $0x230] sm:$0xff]
    %v2311 = vld [vmem:[%s3 + $0x238] sm:$0xff]
    %v2312 = vld [vmem:[%s3 + $0x240] sm:$0xff]
    %v2313 = vld [vmem:[%s3 + $0x248] sm:$0xff]
    %v2314 = vld [vmem:[%s3 + $0x250] sm:$0xff]
    %v2315 = vld [vmem:[%s3 + $0x258] sm:$0xff]
    %v2316 = vld [vmem:[%s3 + $0x260] sm:$0xff]
    %v2317 = vld [vmem:[%s3 + $0x268] sm:$0xff]
    %v2318 = vld [vmem:[%s3 + $0x270] sm:$0xff]
    %v2319 = vld [vmem:[%s3 + $0x278] sm:$0xff]
    %v2320 = vld [vmem:[%s3 + $0x280] sm:$0xff]
    %v2321 = vld [vmem:[%s3 + $0x288] sm:$0xff]
    %v2322 = vld [vmem:[%s3 + $0x290] sm:$0xff]
    %v2323 = vld [vmem:[%s3 + $0x298] sm:$0xff]
    %v2324 = vld [vmem:[%s3 + $0x2a0] sm:$0xff]
    %v2325 = vld [vmem:[%s3 + $0x2a8] sm:$0xff]
    %v2326 = vld [vmem:[%s3 + $0x2b0] sm:$0xff]
    %v2327 = vld [vmem:[%s3 + $0x2b8] sm:$0xff]
    %v2328 = vld [vmem:[%s3 + $0x2c0] sm:$0xff]
    %v2329 = vld [vmem:[%s3 + $0x2c8] sm:$0xff]
    %v2330 = vld [vmem:[%s3 + $0x2d0] sm:$0xff]
    %v2331 = vld [vmem:[%s3 + $0x2d8] sm:$0xff]
    %v2332 = vld [vmem:[%s3 + $0x2e0] sm:$0xff]
    %v2333 = vld [vmem:[%s3 + $0x2e8] sm:$0xff]
    %v2334 = vld [vmem:[%s3 + $0x2f0] sm:$0xff]
    %v2335 = vld [vmem:[%s3 + $0x2f8] sm:$0xff]
    %v2336 = vld [vmem:[%s3 + $0x300] sm:$0xff]
    %v2337 = vld [vmem:[%s3 + $0x308] sm:$0xff]
    %v2338 = vld [vmem:[%s3 + $0x310] sm:$0xff]
    %v2339 = vld [vmem:[%s3 + $0x318] sm:$0xff]
    %v2340 = vld [vmem:[%s3 + $0x320] sm:$0xff]
    %v2341 = vld [vmem:[%s3 + $0x328] sm:$0xff]
    %v2342 = vld [vmem:[%s3 + $0x330] sm:$0xff]
    %v2343 = vld [vmem:[%s3 + $0x338] sm:$0xff]
    %v2344 = vld [vmem:[%s3 + $0x340] sm:$0xff]
    %v2345 = vld [vmem:[%s3 + $0x348] sm:$0xff]
    %v2346 = vld [vmem:[%s3 + $0x350] sm:$0xff]
    %v2347 = vld [vmem:[%s3 + $0x358] sm:$0xff]
    %v2348 = vld [vmem:[%s3 + $0x360] sm:$0xff]
    %v2349 = vld [vmem:[%s3 + $0x368] sm:$0xff]
    %v2350 = vld [vmem:[%s3 + $0x370] sm:$0xff]
    %v2351 = vld [vmem:[%s3 + $0x378] sm:$0xff]
    %v2352 = vld [vmem:[%s3 + $0x380] sm:$0xff]
    %v2353 = vld [vmem:[%s3 + $0x388] sm:$0xff]
    %v2354 = vld [vmem:[%s3 + $0x390] sm:$0xff]
    %v2355 = vld [vmem:[%s3 + $0x398] sm:$0xff]
    %v2356 = vld [vmem:[%s3 + $0x3a0] sm:$0xff]
    %v2357 = vld [vmem:[%s3 + $0x3a8] sm:$0xff]
    %v2358 = vld [vmem:[%s3 + $0x3b0] sm:$0xff]
    %v2359 = vld [vmem:[%s3 + $0x3b8] sm:$0xff]
    %v2360 = vld [vmem:[%s3 + $0x3c0] sm:$0xff]
    %v2361 = vld [vmem:[%s3 + $0x3c8] sm:$0xff]
    %v2362 = vld [vmem:[%s3 + $0x3d0] sm:$0xff]
    %v2363 = vld [vmem:[%s3 + $0x3d8] sm:$0xff]
    %v2364 = vld [vmem:[%s3 + $0x3e0] sm:$0xff]
    %v2365 = vld [vmem:[%s3 + $0x3e8] sm:$0xff]
    %v2366 = vld [vmem:[%s3 + $0x3f0] sm:$0xff]
    %v2367 = vld [vmem:[%s3 + $0x3f8] sm:$0xff]
    %v2368 = vld [vmem:[%s3 + $0x400] sm:$0xff]
    %v2369 = vld [vmem:[%s3 + $0x408] sm:$0xff]
    %v2370 = vld [vmem:[%s3 + $0x410] sm:$0xff]
    %v2371 = vld [vmem:[%s3 + $0x418] sm:$0xff]
    %v2372 = vld [vmem:[%s3 + $0x420] sm:$0xff]
    %v2373 = vld [vmem:[%s3 + $0x428] sm:$0xff]
    %v2374 = vld [vmem:[%s3 + $0x430] sm:$0xff]
    %v2375 = vld [vmem:[%s3 + $0x438] sm:$0xff]
    %v2376 = vld [vmem:[%s3 + $0x440] sm:$0xff]
    %v2377 = vld [vmem:[%s3 + $0x448] sm:$0xff]
    %v2378 = vld [vmem:[%s3 + $0x450] sm:$0xff]
    %v2379 = vld [vmem:[%s3 + $0x458] sm:$0xff]
    %v2380 = vld [vmem:[%s3 + $0x460] sm:$0xff]
    %v2381 = vld [vmem:[%s3 + $0x468] sm:$0xff]
    %v2382 = vld [vmem:[%s3 + $0x470] sm:$0xff]
    %v2383 = vld [vmem:[%s3 + $0x478] sm:$0xff]
    %v2384 = vld [vmem:[%s3 + $0x480] sm:$0xff]
    %v2385 = vld [vmem:[%s3 + $0x488] sm:$0xff]
    %v2386 = vld [vmem:[%s3 + $0x490] sm:$0xff]
    %v2387 = vld [vmem:[%s3 + $0x498] sm:$0xff]
    %v2388 = vld [vmem:[%s3 + $0x4a0] sm:$0xff]
    %v2389 = vld [vmem:[%s3 + $0x4a8] sm:$0xff]
    %v2390 = vld [vmem:[%s3 + $0x4b0] sm:$0xff]
    %v2391 = vld [vmem:[%s3 + $0x4b8] sm:$0xff]
    %v2392 = vld [vmem:[%s3 + $0x4c0] sm:$0xff]
    %v2393 = vld [vmem:[%s3 + $0x4c8] sm:$0xff]
    %v2394 = vld [vmem:[%s3 + $0x4d0] sm:$0xff]
    %v2395 = vld [vmem:[%s3 + $0x4d8] sm:$0xff]
    %v2396 = vld [vmem:[%s3 + $0x4e0] sm:$0xff]
    %v2397 = vld [vmem:[%s3 + $0x4e8] sm:$0xff]
    %v2398 = vld [vmem:[%s3 + $0x4f0] sm:$0xff]
    %v2399 = vld [vmem:[%s3 + $0x4f8] sm:$0xff]
    %v2400 = vld [vmem:[%s3 + $0x500] sm:$0xff]
    %v2401 = vld [vmem:[%s3 + $0x508] sm:$0xff]
    %v2402 = vld [vmem:[%s3 + $0x510] sm:$0xff]
    %v2403 = vld [vmem:[%s3 + $0x518] sm:$0xff]
    %v2404 = vld [vmem:[%s3 + $0x520] sm:$0xff]
    %v2405 = vld [vmem:[%s3 + $0x528] sm:$0xff]
    %v2406 = vld [vmem:[%s3 + $0x530] sm:$0xff]
    %v2407 = vld [vmem:[%s3 + $0x538] sm:$0xff]
    %v2408 = vld [vmem:[%s3 + $0x540] sm:$0xff]
    %v2409 = vld [vmem:[%s3 + $0x548] sm:$0xff]
    %v2410 = vld [vmem:[%s3 + $0x550] sm:$0xff]
    %v2411 = vld [vmem:[%s3 + $0x558] sm:$0xff]
    %v2412 = vld [vmem:[%s3 + $0x560] sm:$0xff]
    %v2413 = vld [vmem:[%s3 + $0x568] sm:$0xff]
    %v2414 = vld [vmem:[%s3 + $0x570] sm:$0xff]
    %v2415 = vld [vmem:[%s3 + $0x578] sm:$0xff]
    %v2416 = vld [vmem:[%s3 + $0x580] sm:$0xff]
    %v2417 = vld [vmem:[%s3 + $0x588] sm:$0xff]
    %v2418 = vld [vmem:[%s3 + $0x590] sm:$0xff]
    %v2419 = vld [vmem:[%s3 + $0x598] sm:$0xff]
    %v2420 = vld [vmem:[%s3 + $0x5a0] sm:$0xff]
    %v2421 = vld [vmem:[%s3 + $0x5a8] sm:$0xff]
    %v2422 = vld [vmem:[%s3 + $0x5b0] sm:$0xff]
    %v2423 = vld [vmem:[%s3 + $0x5b8] sm:$0xff]
    %v2424 = vld [vmem:[%s3 + $0x5c0] sm:$0xff]
    %v2425 = vld [vmem:[%s3 + $0x5c8] sm:$0xff]
    %v2426 = vld [vmem:[%s3 + $0x5d0] sm:$0xff]
    %v2427 = vld [vmem:[%s3 + $0x5d8] sm:$0xff]
    %v2428 = vld [vmem:[%s3 + $0x5e0] sm:$0xff]
    %v2429 = vld [vmem:[%s3 + $0x5e8] sm:$0xff]
    %v2430 = vld [vmem:[%s3 + $0x5f0] sm:$0xff]
    %v2431 = vld [vmem:[%s3 + $0x5f8] sm:$0xff]
    %v2432 = vld [vmem:[%s3 + $0x600] sm:$0xff]
    %v2433 = vld [vmem:[%s3 + $0x608] sm:$0xff]
    %v2434 = vld [vmem:[%s3 + $0x610] sm:$0xff]
    %v2435 = vld [vmem:[%s3 + $0x618] sm:$0xff]
    %v2436 = vld [vmem:[%s3 + $0x620] sm:$0xff]
    %v2437 = vld [vmem:[%s3 + $0x628] sm:$0xff]
    %v2438 = vld [vmem:[%s3 + $0x630] sm:$0xff]
    %v2439 = vld [vmem:[%s3 + $0x638] sm:$0xff]
    %v2440 = vld [vmem:[%s3 + $0x640] sm:$0xff]
    %v2441 = vld [vmem:[%s3 + $0x648] sm:$0xff]
    %v2442 = vld [vmem:[%s3 + $0x650] sm:$0xff]
    %v2443 = vld [vmem:[%s3 + $0x658] sm:$0xff]
    %v2444 = vld [vmem:[%s3 + $0x660] sm:$0xff]
    %v2445 = vld [vmem:[%s3 + $0x668] sm:$0xff]
    %v2446 = vld [vmem:[%s3 + $0x670] sm:$0xff]
    %v2447 = vld [vmem:[%s3 + $0x678] sm:$0xff]
    %v2448 = vld [vmem:[%s3 + $0x680] sm:$0xff]
    %v2449 = vld [vmem:[%s3 + $0x688] sm:$0xff]
    %v2450 = vld [vmem:[%s3 + $0x690] sm:$0xff]
    %v2451 = vld [vmem:[%s3 + $0x698] sm:$0xff]
    %v2452 = vld [vmem:[%s3 + $0x6a0] sm:$0xff]
    %v2453 = vld [vmem:[%s3 + $0x6a8] sm:$0xff]
    %v2454 = vld [vmem:[%s3 + $0x6b0] sm:$0xff]
    %v2455 = vld [vmem:[%s3 + $0x6b8] sm:$0xff]
    %v2456 = vld [vmem:[%s3 + $0x6c0] sm:$0xff]
    %v2457 = vld [vmem:[%s3 + $0x6c8] sm:$0xff]
    %v2458 = vld [vmem:[%s3 + $0x6d0] sm:$0xff]
    %v2459 = vld [vmem:[%s3 + $0x6d8] sm:$0xff]
    %v2460 = vld [vmem:[%s3 + $0x6e0] sm:$0xff]
    %v2461 = vld [vmem:[%s3 + $0x6e8] sm:$0xff]
    %v2462 = vld [vmem:[%s3 + $0x6f0] sm:$0xff]
    %v2463 = vld [vmem:[%s3 + $0x6f8] sm:$0xff]
    %v2464 = vld [vmem:[%s3 + $0x700] sm:$0xff]
    %v2465 = vld [vmem:[%s3 + $0x708] sm:$0xff]
    %v2466 = vld [vmem:[%s3 + $0x710] sm:$0xff]
    %v2467 = vld [vmem:[%s3 + $0x718] sm:$0xff]
    %v2468 = vld [vmem:[%s3 + $0x720] sm:$0xff]
    %v2469 = vld [vmem:[%s3 + $0x728] sm:$0xff]
    %v2470 = vld [vmem:[%s3 + $0x730] sm:$0xff]
    %v2471 = vld [vmem:[%s3 + $0x738] sm:$0xff]
    %v2472 = vld [vmem:[%s3 + $0x740] sm:$0xff]
    %v2473 = vld [vmem:[%s3 + $0x748] sm:$0xff]
    %v2474 = vld [vmem:[%s3 + $0x750] sm:$0xff]
    %v2475 = vld [vmem:[%s3 + $0x758] sm:$0xff]
    %v2476 = vld [vmem:[%s3 + $0x760] sm:$0xff]
    %v2477 = vld [vmem:[%s3 + $0x768] sm:$0xff]
    %v2478 = vld [vmem:[%s3 + $0x770] sm:$0xff]
    %v2479 = vld [vmem:[%s3 + $0x778] sm:$0xff]
    %v2480 = vld [vmem:[%s3 + $0x780] sm:$0xff]
    %v2481 = vld [vmem:[%s3 + $0x788] sm:$0xff]
    %v2482 = vld [vmem:[%s3 + $0x790] sm:$0xff]
    %v2483 = vld [vmem:[%s3 + $0x798] sm:$0xff]
    %v2484 = vld [vmem:[%s3 + $0x7a0] sm:$0xff]
    %v2485 = vld [vmem:[%s3 + $0x7a8] sm:$0xff]
    %v2486 = vld [vmem:[%s3 + $0x7b0] sm:$0xff]
    %v2487 = vld [vmem:[%s3 + $0x7b8] sm:$0xff]
    %v2488 = vld [vmem:[%s3 + $0x7c0] sm:$0xff]
    %v2489 = vld [vmem:[%s3 + $0x7c8] sm:$0xff]
    %v2490 = vld [vmem:[%s3 + $0x7d0] sm:$0xff]
    %v2491 = vld [vmem:[%s3 + $0x7d8] sm:$0xff]
    %v2492 = vld [vmem:[%s3 + $0x7e0] sm:$0xff]
    %v2493 = vld [vmem:[%s3 + $0x7e8] sm:$0xff]
    %v2494 = vld [vmem:[%s3 + $0x7f0] sm:$0xff]
    %v2495 = vld [vmem:[%s3 + $0x7f8] sm:$0xff]
    %v2496 = vld [vmem:[%s3 + $0x800] sm:$0xff]
    %v2497 = vld [vmem:[%s3 + $0x808] sm:$0xff]
    %v2498 = vld [vmem:[%s3 + $0x810] sm:$0xff]
    %v2499 = vld [vmem:[%s3 + $0x818] sm:$0xff]
    %v2500 = vld [vmem:[%s3 + $0x820] sm:$0xff]
    %v2501 = vld [vmem:[%s3 + $0x828] sm:$0xff]
    %v2502 = vld [vmem:[%s3 + $0x830] sm:$0xff]
    %v2503 = vld [vmem:[%s3 + $0x838] sm:$0xff]
    %v2504 = vld [vmem:[%s3 + $0x840] sm:$0xff]
    %v2505 = vld [vmem:[%s3 + $0x848] sm:$0xff]
    %v2506 = vld [vmem:[%s3 + $0x850] sm:$0xff]
    %v2507 = vld [vmem:[%s3 + $0x858] sm:$0xff]
    %v2508 = vld [vmem:[%s3 + $0x860] sm:$0xff]
    %v2509 = vld [vmem:[%s3 + $0x868] sm:$0xff]
    %v2510 = vld [vmem:[%s3 + $0x870] sm:$0xff]
    %v2511 = vld [vmem:[%s3 + $0x878] sm:$0xff]
    %v2512 = vld [vmem:[%s3 + $0x880] sm:$0xff]
    %v2513 = vld [vmem:[%s3 + $0x888] sm:$0xff]
    %v2514 = vld [vmem:[%s3 + $0x890] sm:$0xff]
    %v2515 = vld [vmem:[%s3 + $0x898] sm:$0xff]
    %v2516 = vld [vmem:[%s3 + $0x8a0] sm:$0xff]
    %v2517 = vld [vmem:[%s3 + $0x8a8] sm:$0xff]
    %v2518 = vld [vmem:[%s3 + $0x8b0] sm:$0xff]
    %v2519 = vld [vmem:[%s3 + $0x8b8] sm:$0xff]
    %v2520 = vld [vmem:[%s3 + $0x8c0] sm:$0xff]
    %v2521 = vld [vmem:[%s3 + $0x8c8] sm:$0xff]
    %v2522 = vld [vmem:[%s3 + $0x8d0] sm:$0xff]
    %v2523 = vld [vmem:[%s3 + $0x8d8] sm:$0xff]
    %v2524 = vld [vmem:[%s3 + $0x8e0] sm:$0xff]
    %v2525 = vld [vmem:[%s3 + $0x8e8] sm:$0xff]
    %v2526 = vld [vmem:[%s3 + $0x8f0] sm:$0xff]
    %v2527 = vld [vmem:[%s3 + $0x8f8] sm:$0xff]
    %v2528 = vld [vmem:[%s4] sm:$0x3f]
    %v2530 = vlaneseq
    %v2531 = vshrl.u32 %v2530, 7
    %v2532 = vsub.s32 0, %v2531
    %v2533 = vrot.slane %v2528, %v2532
    %v2534 = vlaneseq
    %v2535 = vshrl.u32 %v2534, 7
    %v2536 = vsub.s32 1, %v2535
    %v2537 = vrot.slane %v2528, %v2536
    %v2538 = vlaneseq
    %v2539 = vshrl.u32 %v2538, 7
    %v2540 = vsub.s32 2, %v2539
    %v2541 = vrot.slane %v2528, %v2540
    %v2542 = vlaneseq
    %v2543 = vshrl.u32 %v2542, 7
    %v2544 = vsub.s32 3, %v2543
    %v2545 = vrot.slane %v2528, %v2544
    %v2546 = vlaneseq
    %v2547 = vshrl.u32 %v2546, 7
    %v2548 = vsub.s32 4, %v2547
    %v2549 = vrot.slane %v2528, %v2548
    %v2550 = vlaneseq
    %v2551 = vshrl.u32 %v2550, 7
    %v2552 = vsub.s32 5, %v2551
    %v2553 = vrot.slane %v2528, %v2552
    %v2848 = vunpack.c.l.b16 %v2240
    %v2849 = vunpack.c.h.b16 %v2240
    %v2850 = vunpack.c.l.b16 %v2241
    %v2851 = vunpack.c.h.b16 %v2241
    %v2852 = vunpack.c.l.b16 %v2242
    %v2853 = vunpack.c.h.b16 %v2242
    %v2854 = vunpack.c.l.b16 %v2243
    %v2855 = vunpack.c.h.b16 %v2243
    %v2856 = vunpack.c.l.b16 %v2244
    %v2857 = vunpack.c.h.b16 %v2244
    %v2858 = vunpack.c.l.b16 %v2245
    %v2859 = vunpack.c.h.b16 %v2245
    %v2860 = vunpack.c.l.b16 %v2246
    %v2861 = vunpack.c.h.b16 %v2246
    %v2862 = vunpack.c.l.b16 %v2247
    %v2863 = vunpack.c.h.b16 %v2247
    %v2864 = vunpack.c.l.b16 %v2248
    %v2865 = vunpack.c.h.b16 %v2248
    %v2866 = vunpack.c.l.b16 %v2249
    %v2867 = vunpack.c.h.b16 %v2249
    %v2868 = vunpack.c.l.b16 %v2250
    %v2869 = vunpack.c.h.b16 %v2250
    %v2870 = vunpack.c.l.b16 %v2251
    %v2871 = vunpack.c.h.b16 %v2251
    %v2872 = vunpack.c.l.b16 %v2252
    %v2873 = vunpack.c.h.b16 %v2252
    %v2874 = vunpack.c.l.b16 %v2253
    %v2875 = vunpack.c.h.b16 %v2253
    %v2876 = vunpack.c.l.b16 %v2254
    %v2877 = vunpack.c.h.b16 %v2254
    %v2878 = vunpack.c.l.b16 %v2255
    %v2879 = vunpack.c.h.b16 %v2255
    %v2880 = vunpack.c.l.b16 %v2256
    %v2881 = vunpack.c.h.b16 %v2256
    %v2882 = vunpack.c.l.b16 %v2257
    %v2883 = vunpack.c.h.b16 %v2257
    %v2884 = vunpack.c.l.b16 %v2258
    %v2885 = vunpack.c.h.b16 %v2258
    %v2886 = vunpack.c.l.b16 %v2259
    %v2887 = vunpack.c.h.b16 %v2259
    %v2888 = vunpack.c.l.b16 %v2260
    %v2889 = vunpack.c.h.b16 %v2260
    %v2890 = vunpack.c.l.b16 %v2261
    %v2891 = vunpack.c.h.b16 %v2261
    %v2892 = vunpack.c.l.b16 %v2262
    %v2893 = vunpack.c.h.b16 %v2262
    %v2894 = vunpack.c.l.b16 %v2263
    %v2895 = vunpack.c.h.b16 %v2263
    %v2896 = vunpack.c.l.b16 %v2264
    %v2897 = vunpack.c.h.b16 %v2264
    %v2898 = vunpack.c.l.b16 %v2265
    %v2899 = vunpack.c.h.b16 %v2265
    %v2900 = vunpack.c.l.b16 %v2266
    %v2901 = vunpack.c.h.b16 %v2266
    %v2902 = vunpack.c.l.b16 %v2267
    %v2903 = vunpack.c.h.b16 %v2267
    %v2904 = vunpack.c.l.b16 %v2268
    %v2905 = vunpack.c.h.b16 %v2268
    %v2906 = vunpack.c.l.b16 %v2269
    %v2907 = vunpack.c.h.b16 %v2269
    %v2908 = vunpack.c.l.b16 %v2270
    %v2909 = vunpack.c.h.b16 %v2270
    %v2910 = vunpack.c.l.b16 %v2271
    %v2911 = vunpack.c.h.b16 %v2271
    %v2912 = vunpack.c.l.b16 %v2272
    %v2913 = vunpack.c.h.b16 %v2272
    %v2914 = vunpack.c.l.b16 %v2273
    %v2915 = vunpack.c.h.b16 %v2273
    %v2916 = vunpack.c.l.b16 %v2274
    %v2917 = vunpack.c.h.b16 %v2274
    %v2918 = vunpack.c.l.b16 %v2275
    %v2919 = vunpack.c.h.b16 %v2275
    %v2920 = vunpack.c.l.b16 %v2276
    %v2921 = vunpack.c.h.b16 %v2276
    %v2922 = vunpack.c.l.b16 %v2277
    %v2923 = vunpack.c.h.b16 %v2277
    %v2924 = vunpack.c.l.b16 %v2278
    %v2925 = vunpack.c.h.b16 %v2278
    %v2926 = vunpack.c.l.b16 %v2279
    %v2927 = vunpack.c.h.b16 %v2279
    %v2928 = vunpack.c.l.b16 %v2280
    %v2929 = vunpack.c.h.b16 %v2280
    %v2930 = vunpack.c.l.b16 %v2281
    %v2931 = vunpack.c.h.b16 %v2281
    %v2932 = vunpack.c.l.b16 %v2282
    %v2933 = vunpack.c.h.b16 %v2282
    %v2934 = vunpack.c.l.b16 %v2283
    %v2935 = vunpack.c.h.b16 %v2283
    %v2936 = vunpack.c.l.b16 %v2284
    %v2937 = vunpack.c.h.b16 %v2284
    %v2938 = vunpack.c.l.b16 %v2285
    %v2939 = vunpack.c.h.b16 %v2285
    %v2940 = vunpack.c.l.b16 %v2286
    %v2941 = vunpack.c.h.b16 %v2286
    %v2942 = vunpack.c.l.b16 %v2287
    %v2943 = vunpack.c.h.b16 %v2287
    %v2944 = vunpack.c.l.b16 %v2288
    %v2945 = vunpack.c.h.b16 %v2288
    %v2946 = vunpack.c.l.b16 %v2289
    %v2947 = vunpack.c.h.b16 %v2289
    %v2948 = vunpack.c.l.b16 %v2290
    %v2949 = vunpack.c.h.b16 %v2290
    %v2950 = vunpack.c.l.b16 %v2291
    %v2951 = vunpack.c.h.b16 %v2291
    %v2952 = vunpack.c.l.b16 %v2292
    %v2953 = vunpack.c.h.b16 %v2292
    %v2954 = vunpack.c.l.b16 %v2293
    %v2955 = vunpack.c.h.b16 %v2293
    %v2956 = vunpack.c.l.b16 %v2294
    %v2957 = vunpack.c.h.b16 %v2294
    %v2958 = vunpack.c.l.b16 %v2295
    %v2959 = vunpack.c.h.b16 %v2295
    %v2960 = vunpack.c.l.b16 %v2296
    %v2961 = vunpack.c.h.b16 %v2296
    %v2962 = vunpack.c.l.b16 %v2297
    %v2963 = vunpack.c.h.b16 %v2297
    %v2964 = vunpack.c.l.b16 %v2298
    %v2965 = vunpack.c.h.b16 %v2298
    %v2966 = vunpack.c.l.b16 %v2299
    %v2967 = vunpack.c.h.b16 %v2299
    %v2968 = vunpack.c.l.b16 %v2300
    %v2969 = vunpack.c.h.b16 %v2300
    %v2970 = vunpack.c.l.b16 %v2301
    %v2971 = vunpack.c.h.b16 %v2301
    %v2972 = vunpack.c.l.b16 %v2302
    %v2973 = vunpack.c.h.b16 %v2302
    %v2974 = vunpack.c.l.b16 %v2303
    %v2975 = vunpack.c.h.b16 %v2303
    %v2976 = vunpack.c.l.b16 %v2304
    %v2977 = vunpack.c.h.b16 %v2304
    %v2978 = vunpack.c.l.b16 %v2305
    %v2979 = vunpack.c.h.b16 %v2305
    %v2980 = vunpack.c.l.b16 %v2306
    %v2981 = vunpack.c.h.b16 %v2306
    %v2982 = vunpack.c.l.b16 %v2307
    %v2983 = vunpack.c.h.b16 %v2307
    %v2984 = vunpack.c.l.b16 %v2308
    %v2985 = vunpack.c.h.b16 %v2308
    %v2986 = vunpack.c.l.b16 %v2309
    %v2987 = vunpack.c.h.b16 %v2309
    %v2988 = vunpack.c.l.b16 %v2310
    %v2989 = vunpack.c.h.b16 %v2310
    %v2990 = vunpack.c.l.b16 %v2311
    %v2991 = vunpack.c.h.b16 %v2311
    %v2992 = vunpack.c.l.b16 %v2312
    %v2993 = vunpack.c.h.b16 %v2312
    %v2994 = vunpack.c.l.b16 %v2313
    %v2995 = vunpack.c.h.b16 %v2313
    %v2996 = vunpack.c.l.b16 %v2314
    %v2997 = vunpack.c.h.b16 %v2314
    %v2998 = vunpack.c.l.b16 %v2315
    %v2999 = vunpack.c.h.b16 %v2315
    %v3000 = vunpack.c.l.b16 %v2316
    %v3001 = vunpack.c.h.b16 %v2316
    %v3002 = vunpack.c.l.b16 %v2317
    %v3003 = vunpack.c.h.b16 %v2317
    %v3004 = vunpack.c.l.b16 %v2318
    %v3005 = vunpack.c.h.b16 %v2318
    %v3006 = vunpack.c.l.b16 %v2319
    %v3007 = vunpack.c.h.b16 %v2319
    %v3008 = vunpack.c.l.b16 %v2320
    %v3009 = vunpack.c.h.b16 %v2320
    %v3010 = vunpack.c.l.b16 %v2321
    %v3011 = vunpack.c.h.b16 %v2321
    %v3012 = vunpack.c.l.b16 %v2322
    %v3013 = vunpack.c.h.b16 %v2322
    %v3014 = vunpack.c.l.b16 %v2323
    %v3015 = vunpack.c.h.b16 %v2323
    %v3016 = vunpack.c.l.b16 %v2324
    %v3017 = vunpack.c.h.b16 %v2324
    %v3018 = vunpack.c.l.b16 %v2325
    %v3019 = vunpack.c.h.b16 %v2325
    %v3020 = vunpack.c.l.b16 %v2326
    %v3021 = vunpack.c.h.b16 %v2326
    %v3022 = vunpack.c.l.b16 %v2327
    %v3023 = vunpack.c.h.b16 %v2327
    %v3024 = vunpack.c.l.b16 %v2328
    %v3025 = vunpack.c.h.b16 %v2328
    %v3026 = vunpack.c.l.b16 %v2329
    %v3027 = vunpack.c.h.b16 %v2329
    %v3028 = vunpack.c.l.b16 %v2330
    %v3029 = vunpack.c.h.b16 %v2330
    %v3030 = vunpack.c.l.b16 %v2331
    %v3031 = vunpack.c.h.b16 %v2331
    %v3032 = vunpack.c.l.b16 %v2332
    %v3033 = vunpack.c.h.b16 %v2332
    %v3034 = vunpack.c.l.b16 %v2333
    %v3035 = vunpack.c.h.b16 %v2333
    %v3036 = vunpack.c.l.b16 %v2334
    %v3037 = vunpack.c.h.b16 %v2334
    %v3038 = vunpack.c.l.b16 %v2335
    %v3039 = vunpack.c.h.b16 %v2335
    %v3040 = vunpack.c.l.b16 %v2336
    %v3041 = vunpack.c.h.b16 %v2336
    %v3042 = vunpack.c.l.b16 %v2337
    %v3043 = vunpack.c.h.b16 %v2337
    %v3044 = vunpack.c.l.b16 %v2338
    %v3045 = vunpack.c.h.b16 %v2338
    %v3046 = vunpack.c.l.b16 %v2339
    %v3047 = vunpack.c.h.b16 %v2339
    %v3048 = vunpack.c.l.b16 %v2340
    %v3049 = vunpack.c.h.b16 %v2340
    %v3050 = vunpack.c.l.b16 %v2341
    %v3051 = vunpack.c.h.b16 %v2341
    %v3052 = vunpack.c.l.b16 %v2342
    %v3053 = vunpack.c.h.b16 %v2342
    %v3054 = vunpack.c.l.b16 %v2343
    %v3055 = vunpack.c.h.b16 %v2343
    %v3056 = vunpack.c.l.b16 %v2344
    %v3057 = vunpack.c.h.b16 %v2344
    %v3058 = vunpack.c.l.b16 %v2345
    %v3059 = vunpack.c.h.b16 %v2345
    %v3060 = vunpack.c.l.b16 %v2346
    %v3061 = vunpack.c.h.b16 %v2346
    %v3062 = vunpack.c.l.b16 %v2347
    %v3063 = vunpack.c.h.b16 %v2347
    %v3064 = vunpack.c.l.b16 %v2348
    %v3065 = vunpack.c.h.b16 %v2348
    %v3066 = vunpack.c.l.b16 %v2349
    %v3067 = vunpack.c.h.b16 %v2349
    %v3068 = vunpack.c.l.b16 %v2350
    %v3069 = vunpack.c.h.b16 %v2350
    %v3070 = vunpack.c.l.b16 %v2351
    %v3071 = vunpack.c.h.b16 %v2351
    %v3072 = vunpack.c.l.b16 %v2352
    %v3073 = vunpack.c.h.b16 %v2352
    %v3074 = vunpack.c.l.b16 %v2353
    %v3075 = vunpack.c.h.b16 %v2353
    %v3076 = vunpack.c.l.b16 %v2354
    %v3077 = vunpack.c.h.b16 %v2354
    %v3078 = vunpack.c.l.b16 %v2355
    %v3079 = vunpack.c.h.b16 %v2355
    %v3080 = vunpack.c.l.b16 %v2356
    %v3081 = vunpack.c.h.b16 %v2356
    %v3082 = vunpack.c.l.b16 %v2357
    %v3083 = vunpack.c.h.b16 %v2357
    %v3084 = vunpack.c.l.b16 %v2358
    %v3085 = vunpack.c.h.b16 %v2358
    %v3086 = vunpack.c.l.b16 %v2359
    %v3087 = vunpack.c.h.b16 %v2359
    %v3088 = vunpack.c.l.b16 %v2360
    %v3089 = vunpack.c.h.b16 %v2360
    %v3090 = vunpack.c.l.b16 %v2361
    %v3091 = vunpack.c.h.b16 %v2361
    %v3092 = vunpack.c.l.b16 %v2362
    %v3093 = vunpack.c.h.b16 %v2362
    %v3094 = vunpack.c.l.b16 %v2363
    %v3095 = vunpack.c.h.b16 %v2363
    %v3096 = vunpack.c.l.b16 %v2364
    %v3097 = vunpack.c.h.b16 %v2364
    %v3098 = vunpack.c.l.b16 %v2365
    %v3099 = vunpack.c.h.b16 %v2365
    %v3100 = vunpack.c.l.b16 %v2366
    %v3101 = vunpack.c.h.b16 %v2366
    %v3102 = vunpack.c.l.b16 %v2367
    %v3103 = vunpack.c.h.b16 %v2367
    %v3104 = vunpack.c.l.b16 %v2368
    %v3105 = vunpack.c.h.b16 %v2368
    %v3106 = vunpack.c.l.b16 %v2369
    %v3107 = vunpack.c.h.b16 %v2369
    %v3108 = vunpack.c.l.b16 %v2370
    %v3109 = vunpack.c.h.b16 %v2370
    %v3110 = vunpack.c.l.b16 %v2371
    %v3111 = vunpack.c.h.b16 %v2371
    %v3112 = vunpack.c.l.b16 %v2372
    %v3113 = vunpack.c.h.b16 %v2372
    %v3114 = vunpack.c.l.b16 %v2373
    %v3115 = vunpack.c.h.b16 %v2373
    %v3116 = vunpack.c.l.b16 %v2374
    %v3117 = vunpack.c.h.b16 %v2374
    %v3118 = vunpack.c.l.b16 %v2375
    %v3119 = vunpack.c.h.b16 %v2375
    %v3120 = vunpack.c.l.b16 %v2376
    %v3121 = vunpack.c.h.b16 %v2376
    %v3122 = vunpack.c.l.b16 %v2377
    %v3123 = vunpack.c.h.b16 %v2377
    %v3124 = vunpack.c.l.b16 %v2378
    %v3125 = vunpack.c.h.b16 %v2378
    %v3126 = vunpack.c.l.b16 %v2379
    %v3127 = vunpack.c.h.b16 %v2379
    %v3128 = vunpack.c.l.b16 %v2380
    %v3129 = vunpack.c.h.b16 %v2380
    %v3130 = vunpack.c.l.b16 %v2381
    %v3131 = vunpack.c.h.b16 %v2381
    %v3132 = vunpack.c.l.b16 %v2382
    %v3133 = vunpack.c.h.b16 %v2382
    %v3134 = vunpack.c.l.b16 %v2383
    %v3135 = vunpack.c.h.b16 %v2383
    %v3136 = vunpack.c.l.b16 %v2384
    %v3137 = vunpack.c.h.b16 %v2384
    %v3138 = vunpack.c.l.b16 %v2385
    %v3139 = vunpack.c.h.b16 %v2385
    %v3140 = vunpack.c.l.b16 %v2386
    %v3141 = vunpack.c.h.b16 %v2386
    %v3142 = vunpack.c.l.b16 %v2387
    %v3143 = vunpack.c.h.b16 %v2387
    %v3144 = vunpack.c.l.b16 %v2388
    %v3145 = vunpack.c.h.b16 %v2388
    %v3146 = vunpack.c.l.b16 %v2389
    %v3147 = vunpack.c.h.b16 %v2389
    %v3148 = vunpack.c.l.b16 %v2390
    %v3149 = vunpack.c.h.b16 %v2390
    %v3150 = vunpack.c.l.b16 %v2391
    %v3151 = vunpack.c.h.b16 %v2391
    %v3152 = vunpack.c.l.b16 %v2392
    %v3153 = vunpack.c.h.b16 %v2392
    %v3154 = vunpack.c.l.b16 %v2393
    %v3155 = vunpack.c.h.b16 %v2393
    %v3156 = vunpack.c.l.b16 %v2394
    %v3157 = vunpack.c.h.b16 %v2394
    %v3158 = vunpack.c.l.b16 %v2395
    %v3159 = vunpack.c.h.b16 %v2395
    %v3160 = vunpack.c.l.b16 %v2396
    %v3161 = vunpack.c.h.b16 %v2396
    %v3162 = vunpack.c.l.b16 %v2397
    %v3163 = vunpack.c.h.b16 %v2397
    %v3164 = vunpack.c.l.b16 %v2398
    %v3165 = vunpack.c.h.b16 %v2398
    %v3166 = vunpack.c.l.b16 %v2399
    %v3167 = vunpack.c.h.b16 %v2399
    %v3168 = vunpack.c.l.b16 %v2400
    %v3169 = vunpack.c.h.b16 %v2400
    %v3170 = vunpack.c.l.b16 %v2401
    %v3171 = vunpack.c.h.b16 %v2401
    %v3172 = vunpack.c.l.b16 %v2402
    %v3173 = vunpack.c.h.b16 %v2402
    %v3174 = vunpack.c.l.b16 %v2403
    %v3175 = vunpack.c.h.b16 %v2403
    %v3176 = vunpack.c.l.b16 %v2404
    %v3177 = vunpack.c.h.b16 %v2404
    %v3178 = vunpack.c.l.b16 %v2405
    %v3179 = vunpack.c.h.b16 %v2405
    %v3180 = vunpack.c.l.b16 %v2406
    %v3181 = vunpack.c.h.b16 %v2406
    %v3182 = vunpack.c.l.b16 %v2407
    %v3183 = vunpack.c.h.b16 %v2407
    %v3184 = vunpack.c.l.b16 %v2408
    %v3185 = vunpack.c.h.b16 %v2408
    %v3186 = vunpack.c.l.b16 %v2409
    %v3187 = vunpack.c.h.b16 %v2409
    %v3188 = vunpack.c.l.b16 %v2410
    %v3189 = vunpack.c.h.b16 %v2410
    %v3190 = vunpack.c.l.b16 %v2411
    %v3191 = vunpack.c.h.b16 %v2411
    %v3192 = vunpack.c.l.b16 %v2412
    %v3193 = vunpack.c.h.b16 %v2412
    %v3194 = vunpack.c.l.b16 %v2413
    %v3195 = vunpack.c.h.b16 %v2413
    %v3196 = vunpack.c.l.b16 %v2414
    %v3197 = vunpack.c.h.b16 %v2414
    %v3198 = vunpack.c.l.b16 %v2415
    %v3199 = vunpack.c.h.b16 %v2415
    %v3200 = vunpack.c.l.b16 %v2416
    %v3201 = vunpack.c.h.b16 %v2416
    %v3202 = vunpack.c.l.b16 %v2417
    %v3203 = vunpack.c.h.b16 %v2417
    %v3204 = vunpack.c.l.b16 %v2418
    %v3205 = vunpack.c.h.b16 %v2418
    %v3206 = vunpack.c.l.b16 %v2419
    %v3207 = vunpack.c.h.b16 %v2419
    %v3208 = vunpack.c.l.b16 %v2420
    %v3209 = vunpack.c.h.b16 %v2420
    %v3210 = vunpack.c.l.b16 %v2421
    %v3211 = vunpack.c.h.b16 %v2421
    %v3212 = vunpack.c.l.b16 %v2422
    %v3213 = vunpack.c.h.b16 %v2422
    %v3214 = vunpack.c.l.b16 %v2423
    %v3215 = vunpack.c.h.b16 %v2423
    %v3216 = vunpack.c.l.b16 %v2424
    %v3217 = vunpack.c.h.b16 %v2424
    %v3218 = vunpack.c.l.b16 %v2425
    %v3219 = vunpack.c.h.b16 %v2425
    %v3220 = vunpack.c.l.b16 %v2426
    %v3221 = vunpack.c.h.b16 %v2426
    %v3222 = vunpack.c.l.b16 %v2427
    %v3223 = vunpack.c.h.b16 %v2427
    %v3224 = vunpack.c.l.b16 %v2428
    %v3225 = vunpack.c.h.b16 %v2428
    %v3226 = vunpack.c.l.b16 %v2429
    %v3227 = vunpack.c.h.b16 %v2429
    %v3228 = vunpack.c.l.b16 %v2430
    %v3229 = vunpack.c.h.b16 %v2430
    %v3230 = vunpack.c.l.b16 %v2431
    %v3231 = vunpack.c.h.b16 %v2431
    %v3232 = vunpack.c.l.b16 %v2432
    %v3233 = vunpack.c.h.b16 %v2432
    %v3234 = vunpack.c.l.b16 %v2433
    %v3235 = vunpack.c.h.b16 %v2433
    %v3236 = vunpack.c.l.b16 %v2434
    %v3237 = vunpack.c.h.b16 %v2434
    %v3238 = vunpack.c.l.b16 %v2435
    %v3239 = vunpack.c.h.b16 %v2435
    %v3240 = vunpack.c.l.b16 %v2436
    %v3241 = vunpack.c.h.b16 %v2436
    %v3242 = vunpack.c.l.b16 %v2437
    %v3243 = vunpack.c.h.b16 %v2437
    %v3244 = vunpack.c.l.b16 %v2438
    %v3245 = vunpack.c.h.b16 %v2438
    %v3246 = vunpack.c.l.b16 %v2439
    %v3247 = vunpack.c.h.b16 %v2439
    %v3248 = vunpack.c.l.b16 %v2440
    %v3249 = vunpack.c.h.b16 %v2440
    %v3250 = vunpack.c.l.b16 %v2441
    %v3251 = vunpack.c.h.b16 %v2441
    %v3252 = vunpack.c.l.b16 %v2442
    %v3253 = vunpack.c.h.b16 %v2442
    %v3254 = vunpack.c.l.b16 %v2443
    %v3255 = vunpack.c.h.b16 %v2443
    %v3256 = vunpack.c.l.b16 %v2444
    %v3257 = vunpack.c.h.b16 %v2444
    %v3258 = vunpack.c.l.b16 %v2445
    %v3259 = vunpack.c.h.b16 %v2445
    %v3260 = vunpack.c.l.b16 %v2446
    %v3261 = vunpack.c.h.b16 %v2446
    %v3262 = vunpack.c.l.b16 %v2447
    %v3263 = vunpack.c.h.b16 %v2447
    %v3264 = vunpack.c.l.b16 %v2448
    %v3265 = vunpack.c.h.b16 %v2448
    %v3266 = vunpack.c.l.b16 %v2449
    %v3267 = vunpack.c.h.b16 %v2449
    %v3268 = vunpack.c.l.b16 %v2450
    %v3269 = vunpack.c.h.b16 %v2450
    %v3270 = vunpack.c.l.b16 %v2451
    %v3271 = vunpack.c.h.b16 %v2451
    %v3272 = vunpack.c.l.b16 %v2452
    %v3273 = vunpack.c.h.b16 %v2452
    %v3274 = vunpack.c.l.b16 %v2453
    %v3275 = vunpack.c.h.b16 %v2453
    %v3276 = vunpack.c.l.b16 %v2454
    %v3277 = vunpack.c.h.b16 %v2454
    %v3278 = vunpack.c.l.b16 %v2455
    %v3279 = vunpack.c.h.b16 %v2455
    %v3280 = vunpack.c.l.b16 %v2456
    %v3281 = vunpack.c.h.b16 %v2456
    %v3282 = vunpack.c.l.b16 %v2457
    %v3283 = vunpack.c.h.b16 %v2457
    %v3284 = vunpack.c.l.b16 %v2458
    %v3285 = vunpack.c.h.b16 %v2458
    %v3286 = vunpack.c.l.b16 %v2459
    %v3287 = vunpack.c.h.b16 %v2459
    %v3288 = vunpack.c.l.b16 %v2460
    %v3289 = vunpack.c.h.b16 %v2460
    %v3290 = vunpack.c.l.b16 %v2461
    %v3291 = vunpack.c.h.b16 %v2461
    %v3292 = vunpack.c.l.b16 %v2462
    %v3293 = vunpack.c.h.b16 %v2462
    %v3294 = vunpack.c.l.b16 %v2463
    %v3295 = vunpack.c.h.b16 %v2463
    %v3296 = vunpack.c.l.b16 %v2464
    %v3297 = vunpack.c.h.b16 %v2464
    %v3298 = vunpack.c.l.b16 %v2465
    %v3299 = vunpack.c.h.b16 %v2465
    %v3300 = vunpack.c.l.b16 %v2466
    %v3301 = vunpack.c.h.b16 %v2466
    %v3302 = vunpack.c.l.b16 %v2467
    %v3303 = vunpack.c.h.b16 %v2467
    %v3304 = vunpack.c.l.b16 %v2468
    %v3305 = vunpack.c.h.b16 %v2468
    %v3306 = vunpack.c.l.b16 %v2469
    %v3307 = vunpack.c.h.b16 %v2469
    %v3308 = vunpack.c.l.b16 %v2470
    %v3309 = vunpack.c.h.b16 %v2470
    %v3310 = vunpack.c.l.b16 %v2471
    %v3311 = vunpack.c.h.b16 %v2471
    %v3312 = vunpack.c.l.b16 %v2472
    %v3313 = vunpack.c.h.b16 %v2472
    %v3314 = vunpack.c.l.b16 %v2473
    %v3315 = vunpack.c.h.b16 %v2473
    %v3316 = vunpack.c.l.b16 %v2474
    %v3317 = vunpack.c.h.b16 %v2474
    %v3318 = vunpack.c.l.b16 %v2475
    %v3319 = vunpack.c.h.b16 %v2475
    %v3320 = vunpack.c.l.b16 %v2476
    %v3321 = vunpack.c.h.b16 %v2476
    %v3322 = vunpack.c.l.b16 %v2477
    %v3323 = vunpack.c.h.b16 %v2477
    %v3324 = vunpack.c.l.b16 %v2478
    %v3325 = vunpack.c.h.b16 %v2478
    %v3326 = vunpack.c.l.b16 %v2479
    %v3327 = vunpack.c.h.b16 %v2479
    %v3328 = vunpack.c.l.b16 %v2480
    %v3329 = vunpack.c.h.b16 %v2480
    %v3330 = vunpack.c.l.b16 %v2481
    %v3331 = vunpack.c.h.b16 %v2481
    %v3332 = vunpack.c.l.b16 %v2482
    %v3333 = vunpack.c.h.b16 %v2482
    %v3334 = vunpack.c.l.b16 %v2483
    %v3335 = vunpack.c.h.b16 %v2483
    %v3336 = vunpack.c.l.b16 %v2484
    %v3337 = vunpack.c.h.b16 %v2484
    %v3338 = vunpack.c.l.b16 %v2485
    %v3339 = vunpack.c.h.b16 %v2485
    %v3340 = vunpack.c.l.b16 %v2486
    %v3341 = vunpack.c.h.b16 %v2486
    %v3342 = vunpack.c.l.b16 %v2487
    %v3343 = vunpack.c.h.b16 %v2487
    %v3344 = vunpack.c.l.b16 %v2488
    %v3345 = vunpack.c.h.b16 %v2488
    %v3346 = vunpack.c.l.b16 %v2489
    %v3347 = vunpack.c.h.b16 %v2489
    %v3348 = vunpack.c.l.b16 %v2490
    %v3349 = vunpack.c.h.b16 %v2490
    %v3350 = vunpack.c.l.b16 %v2491
    %v3351 = vunpack.c.h.b16 %v2491
    %v3352 = vunpack.c.l.b16 %v2492
    %v3353 = vunpack.c.h.b16 %v2492
    %v3354 = vunpack.c.l.b16 %v2493
    %v3355 = vunpack.c.h.b16 %v2493
    %v3356 = vunpack.c.l.b16 %v2494
    %v3357 = vunpack.c.h.b16 %v2494
    %v3358 = vunpack.c.l.b16 %v2495
    %v3359 = vunpack.c.h.b16 %v2495
    %v3360 = vunpack.c.l.b16 %v2496
    %v3361 = vunpack.c.h.b16 %v2496
    %v3362 = vunpack.c.l.b16 %v2497
    %v3363 = vunpack.c.h.b16 %v2497
    %v3364 = vunpack.c.l.b16 %v2498
    %v3365 = vunpack.c.h.b16 %v2498
    %v3366 = vunpack.c.l.b16 %v2499
    %v3367 = vunpack.c.h.b16 %v2499
    %v3368 = vunpack.c.l.b16 %v2500
    %v3369 = vunpack.c.h.b16 %v2500
    %v3370 = vunpack.c.l.b16 %v2501
    %v3371 = vunpack.c.h.b16 %v2501
    %v3372 = vunpack.c.l.b16 %v2502
    %v3373 = vunpack.c.h.b16 %v2502
    %v3374 = vunpack.c.l.b16 %v2503
    %v3375 = vunpack.c.h.b16 %v2503
    %v3376 = vunpack.c.l.b16 %v2504
    %v3377 = vunpack.c.h.b16 %v2504
    %v3378 = vunpack.c.l.b16 %v2505
    %v3379 = vunpack.c.h.b16 %v2505
    %v3380 = vunpack.c.l.b16 %v2506
    %v3381 = vunpack.c.h.b16 %v2506
    %v3382 = vunpack.c.l.b16 %v2507
    %v3383 = vunpack.c.h.b16 %v2507
    %v3384 = vunpack.c.l.b16 %v2508
    %v3385 = vunpack.c.h.b16 %v2508
    %v3386 = vunpack.c.l.b16 %v2509
    %v3387 = vunpack.c.h.b16 %v2509
    %v3388 = vunpack.c.l.b16 %v2510
    %v3389 = vunpack.c.h.b16 %v2510
    %v3390 = vunpack.c.l.b16 %v2511
    %v3391 = vunpack.c.h.b16 %v2511
    %v3392 = vunpack.c.l.b16 %v2512
    %v3393 = vunpack.c.h.b16 %v2512
    %v3394 = vunpack.c.l.b16 %v2513
    %v3395 = vunpack.c.h.b16 %v2513
    %v3396 = vunpack.c.l.b16 %v2514
    %v3397 = vunpack.c.h.b16 %v2514
    %v3398 = vunpack.c.l.b16 %v2515
    %v3399 = vunpack.c.h.b16 %v2515
    %v3400 = vunpack.c.l.b16 %v2516
    %v3401 = vunpack.c.h.b16 %v2516
    %v3402 = vunpack.c.l.b16 %v2517
    %v3403 = vunpack.c.h.b16 %v2517
    %v3404 = vunpack.c.l.b16 %v2518
    %v3405 = vunpack.c.h.b16 %v2518
    %v3406 = vunpack.c.l.b16 %v2519
    %v3407 = vunpack.c.h.b16 %v2519
    %v3408 = vunpack.c.l.b16 %v2520
    %v3409 = vunpack.c.h.b16 %v2520
    %v3410 = vunpack.c.l.b16 %v2521
    %v3411 = vunpack.c.h.b16 %v2521
    %v3412 = vunpack.c.l.b16 %v2522
    %v3413 = vunpack.c.h.b16 %v2522
    %v3414 = vunpack.c.l.b16 %v2523
    %v3415 = vunpack.c.h.b16 %v2523
    %v3416 = vunpack.c.l.b16 %v2524
    %v3417 = vunpack.c.h.b16 %v2524
    %v3418 = vunpack.c.l.b16 %v2525
    %v3419 = vunpack.c.h.b16 %v2525
    %v3420 = vunpack.c.l.b16 %v2526
    %v3421 = vunpack.c.h.b16 %v2526
    %v3422 = vunpack.c.l.b16 %v2527
    %v3423 = vunpack.c.h.b16 %v2527
    %v3424 = vpack.c.b16 %v2854, %v2848
    %v3425 = vpack.c.b16 %v2855, %v2849
    %v3426 = vpack.c.b16 %v2856, %v2850
    %v3427 = vpack.c.b16 %v2857, %v2851
    %v3428 = vpack.c.b16 %v2858, %v2852
    %v3429 = vpack.c.b16 %v2859, %v2853
    %v3430 = vpack.c.b16 %v2866, %v2860
    %v3431 = vpack.c.b16 %v2867, %v2861
    %v3432 = vpack.c.b16 %v2868, %v2862
    %v3433 = vpack.c.b16 %v2869, %v2863
    %v3434 = vpack.c.b16 %v2870, %v2864
    %v3435 = vpack.c.b16 %v2871, %v2865
    %v3436 = vpack.c.b16 %v2878, %v2872
    %v3437 = vpack.c.b16 %v2879, %v2873
    %v3438 = vpack.c.b16 %v2880, %v2874
    %v3439 = vpack.c.b16 %v2881, %v2875
    %v3440 = vpack.c.b16 %v2882, %v2876
    %v3441 = vpack.c.b16 %v2883, %v2877
    %v3442 = vpack.c.b16 %v2890, %v2884
    %v3443 = vpack.c.b16 %v2891, %v2885
    %v3444 = vpack.c.b16 %v2892, %v2886
    %v3445 = vpack.c.b16 %v2893, %v2887
    %v3446 = vpack.c.b16 %v2894, %v2888
    %v3447 = vpack.c.b16 %v2895, %v2889
    %v3448 = vpack.c.b16 %v2902, %v2896
    %v3449 = vpack.c.b16 %v2903, %v2897
    %v3450 = vpack.c.b16 %v2904, %v2898
    %v3451 = vpack.c.b16 %v2905, %v2899
    %v3452 = vpack.c.b16 %v2906, %v2900
    %v3453 = vpack.c.b16 %v2907, %v2901
    %v3454 = vpack.c.b16 %v2914, %v2908
    %v3455 = vpack.c.b16 %v2915, %v2909
    %v3456 = vpack.c.b16 %v2916, %v2910
    %v3457 = vpack.c.b16 %v2917, %v2911
    %v3458 = vpack.c.b16 %v2918, %v2912
    %v3459 = vpack.c.b16 %v2919, %v2913
    %v3460 = vpack.c.b16 %v2926, %v2920
    %v3461 = vpack.c.b16 %v2927, %v2921
    %v3462 = vpack.c.b16 %v2928, %v2922
    %v3463 = vpack.c.b16 %v2929, %v2923
    %v3464 = vpack.c.b16 %v2930, %v2924
    %v3465 = vpack.c.b16 %v2931, %v2925
    %v3466 = vpack.c.b16 %v2938, %v2932
    %v3467 = vpack.c.b16 %v2939, %v2933
    %v3468 = vpack.c.b16 %v2940, %v2934
    %v3469 = vpack.c.b16 %v2941, %v2935
    %v3470 = vpack.c.b16 %v2942, %v2936
    %v3471 = vpack.c.b16 %v2943, %v2937
    %v3472 = vpack.c.b16 %v2950, %v2944
    %v3473 = vpack.c.b16 %v2951, %v2945
    %v3474 = vpack.c.b16 %v2952, %v2946
    %v3475 = vpack.c.b16 %v2953, %v2947
    %v3476 = vpack.c.b16 %v2954, %v2948
    %v3477 = vpack.c.b16 %v2955, %v2949
    %v3478 = vpack.c.b16 %v2962, %v2956
    %v3479 = vpack.c.b16 %v2963, %v2957
    %v3480 = vpack.c.b16 %v2964, %v2958
    %v3481 = vpack.c.b16 %v2965, %v2959
    %v3482 = vpack.c.b16 %v2966, %v2960
    %v3483 = vpack.c.b16 %v2967, %v2961
    %v3484 = vpack.c.b16 %v2974, %v2968
    %v3485 = vpack.c.b16 %v2975, %v2969
    %v3486 = vpack.c.b16 %v2976, %v2970
    %v3487 = vpack.c.b16 %v2977, %v2971
    %v3488 = vpack.c.b16 %v2978, %v2972
    %v3489 = vpack.c.b16 %v2979, %v2973
    %v3490 = vpack.c.b16 %v2986, %v2980
    %v3491 = vpack.c.b16 %v2987, %v2981
    %v3492 = vpack.c.b16 %v2988, %v2982
    %v3493 = vpack.c.b16 %v2989, %v2983
    %v3494 = vpack.c.b16 %v2990, %v2984
    %v3495 = vpack.c.b16 %v2991, %v2985
    %v3496 = vpack.c.b16 %v2998, %v2992
    %v3497 = vpack.c.b16 %v2999, %v2993
    %v3498 = vpack.c.b16 %v3000, %v2994
    %v3499 = vpack.c.b16 %v3001, %v2995
    %v3500 = vpack.c.b16 %v3002, %v2996
    %v3501 = vpack.c.b16 %v3003, %v2997
    %v3502 = vpack.c.b16 %v3010, %v3004
    %v3503 = vpack.c.b16 %v3011, %v3005
    %v3504 = vpack.c.b16 %v3012, %v3006
    %v3505 = vpack.c.b16 %v3013, %v3007
    %v3506 = vpack.c.b16 %v3014, %v3008
    %v3507 = vpack.c.b16 %v3015, %v3009
    %v3508 = vpack.c.b16 %v3022, %v3016
    %v3509 = vpack.c.b16 %v3023, %v3017
    %v3510 = vpack.c.b16 %v3024, %v3018
    %v3511 = vpack.c.b16 %v3025, %v3019
    %v3512 = vpack.c.b16 %v3026, %v3020
    %v3513 = vpack.c.b16 %v3027, %v3021
    %v3514 = vpack.c.b16 %v3034, %v3028
    %v3515 = vpack.c.b16 %v3035, %v3029
    %v3516 = vpack.c.b16 %v3036, %v3030
    %v3517 = vpack.c.b16 %v3037, %v3031
    %v3518 = vpack.c.b16 %v3038, %v3032
    %v3519 = vpack.c.b16 %v3039, %v3033
    %v3520 = vpack.c.b16 %v3046, %v3040
    %v3521 = vpack.c.b16 %v3047, %v3041
    %v3522 = vpack.c.b16 %v3048, %v3042
    %v3523 = vpack.c.b16 %v3049, %v3043
    %v3524 = vpack.c.b16 %v3050, %v3044
    %v3525 = vpack.c.b16 %v3051, %v3045
    %v3526 = vpack.c.b16 %v3058, %v3052
    %v3527 = vpack.c.b16 %v3059, %v3053
    %v3528 = vpack.c.b16 %v3060, %v3054
    %v3529 = vpack.c.b16 %v3061, %v3055
    %v3530 = vpack.c.b16 %v3062, %v3056
    %v3531 = vpack.c.b16 %v3063, %v3057
    %v3532 = vpack.c.b16 %v3070, %v3064
    %v3533 = vpack.c.b16 %v3071, %v3065
    %v3534 = vpack.c.b16 %v3072, %v3066
    %v3535 = vpack.c.b16 %v3073, %v3067
    %v3536 = vpack.c.b16 %v3074, %v3068
    %v3537 = vpack.c.b16 %v3075, %v3069
    %v3538 = vpack.c.b16 %v3082, %v3076
    %v3539 = vpack.c.b16 %v3083, %v3077
    %v3540 = vpack.c.b16 %v3084, %v3078
    %v3541 = vpack.c.b16 %v3085, %v3079
    %v3542 = vpack.c.b16 %v3086, %v3080
    %v3543 = vpack.c.b16 %v3087, %v3081
    %v3544 = vpack.c.b16 %v3094, %v3088
    %v3545 = vpack.c.b16 %v3095, %v3089
    %v3546 = vpack.c.b16 %v3096, %v3090
    %v3547 = vpack.c.b16 %v3097, %v3091
    %v3548 = vpack.c.b16 %v3098, %v3092
    %v3549 = vpack.c.b16 %v3099, %v3093
    %v3550 = vpack.c.b16 %v3106, %v3100
    %v3551 = vpack.c.b16 %v3107, %v3101
    %v3552 = vpack.c.b16 %v3108, %v3102
    %v3553 = vpack.c.b16 %v3109, %v3103
    %v3554 = vpack.c.b16 %v3110, %v3104
    %v3555 = vpack.c.b16 %v3111, %v3105
    %v3556 = vpack.c.b16 %v3118, %v3112
    %v3557 = vpack.c.b16 %v3119, %v3113
    %v3558 = vpack.c.b16 %v3120, %v3114
    %v3559 = vpack.c.b16 %v3121, %v3115
    %v3560 = vpack.c.b16 %v3122, %v3116
    %v3561 = vpack.c.b16 %v3123, %v3117
    %v3562 = vpack.c.b16 %v3130, %v3124
    %v3563 = vpack.c.b16 %v3131, %v3125
    %v3564 = vpack.c.b16 %v3132, %v3126
    %v3565 = vpack.c.b16 %v3133, %v3127
    %v3566 = vpack.c.b16 %v3134, %v3128
    %v3567 = vpack.c.b16 %v3135, %v3129
    %v3568 = vpack.c.b16 %v3142, %v3136
    %v3569 = vpack.c.b16 %v3143, %v3137
    %v3570 = vpack.c.b16 %v3144, %v3138
    %v3571 = vpack.c.b16 %v3145, %v3139
    %v3572 = vpack.c.b16 %v3146, %v3140
    %v3573 = vpack.c.b16 %v3147, %v3141
    %v3574 = vpack.c.b16 %v3154, %v3148
    %v3575 = vpack.c.b16 %v3155, %v3149
    %v3576 = vpack.c.b16 %v3156, %v3150
    %v3577 = vpack.c.b16 %v3157, %v3151
    %v3578 = vpack.c.b16 %v3158, %v3152
    %v3579 = vpack.c.b16 %v3159, %v3153
    %v3580 = vpack.c.b16 %v3166, %v3160
    %v3581 = vpack.c.b16 %v3167, %v3161
    %v3582 = vpack.c.b16 %v3168, %v3162
    %v3583 = vpack.c.b16 %v3169, %v3163
    %v3584 = vpack.c.b16 %v3170, %v3164
    %v3585 = vpack.c.b16 %v3171, %v3165
    %v3586 = vpack.c.b16 %v3178, %v3172
    %v3587 = vpack.c.b16 %v3179, %v3173
    %v3588 = vpack.c.b16 %v3180, %v3174
    %v3589 = vpack.c.b16 %v3181, %v3175
    %v3590 = vpack.c.b16 %v3182, %v3176
    %v3591 = vpack.c.b16 %v3183, %v3177
    %v3592 = vpack.c.b16 %v3190, %v3184
    %v3593 = vpack.c.b16 %v3191, %v3185
    %v3594 = vpack.c.b16 %v3192, %v3186
    %v3595 = vpack.c.b16 %v3193, %v3187
    %v3596 = vpack.c.b16 %v3194, %v3188
    %v3597 = vpack.c.b16 %v3195, %v3189
    %v3598 = vpack.c.b16 %v3202, %v3196
    %v3599 = vpack.c.b16 %v3203, %v3197
    %v3600 = vpack.c.b16 %v3204, %v3198
    %v3601 = vpack.c.b16 %v3205, %v3199
    %v3602 = vpack.c.b16 %v3206, %v3200
    %v3603 = vpack.c.b16 %v3207, %v3201
    %v3604 = vpack.c.b16 %v3214, %v3208
    %v3605 = vpack.c.b16 %v3215, %v3209
    %v3606 = vpack.c.b16 %v3216, %v3210
    %v3607 = vpack.c.b16 %v3217, %v3211
    %v3608 = vpack.c.b16 %v3218, %v3212
    %v3609 = vpack.c.b16 %v3219, %v3213
    %v3610 = vpack.c.b16 %v3226, %v3220
    %v3611 = vpack.c.b16 %v3227, %v3221
    %v3612 = vpack.c.b16 %v3228, %v3222
    %v3613 = vpack.c.b16 %v3229, %v3223
    %v3614 = vpack.c.b16 %v3230, %v3224
    %v3615 = vpack.c.b16 %v3231, %v3225
    %v3616 = vpack.c.b16 %v3238, %v3232
    %v3617 = vpack.c.b16 %v3239, %v3233
    %v3618 = vpack.c.b16 %v3240, %v3234
    %v3619 = vpack.c.b16 %v3241, %v3235
    %v3620 = vpack.c.b16 %v3242, %v3236
    %v3621 = vpack.c.b16 %v3243, %v3237
    %v3622 = vpack.c.b16 %v3250, %v3244
    %v3623 = vpack.c.b16 %v3251, %v3245
    %v3624 = vpack.c.b16 %v3252, %v3246
    %v3625 = vpack.c.b16 %v3253, %v3247
    %v3626 = vpack.c.b16 %v3254, %v3248
    %v3627 = vpack.c.b16 %v3255, %v3249
    %v3628 = vpack.c.b16 %v3262, %v3256
    %v3629 = vpack.c.b16 %v3263, %v3257
    %v3630 = vpack.c.b16 %v3264, %v3258
    %v3631 = vpack.c.b16 %v3265, %v3259
    %v3632 = vpack.c.b16 %v3266, %v3260
    %v3633 = vpack.c.b16 %v3267, %v3261
    %v3634 = vpack.c.b16 %v3274, %v3268
    %v3635 = vpack.c.b16 %v3275, %v3269
    %v3636 = vpack.c.b16 %v3276, %v3270
    %v3637 = vpack.c.b16 %v3277, %v3271
    %v3638 = vpack.c.b16 %v3278, %v3272
    %v3639 = vpack.c.b16 %v3279, %v3273
    %v3640 = vpack.c.b16 %v3286, %v3280
    %v3641 = vpack.c.b16 %v3287, %v3281
    %v3642 = vpack.c.b16 %v3288, %v3282
    %v3643 = vpack.c.b16 %v3289, %v3283
    %v3644 = vpack.c.b16 %v3290, %v3284
    %v3645 = vpack.c.b16 %v3291, %v3285
    %v3646 = vpack.c.b16 %v3298, %v3292
    %v3647 = vpack.c.b16 %v3299, %v3293
    %v3648 = vpack.c.b16 %v3300, %v3294
    %v3649 = vpack.c.b16 %v3301, %v3295
    %v3650 = vpack.c.b16 %v3302, %v3296
    %v3651 = vpack.c.b16 %v3303, %v3297
    %v3652 = vpack.c.b16 %v3310, %v3304
    %v3653 = vpack.c.b16 %v3311, %v3305
    %v3654 = vpack.c.b16 %v3312, %v3306
    %v3655 = vpack.c.b16 %v3313, %v3307
    %v3656 = vpack.c.b16 %v3314, %v3308
    %v3657 = vpack.c.b16 %v3315, %v3309
    %v3658 = vpack.c.b16 %v3322, %v3316
    %v3659 = vpack.c.b16 %v3323, %v3317
    %v3660 = vpack.c.b16 %v3324, %v3318
    %v3661 = vpack.c.b16 %v3325, %v3319
    %v3662 = vpack.c.b16 %v3326, %v3320
    %v3663 = vpack.c.b16 %v3327, %v3321
    %v3664 = vpack.c.b16 %v3334, %v3328
    %v3665 = vpack.c.b16 %v3335, %v3329
    %v3666 = vpack.c.b16 %v3336, %v3330
    %v3667 = vpack.c.b16 %v3337, %v3331
    %v3668 = vpack.c.b16 %v3338, %v3332
    %v3669 = vpack.c.b16 %v3339, %v3333
    %v3670 = vpack.c.b16 %v3346, %v3340
    %v3671 = vpack.c.b16 %v3347, %v3341
    %v3672 = vpack.c.b16 %v3348, %v3342
    %v3673 = vpack.c.b16 %v3349, %v3343
    %v3674 = vpack.c.b16 %v3350, %v3344
    %v3675 = vpack.c.b16 %v3351, %v3345
    %v3676 = vpack.c.b16 %v3358, %v3352
    %v3677 = vpack.c.b16 %v3359, %v3353
    %v3678 = vpack.c.b16 %v3360, %v3354
    %v3679 = vpack.c.b16 %v3361, %v3355
    %v3680 = vpack.c.b16 %v3362, %v3356
    %v3681 = vpack.c.b16 %v3363, %v3357
    %v3682 = vpack.c.b16 %v3370, %v3364
    %v3683 = vpack.c.b16 %v3371, %v3365
    %v3684 = vpack.c.b16 %v3372, %v3366
    %v3685 = vpack.c.b16 %v3373, %v3367
    %v3686 = vpack.c.b16 %v3374, %v3368
    %v3687 = vpack.c.b16 %v3375, %v3369
    %v3688 = vpack.c.b16 %v3382, %v3376
    %v3689 = vpack.c.b16 %v3383, %v3377
    %v3690 = vpack.c.b16 %v3384, %v3378
    %v3691 = vpack.c.b16 %v3385, %v3379
    %v3692 = vpack.c.b16 %v3386, %v3380
    %v3693 = vpack.c.b16 %v3387, %v3381
    %v3694 = vpack.c.b16 %v3394, %v3388
    %v3695 = vpack.c.b16 %v3395, %v3389
    %v3696 = vpack.c.b16 %v3396, %v3390
    %v3697 = vpack.c.b16 %v3397, %v3391
    %v3698 = vpack.c.b16 %v3398, %v3392
    %v3699 = vpack.c.b16 %v3399, %v3393
    %v3700 = vpack.c.b16 %v3406, %v3400
    %v3701 = vpack.c.b16 %v3407, %v3401
    %v3702 = vpack.c.b16 %v3408, %v3402
    %v3703 = vpack.c.b16 %v3409, %v3403
    %v3704 = vpack.c.b16 %v3410, %v3404
    %v3705 = vpack.c.b16 %v3411, %v3405
    %v3706 = vpack.c.b16 %v3418, %v3412
    %v3707 = vpack.c.b16 %v3419, %v3413
    %v3708 = vpack.c.b16 %v3420, %v3414
    %v3709 = vpack.c.b16 %v3421, %v3415
    %v3710 = vpack.c.b16 %v3422, %v3416
    %v3711 = vpack.c.b16 %v3423, %v3417
    %4000 = vmatprep.subr.bf16.mxu0 %v3425
    %4001 = vmatpush1.bf16.msra.mxu0 %v3424
    %4002 = vmatprep.subr.bf16.mxu0 %v3431
    %4003 = vmatpush1.bf16.msra.mxu0 %v3430
    %4004 = vmatprep.subr.bf16.mxu0 %v3437
    %4005 = vmatpush1.bf16.msra.mxu0 %v3436
    %4006 = vmatprep.subr.bf16.mxu0 %v3443
    %4007 = vmatpush1.bf16.msra.mxu0 %v3442
    %4008 = vmatprep.subr.bf16.mxu0 %v3449
    %4009 = vmatpush1.bf16.msra.mxu0 %v3448
    %4010 = vmatprep.subr.bf16.mxu0 %v3455
    %4011 = vmatpush1.bf16.msra.mxu0 %v3454
    %4012 = vmatprep.subr.bf16.mxu0 %v3461
    %4013 = vmatpush1.bf16.msra.mxu0 %v3460
    %4014 = vmatprep.subr.bf16.mxu0 %v3467
    %4015 = vmatpush1.bf16.msra.mxu0 %v3466
    %4016 = vmatprep.subr.bf16.mxu0 %v3473
    %4017 = vmatpush1.bf16.msra.mxu0 %v3472
    %4018 = vmatprep.subr.bf16.mxu0 %v3479
    %4019 = vmatpush1.bf16.msra.mxu0 %v3478
    %4020 = vmatprep.subr.bf16.mxu0 %v3485
    %4021 = vmatpush1.bf16.msra.mxu0 %v3484
    %4022 = vmatprep.subr.bf16.mxu0 %v3491
    %4023 = vmatpush1.bf16.msra.mxu0 %v3490
    %4024 = vmatprep.subr.bf16.mxu0 %v3497
    %4025 = vmatpush1.bf16.msra.mxu0 %v3496
    %4026 = vmatprep.subr.bf16.mxu0 %v3503
    %4027 = vmatpush1.bf16.msra.mxu0 %v3502
    %4028 = vmatprep.subr.bf16.mxu0 %v3509
    %4029 = vmatpush1.bf16.msra.mxu0 %v3508
    %4030 = vmatprep.subr.bf16.mxu0 %v3515
    %4031 = vmatpush1.bf16.msra.mxu0 %v3514
    %4032 = vmatprep.mubr.bf16.mxu0 %v2235
    %4033 = vmatmul.mubr.bf16.gmra.mrb[0].mxu0 %v2234
    %v4034 = vpop.f32.mrb[0].mxu0
    %v4035 = vadd.f32 %v2533, %v4034
    %v4036 = vpop.f32.mrb[0].mxu0
    %v4037 = vadd.f32 %v2537, %v4036
    %v4038 = vpop.f32.mrb[0].mxu0
    %v4039 = vpop.f32.mrb[0].mxu0
    %4040 = vdwg.mxu0
    %4041 = vmatprep.subr.bf16.mxu0 %v3521
    %4042 = vmatpush1.bf16.msra.mxu0 %v3520
    %4043 = vmatprep.subr.bf16.mxu0 %v3527
    %4044 = vmatpush1.bf16.msra.mxu0 %v3526
    %4045 = vmatprep.subr.bf16.mxu0 %v3533
    %4046 = vmatpush1.bf16.msra.mxu0 %v3532
    %4047 = vmatprep.subr.bf16.mxu0 %v3539
    %4048 = vmatpush1.bf16.msra.mxu0 %v3538
    %4049 = vmatprep.subr.bf16.mxu0 %v3545
    %4050 = vmatpush1.bf16.msra.mxu0 %v3544
    %4051 = vmatprep.subr.bf16.mxu0 %v3551
    %4052 = vmatpush1.bf16.msra.mxu0 %v3550
    %4053 = vmatprep.subr.bf16.mxu0 %v3557
    %4054 = vmatpush1.bf16.msra.mxu0 %v3556
    %4055 = vmatprep.subr.bf16.mxu0 %v3563
    %4056 = vmatpush1.bf16.msra.mxu0 %v3562
    %4057 = vmatprep.subr.bf16.mxu0 %v3569
    %4058 = vmatpush1.bf16.msra.mxu0 %v3568
    %4059 = vmatprep.subr.bf16.mxu0 %v3575
    %4060 = vmatpush1.bf16.msra.mxu0 %v3574
    %4061 = vmatprep.subr.bf16.mxu0 %v3581
    %4062 = vmatpush1.bf16.msra.mxu0 %v3580
    %4063 = vmatprep.subr.bf16.mxu0 %v3587
    %4064 = vmatpush1.bf16.msra.mxu0 %v3586
    %4065 = vmatprep.subr.bf16.mxu0 %v3593
    %4066 = vmatpush1.bf16.msra.mxu0 %v3592
    %4067 = vmatprep.subr.bf16.mxu0 %v3599
    %4068 = vmatpush1.bf16.msra.mxu0 %v3598
    %4069 = vmatprep.subr.bf16.mxu0 %v3605
    %4070 = vmatpush1.bf16.msra.mxu0 %v3604
    %4071 = vmatprep.subr.bf16.mxu0 %v3611
    %4072 = vmatpush1.bf16.msra.mxu0 %v3610
    %4073 = vmatprep.mubr.bf16.mxu0 %v2237
    %4074 = vmatmul.mubr.bf16.gmra.mrb[0].mxu0 %v2236
    %v4075 = vpop.f32.mrb[0].mxu0
    %v4076 = vadd.f32 %v4035, %v4075
    %v4077 = vpop.f32.mrb[0].mxu0
    %v4078 = vadd.f32 %v4037, %v4077
    %v4079 = vpop.f32.mrb[0].mxu0
    %v4080 = vpop.f32.mrb[0].mxu0
    %4081 = vdwg.mxu0
    %4082 = vmatprep.subr.bf16.mxu0 %v3617
    %4083 = vmatpush1.bf16.msra.mxu0 %v3616
    %4084 = vmatprep.subr.bf16.mxu0 %v3623
    %4085 = vmatpush1.bf16.msra.mxu0 %v3622
    %4086 = vmatprep.subr.bf16.mxu0 %v3629
    %4087 = vmatpush1.bf16.msra.mxu0 %v3628
    %4088 = vmatprep.subr.bf16.mxu0 %v3635
    %4089 = vmatpush1.bf16.msra.mxu0 %v3634
    %4090 = vmatprep.subr.bf16.mxu0 %v3641
    %4091 = vmatpush1.bf16.msra.mxu0 %v3640
    %4092 = vmatprep.subr.bf16.mxu0 %v3647
    %4093 = vmatpush1.bf16.msra.mxu0 %v3646
    %4094 = vmatprep.subr.bf16.mxu0 %v3653
    %4095 = vmatpush1.bf16.msra.mxu0 %v3652
    %4096 = vmatprep.subr.bf16.mxu0 %v3659
    %4097 = vmatpush1.bf16.msra.mxu0 %v3658
    %4098 = vmatprep.subr.bf16.mxu0 %v3665
    %4099 = vmatpush1.bf16.msra.mxu0 %v3664
    %4100 = vmatprep.subr.bf16.mxu0 %v3671
    %4101 = vmatpush1.bf16.msra.mxu0 %v3670
    %4102 = vmatprep.subr.bf16.mxu0 %v3677
    %4103 = vmatpush1.bf16.msra.mxu0 %v3676
    %4104 = vmatprep.subr.bf16.mxu0 %v3683
    %4105 = vmatpush1.bf16.msra.mxu0 %v3682
    %4106 = vmatprep.subr.bf16.mxu0 %v3689
    %4107 = vmatpush1.bf16.msra.mxu0 %v3688
    %4108 = vmatprep.subr.bf16.mxu0 %v3695
    %4109 = vmatpush1.bf16.msra.mxu0 %v3694
    %4110 = vmatprep.subr.bf16.mxu0 %v3701
    %4111 = vmatpush1.bf16.msra.mxu0 %v3700
    %4112 = vmatprep.subr.bf16.mxu0 %v3707
    %4113 = vmatpush1.bf16.msra.mxu0 %v3706
    %4114 = vmatprep.mubr.bf16.mxu0 %v2239
    %4115 = vmatmul.mubr.bf16.gmra.mrb[0].mxu0 %v2238
    %v4116 = vpop.f32.mrb[0].mxu0
    %v4117 = vadd.f32 %v4076, %v4116
    %v4118 = vpop.f32.mrb[0].mxu0
    %v4119 = vadd.f32 %v4078, %v4118
    %v4120 = vpop.f32.mrb[0].mxu0
    %v4121 = vpop.f32.mrb[0].mxu0
    %4122 = vdwg.mxu0
    %4123 = vmatprep.subr.bf16.mxu0 %v3427
    %4124 = vmatpush1.bf16.msra.mxu0 %v3426
    %4125 = vmatprep.subr.bf16.mxu0 %v3433
    %4126 = vmatpush1.bf16.msra.mxu0 %v3432
    %4127 = vmatprep.subr.bf16.mxu0 %v3439
    %4128 = vmatpush1.bf16.msra.mxu0 %v3438
    %4129 = vmatprep.subr.bf16.mxu0 %v3445
    %4130 = vmatpush1.bf16.msra.mxu0 %v3444
    %4131 = vmatprep.subr.bf16.mxu0 %v3451
    %4132 = vmatpush1.bf16.msra.mxu0 %v3450
    %4133 = vmatprep.subr.bf16.mxu0 %v3457
    %4134 = vmatpush1.bf16.msra.mxu0 %v3456
    %4135 = vmatprep.subr.bf16.mxu0 %v3463
    %4136 = vmatpush1.bf16.msra.mxu0 %v3462
    %4137 = vmatprep.subr.bf16.mxu0 %v3469
    %4138 = vmatpush1.bf16.msra.mxu0 %v3468
    %4139 = vmatprep.subr.bf16.mxu0 %v3475
    %4140 = vmatpush1.bf16.msra.mxu0 %v3474
    %4141 = vmatprep.subr.bf16.mxu0 %v3481
    %4142 = vmatpush1.bf16.msra.mxu0 %v3480
    %4143 = vmatprep.subr.bf16.mxu0 %v3487
    %4144 = vmatpush1.bf16.msra.mxu0 %v3486
    %4145 = vmatprep.subr.bf16.mxu0 %v3493
    %4146 = vmatpush1.bf16.msra.mxu0 %v3492
    %4147 = vmatprep.subr.bf16.mxu0 %v3499
    %4148 = vmatpush1.bf16.msra.mxu0 %v3498
    %4149 = vmatprep.subr.bf16.mxu0 %v3505
    %4150 = vmatpush1.bf16.msra.mxu0 %v3504
    %4151 = vmatprep.subr.bf16.mxu0 %v3511
    %4152 = vmatpush1.bf16.msra.mxu0 %v3510
    %4153 = vmatprep.subr.bf16.mxu0 %v3517
    %4154 = vmatpush1.bf16.msra.mxu0 %v3516
    %4155 = vmatprep.mubr.bf16.mxu0 %v2235
    %4156 = vmatmul.mubr.bf16.gmra.mrb[0].mxu0 %v2234
    %v4157 = vpop.f32.mrb[0].mxu0
    %v4158 = vadd.f32 %v2541, %v4157
    %v4159 = vpop.f32.mrb[0].mxu0
    %v4160 = vadd.f32 %v2545, %v4159
    %v4161 = vpop.f32.mrb[0].mxu0
    %v4162 = vpop.f32.mrb[0].mxu0
    %4163 = vdwg.mxu0
    %4164 = vmatprep.subr.bf16.mxu0 %v3523
    %4165 = vmatpush1.bf16.msra.mxu0 %v3522
    %4166 = vmatprep.subr.bf16.mxu0 %v3529
    %4167 = vmatpush1.bf16.msra.mxu0 %v3528
    %4168 = vmatprep.subr.bf16.mxu0 %v3535
    %4169 = vmatpush1.bf16.msra.mxu0 %v3534
    %4170 = vmatprep.subr.bf16.mxu0 %v3541
    %4171 = vmatpush1.bf16.msra.mxu0 %v3540
    %4172 = vmatprep.subr.bf16.mxu0 %v3547
    %4173 = vmatpush1.bf16.msra.mxu0 %v3546
    %4174 = vmatprep.subr.bf16.mxu0 %v3553
    %4175 = vmatpush1.bf16.msra.mxu0 %v3552
    %4176 = vmatprep.subr.bf16.mxu0 %v3559
    %4177 = vmatpush1.bf16.msra.mxu0 %v3558
    %4178 = vmatprep.subr.bf16.mxu0 %v3565
    %4179 = vmatpush1.bf16.msra.mxu0 %v3564
    %4180 = vmatprep.subr.bf16.mxu0 %v3571
    %4181 = vmatpush1.bf16.msra.mxu0 %v3570
    %4182 = vmatprep.subr.bf16.mxu0 %v3577
    %4183 = vmatpush1.bf16.msra.mxu0 %v3576
    %4184 = vmatprep.subr.bf16.mxu0 %v3583
    %4185 = vmatpush1.bf16.msra.mxu0 %v3582
    %4186 = vmatprep.subr.bf16.mxu0 %v3589
    %4187 = vmatpush1.bf16.msra.mxu0 %v3588
    %4188 = vmatprep.subr.bf16.mxu0 %v3595
    %4189 = vmatpush1.bf16.msra.mxu0 %v3594
    %4190 = vmatprep.subr.bf16.mxu0 %v3601
    %4191 = vmatpush1.bf16.msra.mxu0 %v3600
    %4192 = vmatprep.subr.bf16.mxu0 %v3607
    %4193 = vmatpush1.bf16.msra.mxu0 %v3606
    %4194 = vmatprep.subr.bf16.mxu0 %v3613
    %4195 = vmatpush1.bf16.msra.mxu0 %v3612
    %4196 = vmatprep.mubr.bf16.mxu0 %v2237
    %4197 = vmatmul.mubr.bf16.gmra.mrb[0].mxu0 %v2236
    %v4198 = vpop.f32.mrb[0].mxu0
    %v4199 = vadd.f32 %v4158, %v4198
    %v4200 = vpop.f32.mrb[0].mxu0
    %v4201 = vadd.f32 %v4160, %v4200
    %v4202 = vpop.f32.mrb[0].mxu0
    %v4203 = vpop.f32.mrb[0].mxu0
    %4204 = vdwg.mxu0
    %4205 = vmatprep.subr.bf16.mxu0 %v3619
    %4206 = vmatpush1.bf16.msra.mxu0 %v3618
    %4207 = vmatprep.subr.bf16.mxu0 %v3625
    %4208 = vmatpush1.bf16.msra.mxu0 %v3624
    %4209 = vmatprep.subr.bf16.mxu0 %v3631
    %4210 = vmatpush1.bf16.msra.mxu0 %v3630
    %4211 = vmatprep.subr.bf16.mxu0 %v3637
    %4212 = vmatpush1.bf16.msra.mxu0 %v3636
    %4213 = vmatprep.subr.bf16.mxu0 %v3643
    %4214 = vmatpush1.bf16.msra.mxu0 %v3642
    %4215 = vmatprep.subr.bf16.mxu0 %v3649
    %4216 = vmatpush1.bf16.msra.mxu0 %v3648
    %4217 = vmatprep.subr.bf16.mxu0 %v3655
    %4218 = vmatpush1.bf16.msra.mxu0 %v3654
    %4219 = vmatprep.subr.bf16.mxu0 %v3661
    %4220 = vmatpush1.bf16.msra.mxu0 %v3660
    %4221 = vmatprep.subr.bf16.mxu0 %v3667
    %4222 = vmatpush1.bf16.msra.mxu0 %v3666
    %4223 = vmatprep.subr.bf16.mxu0 %v3673
    %4224 = vmatpush1.bf16.msra.mxu0 %v3672
    %4225 = vmatprep.subr.bf16.mxu0 %v3679
    %4226 = vmatpush1.bf16.msra.mxu0 %v3678
    %4227 = vmatprep.subr.bf16.mxu0 %v3685
    %4228 = vmatpush1.bf16.msra.mxu0 %v3684
    %4229 = vmatprep.subr.bf16.mxu0 %v3691
    %4230 = vmatpush1.bf16.msra.mxu0 %v3690
    %4231 = vmatprep.subr.bf16.mxu0 %v3697
    %4232 = vmatpush1.bf16.msra.mxu0 %v3696
    %4233 = vmatprep.subr.bf16.mxu0 %v3703
    %4234 = vmatpush1.bf16.msra.mxu0 %v3702
    %4235 = vmatprep.subr.bf16.mxu0 %v3709
    %4236 = vmatpush1.bf16.msra.mxu0 %v3708
    %4237 = vmatprep.mubr.bf16.mxu0 %v2239
    %4238 = vmatmul.mubr.bf16.gmra.mrb[0].mxu0 %v2238
    %v4239 = vpop.f32.mrb[0].mxu0
    %v4240 = vadd.f32 %v4199, %v4239
    %v4241 = vpop.f32.mrb[0].mxu0
    %v4242 = vadd.f32 %v4201, %v4241
    %v4243 = vpop.f32.mrb[0].mxu0
    %v4244 = vpop.f32.mrb[0].mxu0
    %4245 = vdwg.mxu0
    %4246 = vmatprep.subr.bf16.mxu0 %v3429
    %4247 = vmatpush1.bf16.msra.mxu0 %v3428
    %4248 = vmatprep.subr.bf16.mxu0 %v3435
    %4249 = vmatpush1.bf16.msra.mxu0 %v3434
    %4250 = vmatprep.subr.bf16.mxu0 %v3441
    %4251 = vmatpush1.bf16.msra.mxu0 %v3440
    %4252 = vmatprep.subr.bf16.mxu0 %v3447
    %4253 = vmatpush1.bf16.msra.mxu0 %v3446
    %4254 = vmatprep.subr.bf16.mxu0 %v3453
    %4255 = vmatpush1.bf16.msra.mxu0 %v3452
    %4256 = vmatprep.subr.bf16.mxu0 %v3459
    %4257 = vmatpush1.bf16.msra.mxu0 %v3458
    %4258 = vmatprep.subr.bf16.mxu0 %v3465
    %4259 = vmatpush1.bf16.msra.mxu0 %v3464
    %4260 = vmatprep.subr.bf16.mxu0 %v3471
    %4261 = vmatpush1.bf16.msra.mxu0 %v3470
    %4262 = vmatprep.subr.bf16.mxu0 %v3477
    %4263 = vmatpush1.bf16.msra.mxu0 %v3476
    %4264 = vmatprep.subr.bf16.mxu0 %v3483
    %4265 = vmatpush1.bf16.msra.mxu0 %v3482
    %4266 = vmatprep.subr.bf16.mxu0 %v3489
    %4267 = vmatpush1.bf16.msra.mxu0 %v3488
    %4268 = vmatprep.subr.bf16.mxu0 %v3495
    %4269 = vmatpush1.bf16.msra.mxu0 %v3494
    %4270 = vmatprep.subr.bf16.mxu0 %v3501
    %4271 = vmatpush1.bf16.msra.mxu0 %v3500
    %4272 = vmatprep.subr.bf16.mxu0 %v3507
    %4273 = vmatpush1.bf16.msra.mxu0 %v3506
    %4274 = vmatprep.subr.bf16.mxu0 %v3513
    %4275 = vmatpush1.bf16.msra.mxu0 %v3512
    %4276 = vmatprep.subr.bf16.mxu0 %v3519
    %4277 = vmatpush1.bf16.msra.mxu0 %v3518
    %4278 = vmatprep.mubr.bf16.mxu0 %v2235
    %4279 = vmatmul.mubr.bf16.gmra.mrb[0].mxu0 %v2234
    %v4280 = vpop.f32.mrb[0].mxu0
    %v4281 = vadd.f32 %v2549, %v4280
    %v4282 = vpop.f32.mrb[0].mxu0
    %v4283 = vadd.f32 %v2553, %v4282
    %v4284 = vpop.f32.mrb[0].mxu0
    %v4285 = vpop.f32.mrb[0].mxu0
    %4286 = vdwg.mxu0
    %4287 = vmatprep.subr.bf16.mxu0 %v3525
    %4288 = vmatpush1.bf16.msra.mxu0 %v3524
    %4289 = vmatprep.subr.bf16.mxu0 %v3531
    %4290 = vmatpush1.bf16.msra.mxu0 %v3530
    %4291 = vmatprep.subr.bf16.mxu0 %v3537
    %4292 = vmatpush1.bf16.msra.mxu0 %v3536
    %4293 = vmatprep.subr.bf16.mxu0 %v3543
    %4294 = vmatpush1.bf16.msra.mxu0 %v3542
    %4295 = vmatprep.subr.bf16.mxu0 %v3549
    %4296 = vmatpush1.bf16.msra.mxu0 %v3548
    %4297 = vmatprep.subr.bf16.mxu0 %v3555
    %4298 = vmatpush1.bf16.msra.mxu0 %v3554
    %4299 = vmatprep.subr.bf16.mxu0 %v3561
    %4300 = vmatpush1.bf16.msra.mxu0 %v3560
    %4301 = vmatprep.subr.bf16.mxu0 %v3567
    %4302 = vmatpush1.bf16.msra.mxu0 %v3566
    %4303 = vmatprep.subr.bf16.mxu0 %v3573
    %4304 = vmatpush1.bf16.msra.mxu0 %v3572
    %4305 = vmatprep.subr.bf16.mxu0 %v3579
    %4306 = vmatpush1.bf16.msra.mxu0 %v3578
    %4307 = vmatprep.subr.bf16.mxu0 %v3585
    %4308 = vmatpush1.bf16.msra.mxu0 %v3584
    %4309 = vmatprep.subr.bf16.mxu0 %v3591
    %4310 = vmatpush1.bf16.msra.mxu0 %v3590
    %4311 = vmatprep.subr.bf16.mxu0 %v3597
    %4312 = vmatpush1.bf16.msra.mxu0 %v3596
    %4313 = vmatprep.subr.bf16.mxu0 %v3603
    %4314 = vmatpush1.bf16.msra.mxu0 %v3602
    %4315 = vmatprep.subr.bf16.mxu0 %v3609
    %4316 = vmatpush1.bf16.msra.mxu0 %v3608
    %4317 = vmatprep.subr.bf16.mxu0 %v3615
    %4318 = vmatpush1.bf16.msra.mxu0 %v3614
    %4319 = vmatprep.mubr.bf16.mxu0 %v2237
    %4320 = vmatmul.mubr.bf16.gmra.mrb[0].mxu0 %v2236
    %v4321 = vpop.f32.mrb[0].mxu0
    %v4322 = vadd.f32 %v4281, %v4321
    %v4323 = vpop.f32.mrb[0].mxu0
    %v4324 = vadd.f32 %v4283, %v4323
    %v4325 = vpop.f32.mrb[0].mxu0
    %v4326 = vpop.f32.mrb[0].mxu0
    %4327 = vdwg.mxu0
    %4328 = vmatprep.subr.bf16.mxu0 %v3621
    %4329 = vmatpush1.bf16.msra.mxu0 %v3620
    %4330 = vmatprep.subr.bf16.mxu0 %v3627
    %4331 = vmatpush1.bf16.msra.mxu0 %v3626
    %4332 = vmatprep.subr.bf16.mxu0 %v3633
    %4333 = vmatpush1.bf16.msra.mxu0 %v3632
    %4334 = vmatprep.subr.bf16.mxu0 %v3639
    %4335 = vmatpush1.bf16.msra.mxu0 %v3638
    %4336 = vmatprep.subr.bf16.mxu0 %v3645
    %4337 = vmatpush1.bf16.msra.mxu0 %v3644
    %4338 = vmatprep.subr.bf16.mxu0 %v3651
    %4339 = vmatpush1.bf16.msra.mxu0 %v3650
    %4340 = vmatprep.subr.bf16.mxu0 %v3657
    %4341 = vmatpush1.bf16.msra.mxu0 %v3656
    %4342 = vmatprep.subr.bf16.mxu0 %v3663
    %4343 = vmatpush1.bf16.msra.mxu0 %v3662
    %4344 = vmatprep.subr.bf16.mxu0 %v3669
    %4345 = vmatpush1.bf16.msra.mxu0 %v3668
    %4346 = vmatprep.subr.bf16.mxu0 %v3675
    %4347 = vmatpush1.bf16.msra.mxu0 %v3674
    %4348 = vmatprep.subr.bf16.mxu0 %v3681
    %4349 = vmatpush1.bf16.msra.mxu0 %v3680
    %4350 = vmatprep.subr.bf16.mxu0 %v3687
    %4351 = vmatpush1.bf16.msra.mxu0 %v3686
    %4352 = vmatprep.subr.bf16.mxu0 %v3693
    %4353 = vmatpush1.bf16.msra.mxu0 %v3692
    %4354 = vmatprep.subr.bf16.mxu0 %v3699
    %4355 = vmatpush1.bf16.msra.mxu0 %v3698
    %4356 = vmatprep.subr.bf16.mxu0 %v3705
    %4357 = vmatpush1.bf16.msra.mxu0 %v3704
    %4358 = vmatprep.subr.bf16.mxu0 %v3711
    %4359 = vmatpush1.bf16.msra.mxu0 %v3710
    %4360 = vmatprep.mubr.bf16.mxu0 %v2239
    %4361 = vmatmul.mubr.bf16.gmra.mrb[0].mxu0 %v2238
    %v4362 = vpop.f32.mrb[0].mxu0
    %v4363 = vadd.f32 %v4322, %v4362
    %v4364 = vpop.f32.mrb[0].mxu0
    %v4365 = vadd.f32 %v4324, %v4364
    %v4366 = vpop.f32.mrb[0].mxu0
    %v4367 = vpop.f32.mrb[0].mxu0
    %4368 = vdwg.mxu0
    %v4369 = vtanh.pop %v4117
    %v4370 = vtanh.pop %v4119
    %v4371 = vtanh.pop %v4240
    %v4372 = vxor.u32 %v4242, 2147483648
    %v4373 = vxor.u32 %v4363, 2147483648
    %v4374 = vxor.u32 %v4365, 2147483648
    %v4375 = vmul.f32 %v4372, 1.442695
    %v4376 = vpow.pop %v4375
    %v4377 = vmul.f32 %v4373, 1.442695
    %v4378 = vpow.pop %v4377
    %v4379 = vmul.f32 %v4374, 1.442695
    %v4380 = vpow.pop %v4379
    %v4381 = vadd.f32 %v4376, 1.0
    %v4382 = vadd.f32 %v4378, 1.0
    %v4383 = vadd.f32 %v4380, 1.0
    %v4384 = vrcp.pop %v4381
    %v4385 = vmul.f32 1.0, %v4384
    %v4386 = vrcp.pop %v4382
    %v4387 = vmul.f32 1.0, %v4386
    %v4388 = vrcp.pop %v4383
    %v4389 = vmul.f32 1.0, %v4388
    %v4390 = vmul.f32 %v4369, %v4385
    %v4391 = vmul.f32 %v4370, %v4387
    %v4392 = vmul.f32 %v4371, %v4389
    %v4393 = vld [vmem:[%s5] sm:$0x7]
    %v4395 = vlaneseq
    %v4396 = vshrl.u32 %v4395, 7
    %v4397 = vsub.s32 0, %v4396
    %v4398 = vrot.slane %v4393, %v4397
    %v4399 = vlaneseq
    %v4400 = vshrl.u32 %v4399, 7
    %v4401 = vsub.s32 1, %v4400
    %v4402 = vrot.slane %v4393, %v4401
    %v4403 = vlaneseq
    %v4404 = vshrl.u32 %v4403, 7
    %v4405 = vsub.s32 2, %v4404
    %v4406 = vrot.slane %v4393, %v4405
    %v4410 = vmul.f32 %v4390, %v4398
    %v4411 = vmul.f32 %v4391, %v4402
    %v4412 = vmul.f32 %v4392, %v4406
    %v4413 = vadd.f32 %v4410, %v4411
    %v4414 = vadd.f32 %v4413, %v4412
    %4415 = vadd.xlane.f32.xlu0 %v4414
    %v4416 = vpop.xlane.xlu0 %4415
    %vm4417 = vcmask 7168
    %4418 = vst.msk [vmem:[%s58] sm:$0xff] %vm4417, %v4416
    %v4419 = vsel %vm2225, %v4416, -inf
    %v4420 = vld [vmem:[#allocation2] sm:$0x1]
    %v4421 = vrot.slane %v4419, 4
    %v4422 = vmax.f32 %v4419, %v4421
    %v4423 = vrot.slane %v4422, 2
    %v4424 = vmax.f32 %v4422, %v4423
    %v4425 = vrot.slane %v4424, 1
    %v4426 = vmax.f32 %v4424, %v4425
    %v4427 = vmax.f32 %v4420, %v4426
    %v4428 = vsub.f32 %v4420, %v4427
    %v4429 = vmul.f32 %v4428, 1.442695
    %v4430 = vpow.pop %v4429
    %v4432 = vlaneseq
    %v4433 = vshrl.u32 %v4432, 7
    %v4434 = vsub.s32 0, %v4433
    %v4435 = vrot.slane %v4427, %v4434
    %v4437 = vsub.f32 %v4419, %v4435
    %v4438 = vmul.f32 %v4437, 1.442695
    %v4439 = vpow.pop %v4438
    %v4440 = vld [vmem:[#allocation4] sm:$0x1]
    %v4441 = vmul.f32 %v4430, %v4440
    %v4442 = vsel %vm4417, %v4439, 0.0
    %v4443 = vrot.slane %v4442, 4
    %v4444 = vadd.f32 %v4442, %v4443
    %v4445 = vrot.slane %v4444, 2
    %v4446 = vadd.f32 %v4444, %v4445
    %v4447 = vrot.slane %v4446, 1
    %v4448 = vadd.f32 %v4446, %v4447
    %v4449 = vadd.f32 %v4441, %v4448
    %vm4450 = vcmask 0
    %4451 = vst.msk [vmem:[#allocation4] sm:$0x1] %vm4450, %v4449
    %v4452 = vld [vmem:[%s9] sm:$0x3f]
    %4454 = vset.pattern.permute.xlu0 0
    %4455 = vperm.xlu0 %4454, %v4430
    %v4456 = vpop.permute.xlu0 %4455
    %v4458 = vlaneseq
    %v4459 = vshrl.u32 %v4458, 7
    %v4460 = vsub.s32 0, %v4459
    %v4461 = vrot.slane %v4456, %v4460
    %v4462 = vmul.f32 %v4461, %v4452
    %4464 = vset.pattern.permute.xlu0 0
    %4465 = vperm.xlu0 %4464, %v4439
    %v4466 = vpop.permute.xlu0 %4465
    %v4468 = vmul.f32 %v4466, %v2228
    %v4469 = vmul.f32 %v4466, %v2229
    %v4470 = vmul.f32 %v4466, %v2230
    %v4471 = vmul.f32 %v4466, %v2231
    %v4472 = vmul.f32 %v4466, %v2232
    %v4473 = vmul.f32 %v4466, %v2233
    %v4474 = vrot.slane %v4468, 4
    %v4475 = vadd.f32 %v4468, %v4474
    %v4476 = vrot.slane %v4475, 2
    %v4477 = vadd.f32 %v4475, %v4476
    %v4478 = vrot.slane %v4477, 1
    %v4479 = vadd.f32 %v4477, %v4478
    %v4480 = vrot.slane %v4469, 4
    %v4481 = vadd.f32 %v4469, %v4480
    %v4482 = vrot.slane %v4481, 2
    %v4483 = vadd.f32 %v4481, %v4482
    %v4484 = vrot.slane %v4483, 1
    %v4485 = vadd.f32 %v4483, %v4484
    %v4486 = vrot.slane %v4470, 4
    %v4487 = vadd.f32 %v4470, %v4486
    %v4488 = vrot.slane %v4487, 2
    %v4489 = vadd.f32 %v4487, %v4488
    %v4490 = vrot.slane %v4489, 1
    %v4491 = vadd.f32 %v4489, %v4490
    %v4492 = vrot.slane %v4471, 4
    %v4493 = vadd.f32 %v4471, %v4492
    %v4494 = vrot.slane %v4493, 2
    %v4495 = vadd.f32 %v4493, %v4494
    %v4496 = vrot.slane %v4495, 1
    %v4497 = vadd.f32 %v4495, %v4496
    %v4498 = vrot.slane %v4472, 4
    %v4499 = vadd.f32 %v4472, %v4498
    %v4500 = vrot.slane %v4499, 2
    %v4501 = vadd.f32 %v4499, %v4500
    %v4502 = vrot.slane %v4501, 1
    %v4503 = vadd.f32 %v4501, %v4502
    %v4504 = vrot.slane %v4473, 4
    %v4505 = vadd.f32 %v4473, %v4504
    %v4506 = vrot.slane %v4505, 2
    %v4507 = vadd.f32 %v4505, %v4506
    %v4508 = vrot.slane %v4507, 1
    %v4509 = vadd.f32 %v4507, %v4508
    %v4516 = vcombine.low %v4479, %v4485
    %v4517 = vcombine.low %v4491, %v4497
    %v4518 = vcombine.low %v4503, %v4509
    %v4520 = vunpack.c.l.s4 1966171168
    %v4521 = vunpack.c.0.s8 %v4520
    %v4522 = vlaneseq
    %v4523 = vshrl.u32 %v4522, 7
    %v4524 = vsub.s32 %v4521, %v4523
    %v4525 = vrot.slane %v4516, %v4524
    %v4527 = vunpack.c.l.s4 1966171168
    %v4528 = vunpack.c.0.s8 %v4527
    %v4529 = vlaneseq
    %v4530 = vshrl.u32 %v4529, 7
    %v4531 = vsub.s32 %v4528, %v4530
    %v4532 = vrot.slane %v4517, %v4531
    %v4534 = vunpack.c.l.s4 1966171168
    %v4535 = vunpack.c.0.s8 %v4534
    %v4536 = vlaneseq
    %v4537 = vshrl.u32 %v4536, 7
    %v4538 = vsub.s32 %v4535, %v4537
    %v4539 = vrot.slane %v4518, %v4538
    %v4540 = vcombine.low %v4525, %v4532
    %v4542 = vunpack.c.l.s4 1966171168
    %v4543 = vunpack.c.0.s8 %v4542
    %v4544 = vlaneseq
    %v4545 = vshrl.u32 %v4544, 7
    %v4546 = vsub.s32 %v4543, %v4545
    %v4547 = vrot.slane %v4540, %v4546
    %v4549 = vunpack.c.l.s4 1966171168
    %v4550 = vunpack.c.0.s8 %v4549
    %v4551 = vlaneseq
    %v4552 = vshrl.u32 %v4551, 7
    %v4553 = vsub.s32 %v4550, %v4552
    %v4554 = vrot.slane %v4539, %v4553
    %v4555 = vcombine.low %v4547, %v4554
    %v4557 = vadd.f32 %v4462, %v4555
    %v4558 = vlaneseq
    %vm4559 = vcmp.ge.s32.totalorder %v4558, 0
    %vm4560 = vcmp.lt.s32.totalorder %v4558, 768
    %vm4561 = vmand %vm4559, %vm4560
    %4562 = vst.msk [vmem:[%s9] sm:$0x3f] %vm4561, %v4557
    %4563 = vst.msk [vmem:[#allocation2] sm:$0x1] %vm4450, %v4427
    %s4564 = sadd.s32 0, 0
    %p4565 = scmp.lt.s32.totalorder %s4564, 0
    %s4566 = scalar_select %p4565, %s4564, 0
    %s4567 = smul.addr %s4566, 8
    %s4568 = scalar_lea.vmem %s6, %s4567
    // Predicated region
    $region30: #{gated_attention_summarizer.1} parent=1 // pred_check
      _
    $region31: #{gated_attention_summarizer.1} parent=1 // pred_check_branch
      %4570 = sbr.rel (0) target = $region33
    $region32: #{gated_attention_summarizer.1} parent=1 // pred_region
      %s4571 = sadd.s32 0, 0
    $region33: #{gated_attention_summarizer.1} parent=1 // pred_fallthru
      _
    // Predicated region
    $region34: #{gated_attention_summarizer.1} parent=1 // pred_check
      _
    $region35: #{gated_attention_summarizer.1} parent=1 // pred_check_branch
      %4573 = sbr.rel (0) target = $region37
    $region36: #{gated_attention_summarizer.1} parent=1 // pred_region
      %s4575 = ssub.s32 16, 16
      %4576 = vsyncadd [#allocation3], %s4575
      %s4578 = sshll.u32 [#allocation2], 4
      %s4579 = int_to_ptr.vmem [resolvable:$true] %s4578
      %4581 = dma.vmem_to_hbm [thread:$0]  %s4579, 16, %s7, [#allocation3]
    $region37: #{gated_attention_summarizer.1} parent=1 // pred_fallthru
      _
    // Predicated region
    $region38: #{gated_attention_summarizer.1} parent=1 // pred_check
      _
    $region39: #{gated_attention_summarizer.1} parent=1 // pred_check_branch
      %4583 = sbr.rel (0) target = $region41
    $region40: #{gated_attention_summarizer.1} parent=1 // pred_region
      %s4585 = ssub.s32 16, 16
      %4586 = vsyncadd [#allocation5], %s4585
      %s4588 = sshll.u32 [#allocation4], 4
      %s4589 = int_to_ptr.vmem [resolvable:$true] %s4588
      %4591 = dma.vmem_to_hbm [thread:$0]  %s4589, 16, %s8, [#allocation5]
    $region41: #{gated_attention_summarizer.1} parent=1 // pred_fallthru
      _
    // Predicated region
    $region42: #{gated_attention_summarizer.1} parent=1 // pred_check
      _
    $region43: #{gated_attention_summarizer.1} parent=1 // pred_check_branch
      %4593 = sbr.rel (0) target = $region45
    $region44: #{gated_attention_summarizer.1} parent=1 // pred_region
      _
    $region45: #{gated_attention_summarizer.1} parent=1 // pred_fallthru
      _
    // Predicated region
    $region46: #{gated_attention_summarizer.1} parent=1 // pred_check
      _
    $region47: #{gated_attention_summarizer.1} parent=1 // pred_check_branch
      %4595 = sbr.rel (0) target = $region49
    $region48: #{gated_attention_summarizer.1} parent=1 // pred_region
      %s4596 = sadd.s32 0, 0
      %p4597 = scmp.lt.s32.totalorder %s4596, 0
      %s4598 = scalar_select %p4597, %s4596, 0
      %s4599 = smul.addr %s4598, 8
      %s4600 = scalar_lea.vmem %s6, %s4599
    $region49: #{gated_attention_summarizer.1} parent=1 // pred_fallthru
      _
    // Predicated region
    $region50: #{gated_attention_summarizer.1} parent=1 // pred_check
      _
    $region51: #{gated_attention_summarizer.1} parent=1 // pred_check_branch
      %4602 = sbr.rel (0) target = $region53
    $region52: #{gated_attention_summarizer.1} parent=1 // pred_region
      %4603 = dma.done [#allocation3], 16
    $region53: #{gated_attention_summarizer.1} parent=1 // pred_fallthru
      _
    // Predicated region
    $region54: #{gated_attention_summarizer.1} parent=1 // pred_check
      _
    $region55: #{gated_attention_summarizer.1} parent=1 // pred_check_branch
      %4605 = sbr.rel (0) target = $region57
    $region56: #{gated_attention_summarizer.1} parent=1 // pred_region
      %4606 = dma.done [#allocation5], 16
    $region57: #{gated_attention_summarizer.1} parent=1 // pred_fallthru
      _
    // Predicated region
    $region58: #{gated_attention_summarizer.1} parent=1 // pred_check
      _
    $region59: #{gated_attention_summarizer.1} parent=1 // pred_check_branch
      %4608 = sbr.rel (0) target = $region61
    $region60: #{gated_attention_summarizer.1} parent=1 // pred_region
      _
    $region61: #{gated_attention_summarizer.1} parent=1 // pred_fallthru
      _
    %4609 = vsyncpa [#allocation3], 1
    %4610 = vsyncpa [#allocation5], 1

</llo_original>
